<compile_context>
chip_gen: v6e
topology: v6e:2x2x1
jax: 0.10.0
libtpu: 0.0.40
codegen_flags: <defaults>
</compile_context>

<pallas_src>
import functools

import jax
import jax.numpy as jnp
from jax.experimental import pallas as pl
from jax.experimental.pallas import tpu as pltpu

KSIZE = 7
PAD = 3  # padding = 3 for kernel_size = 7 (matches the PyTorch module)


def _spatial_attention_kernel(w_ref, rc_ref, x_ref, o_ref, sum_ref, max_ref,
                              *, C, TC, NB, H, W, HWp, LB, ROWS):
    """Grid = (batch-block, channel-tile); channel-tile is the reduction axis.

    w_ref   : SMEM (2*7*7,) f32      -- flattened conv weight (O=1, I=2, 7, 7)
    rc_ref  : VMEM (2, HWp) i32      -- [row; col] of each flat (padded) pixel
    x_ref   : VMEM (NB, TC, HWp)     -- one channel tile of NB batch elements
    o_ref   : VMEM (NB, 1, HWp)      -- flattened attention maps (lane dense)
    sum_ref : VMEM (NB, 8, HWp) f32  -- running channel-sum partials
    max_ref : VMEM (NB, 8, HWp) f32  -- running channel-max partials
    """
    ct = pl.program_id(1)

    # ---------------- fused single-pass channel sum + max ----------------
    @pl.when(ct == 0)
    def _init():
        sum_ref[...] = jnp.zeros_like(sum_ref)
        max_ref[...] = jnp.full_like(max_ref, -jnp.inf)

    rid0 = jax.lax.broadcasted_iota(jnp.int32, (8, 1), 0) == 0

    n_lb = HWp // LB
    n_load, rem = divmod(TC, ROWS)        # dtype-aware chunk height
    t_full, t_rem = divmod(rem, 8)

    for b in range(NB):
        for lb in range(n_lb):
            lsl = pl.ds(lb * LB, LB)
            s = sum_ref[b, :, lsl]        # (8, LB) accumulators stay in vregs
            m = max_ref[b, :, lsl]
            for k in range(n_load):
                chunk = x_ref[b, pl.ds(k * ROWS, ROWS), lsl].astype(jnp.float32)
                for p in range(ROWS // 8):
                    piece = chunk[p * 8:(p + 1) * 8] if ROWS > 8 else chunk
                    s = s + piece
                    m = jnp.maximum(m, piece)
            if rem:                        # static tail (< ROWS rows)
                tail = x_ref[b, pl.ds(n_load * ROWS, rem), lsl].astype(jnp.float32)
                for p in range(t_full):
                    piece = tail[p * 8:(p + 1) * 8]
                    s = s + piece
                    m = jnp.maximum(m, piece)
                if t_rem:                  # < 8 leftover rows -> fold into row 0
                    sub = tail[t_full * 8:]
                    tsum = jnp.sum(sub, axis=0, keepdims=True)
                    tmax = jnp.max(sub, axis=0, keepdims=True)
                    s = jnp.where(rid0, s + tsum, s)
                    m = jnp.where(rid0, jnp.maximum(m, tmax), m)
            sum_ref[b, :, lsl] = s         # scratch touched once per lane block
            max_ref[b, :, lsl] = m

    # ------------- 7x7 conv + sigmoid, only on the last C tile -------------
    @pl.when(ct == pl.num_programs(1) - 1)
    def _finish():
        row = rc_ref[0:1, :]                               # (1, HWp) i32
        col = rc_ref[1:2, :]

        # Per-tap-offset validity masks (static bounds) -> zero padding.
        row_masks = []
        col_masks = []
        for d in range(KSIZE):
            off = d - PAD
            row_masks.append((row >= -off) & (row <= (H - 1) - off))
            col_masks.append((col >= -off) & (col <= (W - 1) - off))

        # Hoist all 98 SMEM weight reads out of the tap loops.
        wv = [w_ref[i] for i in range(2 * KSIZE * KSIZE)]

        sub0 = jax.lax.broadcasted_iota(jnp.int32, (2, 1), 0) == 0
        zero2 = jnp.zeros((2, HWp), jnp.float32)
        inv_c = jnp.float32(1.0 / C)

        for b in range(NB):
            avg = jnp.sum(sum_ref[b], axis=0, keepdims=True) * inv_c   # (1, HWp)
            mxv = jnp.max(max_ref[b], axis=0, keepdims=True)           # (1, HWp)
            # avg on sublane 0, max on sublane 1 -> one shared roll chain.
            stacked = jnp.where(sub0, avg, mxv)                        # (2, HWp)

            acc = jnp.zeros((2, HWp), jnp.float32)
            for dy in range(KSIZE):
                # Vertical tap = whole-row shift on the flat lane axis (XLU).
                vshift = (dy - PAD) * W
                sh = (HWp - vshift) % HWp
                rolled = pltpu.roll(stacked, sh, axis=1) if sh else stacked
                slab = jnp.where(row_masks[dy], rolled, zero2)
                for dx in range(KSIZE):
                    hshift = dx - PAD
                    sh2 = (HWp - hshift) % HWp
                    r2 = pltpu.roll(slab, sh2, axis=1) if sh2 else slab
                    tap = jnp.where(col_masks[dx], r2, zero2)          # (2, HWp)
                    j = dy * KSIZE + dx
                    w_col = jnp.where(sub0, wv[j], wv[KSIZE * KSIZE + j])  # (2, 1)
                    acc = acc + w_col * tap
            conv = jnp.sum(acc, axis=0, keepdims=True)                 # (1, HWp)
            o_ref[b] = jax.nn.sigmoid(conv).astype(o_ref.dtype)


def _round_up(x, m):
    return (x + m - 1) // m * m


def _vmem_budget():
    """(physical_capacity, usable_budget) in bytes, chip-aware with fallback."""
    try:
        cap = int(pltpu.get_tpu_info().vmem_capacity_bytes)
    except Exception:
        cap = 64 << 20                     # conservative (v7x-sized) fallback
    budget = int(cap * 0.7)                # v7x ~45 MiB, v5e/v6e ~90 MiB
    budget = max(32 << 20, min(budget, 96 << 20))
    return cap, budget


def _pick_channel_tile(C, tc_cap):
    """Largest channel tile <= tc_cap that divides C and is a multiple of 8
    (or equals C)."""
    if C <= tc_cap:
        return C
    t = max(8, (tc_cap // 8) * 8)
    while t >= 8:
        if C % t == 0:
            return t
        t -= 8
    return C   # pathological C: single tile, rely on the raised VMEM limit


def _pick_batch_block(N, per_batch_bytes, nb_bytes_cap, target_bytes=1 << 20):
    """Block batches per grid step when the per-step tile is tiny."""
    if N <= 1 or per_batch_bytes >= target_bytes:
        return 1
    nb_cap = max(1, min(N, nb_bytes_cap // max(per_batch_bytes, 1)))
    nb_want = max(1, min(nb_cap, -(-target_bytes // per_batch_bytes)))
    for nb in range(int(nb_want), 0, -1):
        if N % nb == 0:
            return nb
    return 1


def spatial_attention(x, weight, *, max_channel_tile=None):
    """x: (N, C, H, W); weight: (1, 2, 7, 7). Returns (N, 1, H, W)."""
    N, C, H, W = x.shape
    HW = H * W
    HWp = _round_up(HW, 128)                       # lane-dense padded extent
    itemsize = jnp.dtype(x.dtype).itemsize
    out_item = itemsize

    cap, budget = _vmem_budget()
    margin = 4 << 20
    # per-batch-in-block fixed bytes: double-buffered output + f32 sum/max scratch
    per_nb_extra = 2 * HWp * out_item + 2 * 8 * HWp * 4

    # --- VMEM-aware channel tile ---
    x_budget = max(budget - margin - per_nb_extra, 2 * 8 * HWp * itemsize)
    tc_cap = max(8, x_budget // (2 * HWp * itemsize))
    if max_channel_tile is not None:
        tc_cap = max(8, min(tc_cap, max_channel_tile))
    TC = _pick_channel_tile(C, tc_cap)
    n_ct = C // TC

    # --- batch blocking for small maps (amortize per-step overhead) ---
    NB = 1
    if n_ct == 1:
        per_batch = 2 * C * HWp * itemsize + per_nb_extra
        NB = _pick_batch_block(N, per_batch, budget - margin)
    NBLK = N // NB
    # TODO(synk): when NBLK == 1 on v7x (2 TensorCores), split the channel
    # reduction (or HW halves with a 3-row halo) across cores; today a single
    # batch-parallel step leaves one core idle.

    # dtype-aware row-chunk height (sub-32-bit dtypes pack along sublanes)
    ROWS = max(8, 8 * (4 // max(itemsize, 1)))
    # lane sub-tile for the reduction accumulators (bounds vreg live range)
    LB = 128
    for cand in (1024, 512, 256):
        if HWp % cand == 0:
            LB = cand
            break

    x_flat = x.reshape(N, C, HW)                   # free view, lane-dense
    if HWp != HW:
        x_flat = jnp.pad(x_flat, ((0, 0), (0, 0), (0, HWp - HW)))
    w_flat = weight.reshape(-1).astype(jnp.float32)   # (98,) -> SMEM

    lane = jnp.arange(HWp, dtype=jnp.int32)
    rc = jnp.stack([lane // W, lane % W], axis=0)  # (2, HWp) row/col ids

    kernel = functools.partial(_spatial_attention_kernel,
                               C=C, TC=TC, NB=NB, H=H, W=W, HWp=HWp,
                               LB=LB, ROWS=ROWS)

    needed = (2 * NB * TC * HWp * itemsize        # double-buffered x tile
              + NB * per_nb_extra                 # output + scratch
              + 2 * 2 * HWp * 4                   # rc
              + margin)
    vmem_limit = int(min(max(needed, budget), int(cap * 0.92)))

    flops = N * C * HW * 2 + N * 2 * (2 * KSIZE * KSIZE) * HW
    bytes_accessed = (N * C * HW * itemsize + N * HW * out_item
                      + w_flat.size * 4 + rc.size * 4)

    out_flat = pl.pallas_call(
        kernel,
        out_shape=jax.ShapeDtypeStruct((N, 1, HWp), x.dtype),
        grid_spec=pltpu.PrefetchScalarGridSpec(
            num_scalar_prefetch=1,                       # conv weights -> SMEM
            grid=(NBLK, n_ct),                           # batch blocks, then C tiles
            in_specs=[
                pl.BlockSpec((2, HWp), lambda bb, ct, w: (0, 0)),
                pl.BlockSpec((NB, TC, HWp), lambda bb, ct, w: (bb, ct, 0)),
            ],
            out_specs=pl.BlockSpec((NB, 1, HWp), lambda bb, ct, w: (bb, 0, 0)),
            scratch_shapes=[
                pltpu.VMEM((NB, 8, HWp), jnp.float32),   # running channel sum
                pltpu.VMEM((NB, 8, HWp), jnp.float32),   # running channel max
            ],
        ),
        compiler_params=pltpu.CompilerParams(
            dimension_semantics=("parallel", "arbitrary"),
            vmem_limit_bytes=vmem_limit),
        cost_estimate=pl.CostEstimate(
            flops=int(flops),
            transcendentals=int(N * HW),
            bytes_accessed=int(bytes_accessed)),
    )(w_flat, rc, x_flat)

    return out_flat[..., :HW].reshape(N, 1, H, W)


def spatial_attention_ref(x, weight):
    """Pure-JAX reference mirroring the PyTorch forward."""
    avg = jnp.mean(x, axis=1, keepdims=True)
    mx = jnp.max(x, axis=1, keepdims=True)
    cat = jnp.concatenate([avg, mx], axis=1)             # (N, 2, H, W)
    y = jax.lax.conv_general_dilated(
        cat, weight, window_strides=(1, 1),
        padding=((PAD, PAD), (PAD, PAD)),
        dimension_numbers=("NCHW", "OIHW", "NCHW"))
    return jax.nn.sigmoid(y)


if __name__ == "__main__":
    key = jax.random.PRNGKey(0)
    kx, kw = jax.random.split(key)

    # Primary example: N=2, C=4, 16x16 spatial (HW already lane dense).
    N, C, H, W = 2, 4, 16, 16
    x = jax.random.normal(kx, (N, C, H, W), dtype=jnp.float32)
    weight = 0.1 * jax.random.normal(kw, (1, 2, KSIZE, KSIZE), dtype=jnp.float32)

    out = jax.block_until_ready(spatial_attention(x, weight))
    ref = spatial_attention_ref(x, weight)
    assert out.shape == (N, 1, H, W)
    assert jnp.allclose(out, ref, atol=1e-5, rtol=1e-5), "mismatch vs reference"

    # Lane padding + channel tail + batch-blocking path (HW%128!=0, C%8!=0).
    x2 = jax.random.normal(kx, (2, 12, 10, 12), dtype=jnp.float32)
    out2 = jax.block_until_ready(spatial_attention(x2, weight))
    ref2 = spatial_attention_ref(x2, weight)
    assert jnp.allclose(out2, ref2, atol=1e-5, rtol=1e-5), "mismatch (padded)"

    # Multi-channel-tile path (reduction across grid steps).
    x3 = jax.random.normal(kw, (2, 24, 8, 16), dtype=jnp.float32)
    out3 = jax.block_until_ready(spatial_attention(x3, weight, max_channel_tile=8))
    ref3 = spatial_attention_ref(x3, weight)
    assert jnp.allclose(out3, ref3, atol=1e-5, rtol=1e-5), "mismatch (tiled C)"

    print("KERNEL_OK")
</pallas_src>

<mosaic_0001>
module attributes {stable_mosaic.version = 11 : i64} {
  func.func @_spatial_attention_kernel(%arg0: i32, %arg1: i32, %arg2: memref<98xf32, #tpu.memory_space<smem>>, %arg3: memref<2x256xi32, #tpu.memory_space<vmem>>, %arg4: memref<2x4x256xf32, #tpu.memory_space<vmem>>, %arg5: memref<2x1x256xf32, #tpu.memory_space<vmem>>, %arg6: memref<2x8x256xf32, #tpu.memory_space<vmem>>, %arg7: memref<2x8x256xf32, #tpu.memory_space<vmem>>) attributes {dimension_semantics = [#tpu.dimension_semantics<parallel>, #tpu.dimension_semantics<arbitrary>], iteration_bounds = array<i64: 1, 1>, scalar_prefetch = 1 : i64, scratch_operands = 2 : i64, tpu.core_type = #tpu.core_type<tc>, window_params = [{pipeline_mode = #tpu.pipeline_mode<synchronous>, transform_indices = @transform_0, window_bounds = array<i64: 2, 256>}, {transform_indices = @transform_1, window_bounds = array<i64: 2, 4, 256>}, {transform_indices = @transform_2, window_bounds = array<i64: 2, 1, 256>}]} {
    %c0_i32 = arith.constant 0 : i32
    %0 = arith.cmpi eq, %arg1, %c0_i32 : i32
    %1 = arith.extui %0 : i1 to i32
    %c0_i32_0 = arith.constant 0 : i32
    %2 = arith.cmpi ne, %1, %c0_i32_0 : i32
    scf.if %2 {
      %cst_35 = arith.constant 0.000000e+00 : f32
      %61 = vector.broadcast %cst_35 : f32 to vector<2x8x256xf32>
      %c0_36 = arith.constant 0 : index
      %c0_37 = arith.constant 0 : index
      %c0_38 = arith.constant 0 : index
      %62 = vector.load %arg6[%c0_36, %c0_37, %c0_38] : memref<2x8x256xf32, #tpu.memory_space<vmem>>, vector<2x8x256xf32>
      tpu.vector_store %arg6[%c0_36, %c0_37, %c0_38], %61 {strides = array<i32>} : memref<2x8x256xf32, #tpu.memory_space<vmem>>, vector<2x8x256xf32>,
      %cst_39 = arith.constant 0xFF800000 : f32
      %63 = vector.broadcast %cst_39 : f32 to vector<2x8x256xf32>
      %c0_40 = arith.constant 0 : index
      %c0_41 = arith.constant 0 : index
      %c0_42 = arith.constant 0 : index
      %64 = vector.load %arg7[%c0_40, %c0_41, %c0_42] : memref<2x8x256xf32, #tpu.memory_space<vmem>>, vector<2x8x256xf32>
      tpu.vector_store %arg7[%c0_40, %c0_41, %c0_42], %63 {strides = array<i32>} : memref<2x8x256xf32, #tpu.memory_space<vmem>>, vector<2x8x256xf32>,
    } else {
    }
    %3 = tpu.iota {dimensions = array<i32: 0>} : vector<8x1xi32>
    %c0_i32_1 = arith.constant 0 : i32
    %4 = vector.broadcast %c0_i32_1 : i32 to vector<8x1xi32>
    %5 = arith.cmpi eq, %3, %4 : vector<8x1xi32>
    %c0 = arith.constant 0 : index
    %c0_2 = arith.constant 0 : index
    %c0_3 = arith.constant 0 : index
    %6 = vector.load %arg6[%c0, %c0_2, %c0_3] : memref<2x8x256xf32, #tpu.memory_space<vmem>>, vector<1x8x256xf32>
    %7 = vector.shape_cast %6 : vector<1x8x256xf32> to vector<8x256xf32>
    %c0_4 = arith.constant 0 : index
    %c0_5 = arith.constant 0 : index
    %c0_6 = arith.constant 0 : index
    %8 = vector.load %arg7[%c0_4, %c0_5, %c0_6] : memref<2x8x256xf32, #tpu.memory_space<vmem>>, vector<1x8x256xf32>
    %9 = vector.shape_cast %8 : vector<1x8x256xf32> to vector<8x256xf32>
    %c0_7 = arith.constant 0 : index
    %c0_8 = arith.constant 0 : index
    %c0_9 = arith.constant 0 : index
    %10 = vector.load %arg4[%c0_7, %c0_8, %c0_9] : memref<2x4x256xf32, #tpu.memory_space<vmem>>, vector<1x4x256xf32>
    %11 = vector.shape_cast %10 : vector<1x4x256xf32> to vector<4x256xf32>
    %cst = arith.constant dense<0.000000e+00> : vector<256xf32>
    %12 = vector.multi_reduction <add>, %11, %cst [0] : vector<4x256xf32> to vector<256xf32>
    %13 = vector.shape_cast %12 : vector<256xf32> to vector<1x256xf32>
    %cst_10 = arith.constant dense<0xFF800000> : vector<256xf32>
    %14 = vector.multi_reduction <maximumf>, %11, %cst_10 [0] : vector<4x256xf32> to vector<256xf32>
    %15 = vector.shape_cast %14 : vector<256xf32> to vector<1x256xf32>
    %16 = vector.broadcast %13 : vector<1x256xf32> to vector<8x256xf32>
    %17 = arith.addf %7, %16 : vector<8x256xf32>
    %18 = vector.shape_cast %5 : vector<8x1xi1> to vector<8x1xi1>
    %19 = vector.broadcast %18 : vector<8x1xi1> to vector<8x256xi1>
    %20 = arith.select %19, %17, %7 : vector<8x256xi1>, vector<8x256xf32>
    %21 = vector.broadcast %15 : vector<1x256xf32> to vector<8x256xf32>
    %22 = arith.maximumf %9, %21 : vector<8x256xf32>
    %23 = vector.shape_cast %5 : vector<8x1xi1> to vector<8x1xi1>
    %24 = vector.broadcast %23 : vector<8x1xi1> to vector<8x256xi1>
    %25 = arith.select %24, %22, %9 : vector<8x256xi1>, vector<8x256xf32>
    %c0_11 = arith.constant 0 : index
    %c0_12 = arith.constant 0 : index
    %c0_13 = arith.constant 0 : index
    %26 = vector.load %arg6[%c0_11, %c0_12, %c0_13] : memref<2x8x256xf32, #tpu.memory_space<vmem>>, vector<1x8x256xf32>
    %27 = vector.shape_cast %26 : vector<1x8x256xf32> to vector<8x256xf32>
    %28 = vector.shape_cast %20 : vector<8x256xf32> to vector<1x8x256xf32>
    tpu.vector_store %arg6[%c0_11, %c0_12, %c0_13], %28 {strides = array<i32>} : memref<2x8x256xf32, #tpu.memory_space<vmem>>, vector<1x8x256xf32>,
    %c0_14 = arith.constant 0 : index
    %c0_15 = arith.constant 0 : index
    %c0_16 = arith.constant 0 : index
    %29 = vector.load %arg7[%c0_14, %c0_15, %c0_16] : memref<2x8x256xf32, #tpu.memory_space<vmem>>, vector<1x8x256xf32>
    %30 = vector.shape_cast %29 : vector<1x8x256xf32> to vector<8x256xf32>
    %31 = vector.shape_cast %25 : vector<8x256xf32> to vector<1x8x256xf32>
    tpu.vector_store %arg7[%c0_14, %c0_15, %c0_16], %31 {strides = array<i32>} : memref<2x8x256xf32, #tpu.memory_space<vmem>>, vector<1x8x256xf32>,
    %c1 = arith.constant 1 : index
    %c0_17 = arith.constant 0 : index
    %c0_18 = arith.constant 0 : index
    %32 = vector.load %arg6[%c1, %c0_17, %c0_18] : memref<2x8x256xf32, #tpu.memory_space<vmem>>, vector<1x8x256xf32>
    %33 = vector.shape_cast %32 : vector<1x8x256xf32> to vector<8x256xf32>
    %c1_19 = arith.constant 1 : index
    %c0_20 = arith.constant 0 : index
    %c0_21 = arith.constant 0 : index
    %34 = vector.load %arg7[%c1_19, %c0_20, %c0_21] : memref<2x8x256xf32, #tpu.memory_space<vmem>>, vector<1x8x256xf32>
    %35 = vector.shape_cast %34 : vector<1x8x256xf32> to vector<8x256xf32>
    %c1_22 = arith.constant 1 : index
    %c0_23 = arith.constant 0 : index
    %c0_24 = arith.constant 0 : index
    %36 = vector.load %arg4[%c1_22, %c0_23, %c0_24] : memref<2x4x256xf32, #tpu.memory_space<vmem>>, vector<1x4x256xf32>
    %37 = vector.shape_cast %36 : vector<1x4x256xf32> to vector<4x256xf32>
    %cst_25 = arith.constant dense<0.000000e+00> : vector<256xf32>
    %38 = vector.multi_reduction <add>, %37, %cst_25 [0] : vector<4x256xf32> to vector<256xf32>
    %39 = vector.shape_cast %38 : vector<256xf32> to vector<1x256xf32>
    %cst_26 = arith.constant dense<0xFF800000> : vector<256xf32>
    %40 = vector.multi_reduction <maximumf>, %37, %cst_26 [0] : vector<4x256xf32> to vector<256xf32>
    %41 = vector.shape_cast %40 : vector<256xf32> to vector<1x256xf32>
    %42 = vector.broadcast %39 : vector<1x256xf32> to vector<8x256xf32>
    %43 = arith.addf %33, %42 : vector<8x256xf32>
    %44 = vector.shape_cast %5 : vector<8x1xi1> to vector<8x1xi1>
    %45 = vector.broadcast %44 : vector<8x1xi1> to vector<8x256xi1>
    %46 = arith.select %45, %43, %33 : vector<8x256xi1>, vector<8x256xf32>
    %47 = vector.broadcast %41 : vector<1x256xf32> to vector<8x256xf32>
    %48 = arith.maximumf %35, %47 : vector<8x256xf32>
    %49 = vector.shape_cast %5 : vector<8x1xi1> to vector<8x1xi1>
    %50 = vector.broadcast %49 : vector<8x1xi1> to vector<8x256xi1>
    %51 = arith.select %50, %48, %35 : vector<8x256xi1>, vector<8x256xf32>
    %c1_27 = arith.constant 1 : index
    %c0_28 = arith.constant 0 : index
    %c0_29 = arith.constant 0 : index
    %52 = vector.load %arg6[%c1_27, %c0_28, %c0_29] : memref<2x8x256xf32, #tpu.memory_space<vmem>>, vector<1x8x256xf32>
    %53 = vector.shape_cast %52 : vector<1x8x256xf32> to vector<8x256xf32>
    %54 = vector.shape_cast %46 : vector<8x256xf32> to vector<1x8x256xf32>
    tpu.vector_store %arg6[%c1_27, %c0_28, %c0_29], %54 {strides = array<i32>} : memref<2x8x256xf32, #tpu.memory_space<vmem>>, vector<1x8x256xf32>,
    %c1_30 = arith.constant 1 : index
    %c0_31 = arith.constant 0 : index
    %c0_32 = arith.constant 0 : index
    %55 = vector.load %arg7[%c1_30, %c0_31, %c0_32] : memref<2x8x256xf32, #tpu.memory_space<vmem>>, vector<1x8x256xf32>
    %56 = vector.shape_cast %55 : vector<1x8x256xf32> to vector<8x256xf32>
    %57 = vector.shape_cast %51 : vector<8x256xf32> to vector<1x8x256xf32>
    tpu.vector_store %arg7[%c1_30, %c0_31, %c0_32], %57 {strides = array<i32>} : memref<2x8x256xf32, #tpu.memory_space<vmem>>, vector<1x8x256xf32>,
    %c0_i32_33 = arith.constant 0 : i32
    %58 = arith.cmpi eq, %arg1, %c0_i32_33 : i32
    %59 = arith.extui %58 : i1 to i32
    %c0_i32_34 = arith.constant 0 : i32
    %60 = arith.cmpi ne, %59, %c0_i32_34 : i32
    scf.if %60 {
      %c0_35 = arith.constant 0 : index
      %c0_36 = arith.constant 0 : index
      %61 = vector.load %arg3[%c0_35, %c0_36] : memref<2x256xi32, #tpu.memory_space<vmem>>, vector<1x256xi32>
      %c1_37 = arith.constant 1 : index
      %c0_38 = arith.constant 0 : index
      %62 = vector.load %arg3[%c1_37, %c0_38] : memref<2x256xi32, #tpu.memory_space<vmem>>, vector<1x256xi32>
      %c3_i32 = arith.constant 3 : i32
      %63 = vector.broadcast %c3_i32 : i32 to vector<1x256xi32>
      %64 = arith.cmpi sge, %61, %63 : vector<1x256xi32>
      %c18_i32 = arith.constant 18 : i32
      %65 = vector.broadcast %c18_i32 : i32 to vector<1x256xi32>
      %66 = arith.cmpi sle, %61, %65 : vector<1x256xi32>
      %67 = arith.andi %64, %66 : vector<1x256xi1>
      %c3_i32_39 = arith.constant 3 : i32
      %68 = vector.broadcast %c3_i32_39 : i32 to vector<1x256xi32>
      %69 = arith.cmpi sge, %62, %68 : vector<1x256xi32>
      %c18_i32_40 = arith.constant 18 : i32
      %70 = vector.broadcast %c18_i32_40 : i32 to vector<1x256xi32>
      %71 = arith.cmpi sle, %62, %70 : vector<1x256xi32>
      %72 = arith.andi %69, %71 : vector<1x256xi1>
      %c2_i32 = arith.constant 2 : i32
      %73 = vector.broadcast %c2_i32 : i32 to vector<1x256xi32>
      %74 = arith.cmpi sge, %61, %73 : vector<1x256xi32>
      %c17_i32 = arith.constant 17 : i32
      %75 = vector.broadcast %c17_i32 : i32 to vector<1x256xi32>
      %76 = arith.cmpi sle, %61, %75 : vector<1x256xi32>
      %77 = arith.andi %74, %76 : vector<1x256xi1>
      %c2_i32_41 = arith.constant 2 : i32
      %78 = vector.broadcast %c2_i32_41 : i32 to vector<1x256xi32>
      %79 = arith.cmpi sge, %62, %78 : vector<1x256xi32>
      %c17_i32_42 = arith.constant 17 : i32
      %80 = vector.broadcast %c17_i32_42 : i32 to vector<1x256xi32>
      %81 = arith.cmpi sle, %62, %80 : vector<1x256xi32>
      %82 = arith.andi %79, %81 : vector<1x256xi1>
      %c1_i32 = arith.constant 1 : i32
      %83 = vector.broadcast %c1_i32 : i32 to vector<1x256xi32>
      %84 = arith.cmpi sge, %61, %83 : vector<1x256xi32>
      %c16_i32 = arith.constant 16 : i32
      %85 = vector.broadcast %c16_i32 : i32 to vector<1x256xi32>
      %86 = arith.cmpi sle, %61, %85 : vector<1x256xi32>
      %87 = arith.andi %84, %86 : vector<1x256xi1>
      %c1_i32_43 = arith.constant 1 : i32
      %88 = vector.broadcast %c1_i32_43 : i32 to vector<1x256xi32>
      %89 = arith.cmpi sge, %62, %88 : vector<1x256xi32>
      %c16_i32_44 = arith.constant 16 : i32
      %90 = vector.broadcast %c16_i32_44 : i32 to vector<1x256xi32>
      %91 = arith.cmpi sle, %62, %90 : vector<1x256xi32>
      %92 = arith.andi %89, %91 : vector<1x256xi1>
      %c0_i32_45 = arith.constant 0 : i32
      %93 = vector.broadcast %c0_i32_45 : i32 to vector<1x256xi32>
      %94 = arith.cmpi sge, %61, %93 : vector<1x256xi32>
      %c15_i32 = arith.constant 15 : i32
      %95 = vector.broadcast %c15_i32 : i32 to vector<1x256xi32>
      %96 = arith.cmpi sle, %61, %95 : vector<1x256xi32>
      %97 = arith.andi %94, %96 : vector<1x256xi1>
      %c0_i32_46 = arith.constant 0 : i32
      %98 = vector.broadcast %c0_i32_46 : i32 to vector<1x256xi32>
      %99 = arith.cmpi sge, %62, %98 : vector<1x256xi32>
      %c15_i32_47 = arith.constant 15 : i32
      %100 = vector.broadcast %c15_i32_47 : i32 to vector<1x256xi32>
      %101 = arith.cmpi sle, %62, %100 : vector<1x256xi32>
      %102 = arith.andi %99, %101 : vector<1x256xi1>
      %c-1_i32 = arith.constant -1 : i32
      %103 = vector.broadcast %c-1_i32 : i32 to vector<1x256xi32>
      %104 = arith.cmpi sge, %61, %103 : vector<1x256xi32>
      %c14_i32 = arith.constant 14 : i32
      %105 = vector.broadcast %c14_i32 : i32 to vector<1x256xi32>
      %106 = arith.cmpi sle, %61, %105 : vector<1x256xi32>
      %107 = arith.andi %104, %106 : vector<1x256xi1>
      %c-1_i32_48 = arith.constant -1 : i32
      %108 = vector.broadcast %c-1_i32_48 : i32 to vector<1x256xi32>
      %109 = arith.cmpi sge, %62, %108 : vector<1x256xi32>
      %c14_i32_49 = arith.constant 14 : i32
      %110 = vector.broadcast %c14_i32_49 : i32 to vector<1x256xi32>
      %111 = arith.cmpi sle, %62, %110 : vector<1x256xi32>
      %112 = arith.andi %109, %111 : vector<1x256xi1>
      %c-2_i32 = arith.constant -2 : i32
      %113 = vector.broadcast %c-2_i32 : i32 to vector<1x256xi32>
      %114 = arith.cmpi sge, %61, %113 : vector<1x256xi32>
      %c13_i32 = arith.constant 13 : i32
      %115 = vector.broadcast %c13_i32 : i32 to vector<1x256xi32>
      %116 = arith.cmpi sle, %61, %115 : vector<1x256xi32>
      %117 = arith.andi %114, %116 : vector<1x256xi1>
      %c-2_i32_50 = arith.constant -2 : i32
      %118 = vector.broadcast %c-2_i32_50 : i32 to vector<1x256xi32>
      %119 = arith.cmpi sge, %62, %118 : vector<1x256xi32>
      %c13_i32_51 = arith.constant 13 : i32
      %120 = vector.broadcast %c13_i32_51 : i32 to vector<1x256xi32>
      %121 = arith.cmpi sle, %62, %120 : vector<1x256xi32>
      %122 = arith.andi %119, %121 : vector<1x256xi1>
      %c-3_i32 = arith.constant -3 : i32
      %123 = vector.broadcast %c-3_i32 : i32 to vector<1x256xi32>
      %124 = arith.cmpi sge, %61, %123 : vector<1x256xi32>
      %c12_i32 = arith.constant 12 : i32
      %125 = vector.broadcast %c12_i32 : i32 to vector<1x256xi32>
      %126 = arith.cmpi sle, %61, %125 : vector<1x256xi32>
      %127 = arith.andi %124, %126 : vector<1x256xi1>
      %c-3_i32_52 = arith.constant -3 : i32
      %128 = vector.broadcast %c-3_i32_52 : i32 to vector<1x256xi32>
      %129 = arith.cmpi sge, %62, %128 : vector<1x256xi32>
      %c12_i32_53 = arith.constant 12 : i32
      %130 = vector.broadcast %c12_i32_53 : i32 to vector<1x256xi32>
      %131 = arith.cmpi sle, %62, %130 : vector<1x256xi32>
      %132 = arith.andi %129, %131 : vector<1x256xi1>
      %c0_54 = arith.constant 0 : index
      %133 = memref.load %arg2[%c0_54] : memref<98xf32, #tpu.memory_space<smem>>
      %c1_55 = arith.constant 1 : index
      %134 = memref.load %arg2[%c1_55] : memref<98xf32, #tpu.memory_space<smem>>
      %c2 = arith.constant 2 : index
      %135 = memref.load %arg2[%c2] : memref<98xf32, #tpu.memory_space<smem>>
      %c3 = arith.constant 3 : index
      %136 = memref.load %arg2[%c3] : memref<98xf32, #tpu.memory_space<smem>>
      %c4 = arith.constant 4 : index
      %137 = memref.load %arg2[%c4] : memref<98xf32, #tpu.memory_space<smem>>
      %c5 = arith.constant 5 : index
      %138 = memref.load %arg2[%c5] : memref<98xf32, #tpu.memory_space<smem>>
      %c6 = arith.constant 6 : index
      %139 = memref.load %arg2[%c6] : memref<98xf32, #tpu.memory_space<smem>>
      %c7 = arith.constant 7 : index
      %140 = memref.load %arg2[%c7] : memref<98xf32, #tpu.memory_space<smem>>
      %c8 = arith.constant 8 : index
      %141 = memref.load %arg2[%c8] : memref<98xf32, #tpu.memory_space<smem>>
      %c9 = arith.constant 9 : index
      %142 = memref.load %arg2[%c9] : memref<98xf32, #tpu.memory_space<smem>>
      %c10 = arith.constant 10 : index
      %143 = memref.load %arg2[%c10] : memref<98xf32, #tpu.memory_space<smem>>
      %c11 = arith.constant 11 : index
      %144 = memref.load %arg2[%c11] : memref<98xf32, #tpu.memory_space<smem>>
      %c12 = arith.constant 12 : index
      %145 = memref.load %arg2[%c12] : memref<98xf32, #tpu.memory_space<smem>>
      %c13 = arith.constant 13 : index
      %146 = memref.load %arg2[%c13] : memref<98xf32, #tpu.memory_space<smem>>
      %c14 = arith.constant 14 : index
      %147 = memref.load %arg2[%c14] : memref<98xf32, #tpu.memory_space<smem>>
      %c15 = arith.constant 15 : index
      %148 = memref.load %arg2[%c15] : memref<98xf32, #tpu.memory_space<smem>>
      %c16 = arith.constant 16 : index
      %149 = memref.load %arg2[%c16] : memref<98xf32, #tpu.memory_space<smem>>
      %c17 = arith.constant 17 : index
      %150 = memref.load %arg2[%c17] : memref<98xf32, #tpu.memory_space<smem>>
      %c18 = arith.constant 18 : index
      %151 = memref.load %arg2[%c18] : memref<98xf32, #tpu.memory_space<smem>>
      %c19 = arith.constant 19 : index
      %152 = memref.load %arg2[%c19] : memref<98xf32, #tpu.memory_space<smem>>
      %c20 = arith.constant 20 : index
      %153 = memref.load %arg2[%c20] : memref<98xf32, #tpu.memory_space<smem>>
      %c21 = arith.constant 21 : index
      %154 = memref.load %arg2[%c21] : memref<98xf32, #tpu.memory_space<smem>>
      %c22 = arith.constant 22 : index
      %155 = memref.load %arg2[%c22] : memref<98xf32, #tpu.memory_space<smem>>
      %c23 = arith.constant 23 : index
      %156 = memref.load %arg2[%c23] : memref<98xf32, #tpu.memory_space<smem>>
      %c24 = arith.constant 24 : index
      %157 = memref.load %arg2[%c24] : memref<98xf32, #tpu.memory_space<smem>>
      %c25 = arith.constant 25 : index
      %158 = memref.load %arg2[%c25] : memref<98xf32, #tpu.memory_space<smem>>
      %c26 = arith.constant 26 : index
      %159 = memref.load %arg2[%c26] : memref<98xf32, #tpu.memory_space<smem>>
      %c27 = arith.constant 27 : index
      %160 = memref.load %arg2[%c27] : memref<98xf32, #tpu.memory_space<smem>>
      %c28 = arith.constant 28 : index
      %161 = memref.load %arg2[%c28] : memref<98xf32, #tpu.memory_space<smem>>
      %c29 = arith.constant 29 : index
      %162 = memref.load %arg2[%c29] : memref<98xf32, #tpu.memory_space<smem>>
      %c30 = arith.constant 30 : index
      %163 = memref.load %arg2[%c30] : memref<98xf32, #tpu.memory_space<smem>>
      %c31 = arith.constant 31 : index
      %164 = memref.load %arg2[%c31] : memref<98xf32, #tpu.memory_space<smem>>
      %c32 = arith.constant 32 : index
      %165 = memref.load %arg2[%c32] : memref<98xf32, #tpu.memory_space<smem>>
      %c33 = arith.constant 33 : index
      %166 = memref.load %arg2[%c33] : memref<98xf32, #tpu.memory_space<smem>>
      %c34 = arith.constant 34 : index
      %167 = memref.load %arg2[%c34] : memref<98xf32, #tpu.memory_space<smem>>
      %c35 = arith.constant 35 : index
      %168 = memref.load %arg2[%c35] : memref<98xf32, #tpu.memory_space<smem>>
      %c36 = arith.constant 36 : index
      %169 = memref.load %arg2[%c36] : memref<98xf32, #tpu.memory_space<smem>>
      %c37 = arith.constant 37 : index
      %170 = memref.load %arg2[%c37] : memref<98xf32, #tpu.memory_space<smem>>
      %c38 = arith.constant 38 : index
      %171 = memref.load %arg2[%c38] : memref<98xf32, #tpu.memory_space<smem>>
      %c39 = arith.constant 39 : index
      %172 = memref.load %arg2[%c39] : memref<98xf32, #tpu.memory_space<smem>>
      %c40 = arith.constant 40 : index
      %173 = memref.load %arg2[%c40] : memref<98xf32, #tpu.memory_space<smem>>
      %c41 = arith.constant 41 : index
      %174 = memref.load %arg2[%c41] : memref<98xf32, #tpu.memory_space<smem>>
      %c42 = arith.constant 42 : index
      %175 = memref.load %arg2[%c42] : memref<98xf32, #tpu.memory_space<smem>>
      %c43 = arith.constant 43 : index
      %176 = memref.load %arg2[%c43] : memref<98xf32, #tpu.memory_space<smem>>
      %c44 = arith.constant 44 : index
      %177 = memref.load %arg2[%c44] : memref<98xf32, #tpu.memory_space<smem>>
      %c45 = arith.constant 45 : index
      %178 = memref.load %arg2[%c45] : memref<98xf32, #tpu.memory_space<smem>>
      %c46 = arith.constant 46 : index
      %179 = memref.load %arg2[%c46] : memref<98xf32, #tpu.memory_space<smem>>
      %c47 = arith.constant 47 : index
      %180 = memref.load %arg2[%c47] : memref<98xf32, #tpu.memory_space<smem>>
      %c48 = arith.constant 48 : index
      %181 = memref.load %arg2[%c48] : memref<98xf32, #tpu.memory_space<smem>>
      %c49 = arith.constant 49 : index
      %182 = memref.load %arg2[%c49] : memref<98xf32, #tpu.memory_space<smem>>
      %c50 = arith.constant 50 : index
      %183 = memref.load %arg2[%c50] : memref<98xf32, #tpu.memory_space<smem>>
      %c51 = arith.constant 51 : index
      %184 = memref.load %arg2[%c51] : memref<98xf32, #tpu.memory_space<smem>>
      %c52 = arith.constant 52 : index
      %185 = memref.load %arg2[%c52] : memref<98xf32, #tpu.memory_space<smem>>
      %c53 = arith.constant 53 : index
      %186 = memref.load %arg2[%c53] : memref<98xf32, #tpu.memory_space<smem>>
      %c54 = arith.constant 54 : index
      %187 = memref.load %arg2[%c54] : memref<98xf32, #tpu.memory_space<smem>>
      %c55 = arith.constant 55 : index
      %188 = memref.load %arg2[%c55] : memref<98xf32, #tpu.memory_space<smem>>
      %c56 = arith.constant 56 : index
      %189 = memref.load %arg2[%c56] : memref<98xf32, #tpu.memory_space<smem>>
      %c57 = arith.constant 57 : index
      %190 = memref.load %arg2[%c57] : memref<98xf32, #tpu.memory_space<smem>>
      %c58 = arith.constant 58 : index
      %191 = memref.load %arg2[%c58] : memref<98xf32, #tpu.memory_space<smem>>
      %c59 = arith.constant 59 : index
      %192 = memref.load %arg2[%c59] : memref<98xf32, #tpu.memory_space<smem>>
      %c60 = arith.constant 60 : index
      %193 = memref.load %arg2[%c60] : memref<98xf32, #tpu.memory_space<smem>>
      %c61 = arith.constant 61 : index
      %194 = memref.load %arg2[%c61] : memref<98xf32, #tpu.memory_space<smem>>
      %c62 = arith.constant 62 : index
      %195 = memref.load %arg2[%c62] : memref<98xf32, #tpu.memory_space<smem>>
      %c63 = arith.constant 63 : index
      %196 = memref.load %arg2[%c63] : memref<98xf32, #tpu.memory_space<smem>>
      %c64 = arith.constant 64 : index
      %197 = memref.load %arg2[%c64] : memref<98xf32, #tpu.memory_space<smem>>
      %c65 = arith.constant 65 : index
      %198 = memref.load %arg2[%c65] : memref<98xf32, #tpu.memory_space<smem>>
      %c66 = arith.constant 66 : index
      %199 = memref.load %arg2[%c66] : memref<98xf32, #tpu.memory_space<smem>>
      %c67 = arith.constant 67 : index
      %200 = memref.load %arg2[%c67] : memref<98xf32, #tpu.memory_space<smem>>
      %c68 = arith.constant 68 : index
      %201 = memref.load %arg2[%c68] : memref<98xf32, #tpu.memory_space<smem>>
      %c69 = arith.constant 69 : index
      %202 = memref.load %arg2[%c69] : memref<98xf32, #tpu.memory_space<smem>>
      %c70 = arith.constant 70 : index
      %203 = memref.load %arg2[%c70] : memref<98xf32, #tpu.memory_space<smem>>
      %c71 = arith.constant 71 : index
      %204 = memref.load %arg2[%c71] : memref<98xf32, #tpu.memory_space<smem>>
      %c72 = arith.constant 72 : index
      %205 = memref.load %arg2[%c72] : memref<98xf32, #tpu.memory_space<smem>>
      %c73 = arith.constant 73 : index
      %206 = memref.load %arg2[%c73] : memref<98xf32, #tpu.memory_space<smem>>
      %c74 = arith.constant 74 : index
      %207 = memref.load %arg2[%c74] : memref<98xf32, #tpu.memory_space<smem>>
      %c75 = arith.constant 75 : index
      %208 = memref.load %arg2[%c75] : memref<98xf32, #tpu.memory_space<smem>>
      %c76 = arith.constant 76 : index
      %209 = memref.load %arg2[%c76] : memref<98xf32, #tpu.memory_space<smem>>
      %c77 = arith.constant 77 : index
      %210 = memref.load %arg2[%c77] : memref<98xf32, #tpu.memory_space<smem>>
      %c78 = arith.constant 78 : index
      %211 = memref.load %arg2[%c78] : memref<98xf32, #tpu.memory_space<smem>>
      %c79 = arith.constant 79 : index
      %212 = memref.load %arg2[%c79] : memref<98xf32, #tpu.memory_space<smem>>
      %c80 = arith.constant 80 : index
      %213 = memref.load %arg2[%c80] : memref<98xf32, #tpu.memory_space<smem>>
      %c81 = arith.constant 81 : index
      %214 = memref.load %arg2[%c81] : memref<98xf32, #tpu.memory_space<smem>>
      %c82 = arith.constant 82 : index
      %215 = memref.load %arg2[%c82] : memref<98xf32, #tpu.memory_space<smem>>
      %c83 = arith.constant 83 : index
      %216 = memref.load %arg2[%c83] : memref<98xf32, #tpu.memory_space<smem>>
      %c84 = arith.constant 84 : index
      %217 = memref.load %arg2[%c84] : memref<98xf32, #tpu.memory_space<smem>>
      %c85 = arith.constant 85 : index
      %218 = memref.load %arg2[%c85] : memref<98xf32, #tpu.memory_space<smem>>
      %c86 = arith.constant 86 : index
      %219 = memref.load %arg2[%c86] : memref<98xf32, #tpu.memory_space<smem>>
      %c87 = arith.constant 87 : index
      %220 = memref.load %arg2[%c87] : memref<98xf32, #tpu.memory_space<smem>>
      %c88 = arith.constant 88 : index
      %221 = memref.load %arg2[%c88] : memref<98xf32, #tpu.memory_space<smem>>
      %c89 = arith.constant 89 : index
      %222 = memref.load %arg2[%c89] : memref<98xf32, #tpu.memory_space<smem>>
      %c90 = arith.constant 90 : index
      %223 = memref.load %arg2[%c90] : memref<98xf32, #tpu.memory_space<smem>>
      %c91 = arith.constant 91 : index
      %224 = memref.load %arg2[%c91] : memref<98xf32, #tpu.memory_space<smem>>
      %c92 = arith.constant 92 : index
      %225 = memref.load %arg2[%c92] : memref<98xf32, #tpu.memory_space<smem>>
      %c93 = arith.constant 93 : index
      %226 = memref.load %arg2[%c93] : memref<98xf32, #tpu.memory_space<smem>>
      %c94 = arith.constant 94 : index
      %227 = memref.load %arg2[%c94] : memref<98xf32, #tpu.memory_space<smem>>
      %c95 = arith.constant 95 : index
      %228 = memref.load %arg2[%c95] : memref<98xf32, #tpu.memory_space<smem>>
      %c96 = arith.constant 96 : index
      %229 = memref.load %arg2[%c96] : memref<98xf32, #tpu.memory_space<smem>>
      %c97 = arith.constant 97 : index
      %230 = memref.load %arg2[%c97] : memref<98xf32, #tpu.memory_space<smem>>
      %231 = tpu.iota {dimensions = array<i32: 0>} : vector<2x1xi32>
      %c0_i32_56 = arith.constant 0 : i32
      %232 = vector.broadcast %c0_i32_56 : i32 to vector<2x1xi32>
      %233 = arith.cmpi eq, %231, %232 : vector<2x1xi32>
      %cst_57 = arith.constant 0.000000e+00 : f32
      %234 = vector.broadcast %cst_57 : f32 to vector<2x256xf32>
      %c0_58 = arith.constant 0 : index
      %c0_59 = arith.constant 0 : index
      %c0_60 = arith.constant 0 : index
      %235 = vector.load %arg6[%c0_58, %c0_59, %c0_60] : memref<2x8x256xf32, #tpu.memory_space<vmem>>, vector<1x8x256xf32>
      %236 = vector.shape_cast %235 : vector<1x8x256xf32> to vector<8x256xf32>
      %cst_61 = arith.constant dense<0.000000e+00> : vector<256xf32>
      %237 = vector.multi_reduction <add>, %236, %cst_61 [0] : vector<8x256xf32> to vector<256xf32>
      %238 = vector.shape_cast %237 : vector<256xf32> to vector<1x256xf32>
      %cst_62 = arith.constant 2.500000e-01 : f32
      %239 = vector.broadcast %cst_62 : f32 to vector<1x256xf32>
      %240 = arith.mulf %238, %239 : vector<1x256xf32>
      %c0_63 = arith.constant 0 : index
      %c0_64 = arith.constant 0 : index
      %c0_65 = arith.constant 0 : index
      %241 = vector.load %arg7[%c0_63, %c0_64, %c0_65] : memref<2x8x256xf32, #tpu.memory_space<vmem>>, vector<1x8x256xf32>
      %242 = vector.shape_cast %241 : vector<1x8x256xf32> to vector<8x256xf32>
      %cst_66 = arith.constant dense<0xFF800000> : vector<256xf32>
      %243 = vector.multi_reduction <maximumf>, %242, %cst_66 [0] : vector<8x256xf32> to vector<256xf32>
      %244 = vector.shape_cast %243 : vector<256xf32> to vector<1x256xf32>
      %245 = vector.shape_cast %233 : vector<2x1xi1> to vector<2x1xi1>
      %246 = vector.broadcast %245 : vector<2x1xi1> to vector<2x256xi1>
      %247 = vector.shape_cast %240 : vector<1x256xf32> to vector<1x256xf32>
      %248 = vector.broadcast %247 : vector<1x256xf32> to vector<2x256xf32>
      %249 = vector.shape_cast %244 : vector<1x256xf32> to vector<1x256xf32>
      %250 = vector.broadcast %249 : vector<1x256xf32> to vector<2x256xf32>
      %251 = arith.select %246, %248, %250 : vector<2x256xi1>, vector<2x256xf32>
      %cst_67 = arith.constant 0.000000e+00 : f32
      %252 = vector.broadcast %cst_67 : f32 to vector<2x256xf32>
      %c48_i32 = arith.constant 48 : i32
      %253 = tpu.dynamic_rotate %251 by %c48_i32 dim 1 : vector<2x256xf32>, i32 -> vector<2x256xf32>
      %254 = vector.shape_cast %67 : vector<1x256xi1> to vector<1x256xi1>
      %255 = vector.broadcast %254 : vector<1x256xi1> to vector<2x256xi1>
      %256 = arith.select %255, %253, %234 : vector<2x256xi1>, vector<2x256xf32>
      %c3_i32_68 = arith.constant 3 : i32
      %257 = tpu.dynamic_rotate %256 by %c3_i32_68 dim 1 : vector<2x256xf32>, i32 -> vector<2x256xf32>
      %258 = vector.shape_cast %72 : vector<1x256xi1> to vector<1x256xi1>
      %259 = vector.broadcast %258 : vector<1x256xi1> to vector<2x256xi1>
      %260 = arith.select %259, %257, %234 : vector<2x256xi1>, vector<2x256xf32>
      %261 = vector.broadcast %133 : f32 to vector<2x1xf32>
      %262 = vector.broadcast %182 : f32 to vector<2x1xf32>
      %263 = arith.select %233, %261, %262 : vector<2x1xi1>, vector<2x1xf32>
      %264 = vector.broadcast %263 : vector<2x1xf32> to vector<2x256xf32>
      %265 = arith.mulf %264, %260 : vector<2x256xf32>
      %266 = arith.addf %252, %265 : vector<2x256xf32>
      %c2_i32_69 = arith.constant 2 : i32
      %267 = tpu.dynamic_rotate %256 by %c2_i32_69 dim 1 : vector<2x256xf32>, i32 -> vector<2x256xf32>
      %268 = vector.shape_cast %82 : vector<1x256xi1> to vector<1x256xi1>
      %269 = vector.broadcast %268 : vector<1x256xi1> to vector<2x256xi1>
      %270 = arith.select %269, %267, %234 : vector<2x256xi1>, vector<2x256xf32>
      %271 = vector.broadcast %134 : f32 to vector<2x1xf32>
      %272 = vector.broadcast %183 : f32 to vector<2x1xf32>
      %273 = arith.select %233, %271, %272 : vector<2x1xi1>, vector<2x1xf32>
      %274 = vector.broadcast %273 : vector<2x1xf32> to vector<2x256xf32>
      %275 = arith.mulf %274, %270 : vector<2x256xf32>
      %276 = arith.addf %266, %275 : vector<2x256xf32>
      %c1_i32_70 = arith.constant 1 : i32
      %277 = tpu.dynamic_rotate %256 by %c1_i32_70 dim 1 : vector<2x256xf32>, i32 -> vector<2x256xf32>
      %278 = vector.shape_cast %92 : vector<1x256xi1> to vector<1x256xi1>
      %279 = vector.broadcast %278 : vector<1x256xi1> to vector<2x256xi1>
      %280 = arith.select %279, %277, %234 : vector<2x256xi1>, vector<2x256xf32>
      %281 = vector.broadcast %135 : f32 to vector<2x1xf32>
      %282 = vector.broadcast %184 : f32 to vector<2x1xf32>
      %283 = arith.select %233, %281, %282 : vector<2x1xi1>, vector<2x1xf32>
      %284 = vector.broadcast %283 : vector<2x1xf32> to vector<2x256xf32>
      %285 = arith.mulf %284, %280 : vector<2x256xf32>
      %286 = arith.addf %276, %285 : vector<2x256xf32>
      %287 = vector.shape_cast %102 : vector<1x256xi1> to vector<1x256xi1>
      %288 = vector.broadcast %287 : vector<1x256xi1> to vector<2x256xi1>
      %289 = arith.select %288, %256, %234 : vector<2x256xi1>, vector<2x256xf32>
      %290 = vector.broadcast %136 : f32 to vector<2x1xf32>
      %291 = vector.broadcast %185 : f32 to vector<2x1xf32>
      %292 = arith.select %233, %290, %291 : vector<2x1xi1>, vector<2x1xf32>
      %293 = vector.broadcast %292 : vector<2x1xf32> to vector<2x256xf32>
      %294 = arith.mulf %293, %289 : vector<2x256xf32>
      %295 = arith.addf %286, %294 : vector<2x256xf32>
      %c255_i32 = arith.constant 255 : i32
      %296 = tpu.dynamic_rotate %256 by %c255_i32 dim 1 : vector<2x256xf32>, i32 -> vector<2x256xf32>
      %297 = vector.shape_cast %112 : vector<1x256xi1> to vector<1x256xi1>
      %298 = vector.broadcast %297 : vector<1x256xi1> to vector<2x256xi1>
      %299 = arith.select %298, %296, %234 : vector<2x256xi1>, vector<2x256xf32>
      %300 = vector.broadcast %137 : f32 to vector<2x1xf32>
      %301 = vector.broadcast %186 : f32 to vector<2x1xf32>
      %302 = arith.select %233, %300, %301 : vector<2x1xi1>, vector<2x1xf32>
      %303 = vector.broadcast %302 : vector<2x1xf32> to vector<2x256xf32>
      %304 = arith.mulf %303, %299 : vector<2x256xf32>
      %305 = arith.addf %295, %304 : vector<2x256xf32>
      %c254_i32 = arith.constant 254 : i32
      %306 = tpu.dynamic_rotate %256 by %c254_i32 dim 1 : vector<2x256xf32>, i32 -> vector<2x256xf32>
      %307 = vector.shape_cast %122 : vector<1x256xi1> to vector<1x256xi1>
      %308 = vector.broadcast %307 : vector<1x256xi1> to vector<2x256xi1>
      %309 = arith.select %308, %306, %234 : vector<2x256xi1>, vector<2x256xf32>
      %310 = vector.broadcast %138 : f32 to vector<2x1xf32>
      %311 = vector.broadcast %187 : f32 to vector<2x1xf32>
      %312 = arith.select %233, %310, %311 : vector<2x1xi1>, vector<2x1xf32>
      %313 = vector.broadcast %312 : vector<2x1xf32> to vector<2x256xf32>
      %314 = arith.mulf %313, %309 : vector<2x256xf32>
      %315 = arith.addf %305, %314 : vector<2x256xf32>
      %c253_i32 = arith.constant 253 : i32
      %316 = tpu.dynamic_rotate %256 by %c253_i32 dim 1 : vector<2x256xf32>, i32 -> vector<2x256xf32>
      %317 = vector.shape_cast %132 : vector<1x256xi1> to vector<1x256xi1>
      %318 = vector.broadcast %317 : vector<1x256xi1> to vector<2x256xi1>
      %319 = arith.select %318, %316, %234 : vector<2x256xi1>, vector<2x256xf32>
      %320 = vector.broadcast %139 : f32 to vector<2x1xf32>
      %321 = vector.broadcast %188 : f32 to vector<2x1xf32>
      %322 = arith.select %233, %320, %321 : vector<2x1xi1>, vector<2x1xf32>
      %323 = vector.broadcast %322 : vector<2x1xf32> to vector<2x256xf32>
      %324 = arith.mulf %323, %319 : vector<2x256xf32>
      %325 = arith.addf %315, %324 : vector<2x256xf32>
      %c32_i32 = arith.constant 32 : i32
      %326 = tpu.dynamic_rotate %251 by %c32_i32 dim 1 : vector<2x256xf32>, i32 -> vector<2x256xf32>
      %327 = vector.shape_cast %77 : vector<1x256xi1> to vector<1x256xi1>
      %328 = vector.broadcast %327 : vector<1x256xi1> to vector<2x256xi1>
      %329 = arith.select %328, %326, %234 : vector<2x256xi1>, vector<2x256xf32>
      %c3_i32_71 = arith.constant 3 : i32
      %330 = tpu.dynamic_rotate %329 by %c3_i32_71 dim 1 : vector<2x256xf32>, i32 -> vector<2x256xf32>
      %331 = vector.shape_cast %72 : vector<1x256xi1> to vector<1x256xi1>
      %332 = vector.broadcast %331 : vector<1x256xi1> to vector<2x256xi1>
      %333 = arith.select %332, %330, %234 : vector<2x256xi1>, vector<2x256xf32>
      %334 = vector.broadcast %140 : f32 to vector<2x1xf32>
      %335 = vector.broadcast %189 : f32 to vector<2x1xf32>
      %336 = arith.select %233, %334, %335 : vector<2x1xi1>, vector<2x1xf32>
      %337 = vector.broadcast %336 : vector<2x1xf32> to vector<2x256xf32>
      %338 = arith.mulf %337, %333 : vector<2x256xf32>
      %339 = arith.addf %325, %338 : vector<2x256xf32>
      %c2_i32_72 = arith.constant 2 : i32
      %340 = tpu.dynamic_rotate %329 by %c2_i32_72 dim 1 : vector<2x256xf32>, i32 -> vector<2x256xf32>
      %341 = vector.shape_cast %82 : vector<1x256xi1> to vector<1x256xi1>
      %342 = vector.broadcast %341 : vector<1x256xi1> to vector<2x256xi1>
      %343 = arith.select %342, %340, %234 : vector<2x256xi1>, vector<2x256xf32>
      %344 = vector.broadcast %141 : f32 to vector<2x1xf32>
      %345 = vector.broadcast %190 : f32 to vector<2x1xf32>
      %346 = arith.select %233, %344, %345 : vector<2x1xi1>, vector<2x1xf32>
      %347 = vector.broadcast %346 : vector<2x1xf32> to vector<2x256xf32>
      %348 = arith.mulf %347, %343 : vector<2x256xf32>
      %349 = arith.addf %339, %348 : vector<2x256xf32>
      %c1_i32_73 = arith.constant 1 : i32
      %350 = tpu.dynamic_rotate %329 by %c1_i32_73 dim 1 : vector<2x256xf32>, i32 -> vector<2x256xf32>
      %351 = vector.shape_cast %92 : vector<1x256xi1> to vector<1x256xi1>
      %352 = vector.broadcast %351 : vector<1x256xi1> to vector<2x256xi1>
      %353 = arith.select %352, %350, %234 : vector<2x256xi1>, vector<2x256xf32>
      %354 = vector.broadcast %142 : f32 to vector<2x1xf32>
      %355 = vector.broadcast %191 : f32 to vector<2x1xf32>
      %356 = arith.select %233, %354, %355 : vector<2x1xi1>, vector<2x1xf32>
      %357 = vector.broadcast %356 : vector<2x1xf32> to vector<2x256xf32>
      %358 = arith.mulf %357, %353 : vector<2x256xf32>
      %359 = arith.addf %349, %358 : vector<2x256xf32>
      %360 = vector.shape_cast %102 : vector<1x256xi1> to vector<1x256xi1>
      %361 = vector.broadcast %360 : vector<1x256xi1> to vector<2x256xi1>
      %362 = arith.select %361, %329, %234 : vector<2x256xi1>, vector<2x256xf32>
      %363 = vector.broadcast %143 : f32 to vector<2x1xf32>
      %364 = vector.broadcast %192 : f32 to vector<2x1xf32>
      %365 = arith.select %233, %363, %364 : vector<2x1xi1>, vector<2x1xf32>
      %366 = vector.broadcast %365 : vector<2x1xf32> to vector<2x256xf32>
      %367 = arith.mulf %366, %362 : vector<2x256xf32>
      %368 = arith.addf %359, %367 : vector<2x256xf32>
      %c255_i32_74 = arith.constant 255 : i32
      %369 = tpu.dynamic_rotate %329 by %c255_i32_74 dim 1 : vector<2x256xf32>, i32 -> vector<2x256xf32>
      %370 = vector.shape_cast %112 : vector<1x256xi1> to vector<1x256xi1>
      %371 = vector.broadcast %370 : vector<1x256xi1> to vector<2x256xi1>
      %372 = arith.select %371, %369, %234 : vector<2x256xi1>, vector<2x256xf32>
      %373 = vector.broadcast %144 : f32 to vector<2x1xf32>
      %374 = vector.broadcast %193 : f32 to vector<2x1xf32>
      %375 = arith.select %233, %373, %374 : vector<2x1xi1>, vector<2x1xf32>
      %376 = vector.broadcast %375 : vector<2x1xf32> to vector<2x256xf32>
      %377 = arith.mulf %376, %372 : vector<2x256xf32>
      %378 = arith.addf %368, %377 : vector<2x256xf32>
      %c254_i32_75 = arith.constant 254 : i32
      %379 = tpu.dynamic_rotate %329 by %c254_i32_75 dim 1 : vector<2x256xf32>, i32 -> vector<2x256xf32>
      %380 = vector.shape_cast %122 : vector<1x256xi1> to vector<1x256xi1>
      %381 = vector.broadcast %380 : vector<1x256xi1> to vector<2x256xi1>
      %382 = arith.select %381, %379, %234 : vector<2x256xi1>, vector<2x256xf32>
      %383 = vector.broadcast %145 : f32 to vector<2x1xf32>
      %384 = vector.broadcast %194 : f32 to vector<2x1xf32>
      %385 = arith.select %233, %383, %384 : vector<2x1xi1>, vector<2x1xf32>
      %386 = vector.broadcast %385 : vector<2x1xf32> to vector<2x256xf32>
      %387 = arith.mulf %386, %382 : vector<2x256xf32>
      %388 = arith.addf %378, %387 : vector<2x256xf32>
      %c253_i32_76 = arith.constant 253 : i32
      %389 = tpu.dynamic_rotate %329 by %c253_i32_76 dim 1 : vector<2x256xf32>, i32 -> vector<2x256xf32>
      %390 = vector.shape_cast %132 : vector<1x256xi1> to vector<1x256xi1>
      %391 = vector.broadcast %390 : vector<1x256xi1> to vector<2x256xi1>
      %392 = arith.select %391, %389, %234 : vector<2x256xi1>, vector<2x256xf32>
      %393 = vector.broadcast %146 : f32 to vector<2x1xf32>
      %394 = vector.broadcast %195 : f32 to vector<2x1xf32>
      %395 = arith.select %233, %393, %394 : vector<2x1xi1>, vector<2x1xf32>
      %396 = vector.broadcast %395 : vector<2x1xf32> to vector<2x256xf32>
      %397 = arith.mulf %396, %392 : vector<2x256xf32>
      %398 = arith.addf %388, %397 : vector<2x256xf32>
      %c16_i32_77 = arith.constant 16 : i32
      %399 = tpu.dynamic_rotate %251 by %c16_i32_77 dim 1 : vector<2x256xf32>, i32 -> vector<2x256xf32>
      %400 = vector.shape_cast %87 : vector<1x256xi1> to vector<1x256xi1>
      %401 = vector.broadcast %400 : vector<1x256xi1> to vector<2x256xi1>
      %402 = arith.select %401, %399, %234 : vector<2x256xi1>, vector<2x256xf32>
      %c3_i32_78 = arith.constant 3 : i32
      %403 = tpu.dynamic_rotate %402 by %c3_i32_78 dim 1 : vector<2x256xf32>, i32 -> vector<2x256xf32>
      %404 = vector.shape_cast %72 : vector<1x256xi1> to vector<1x256xi1>
      %405 = vector.broadcast %404 : vector<1x256xi1> to vector<2x256xi1>
      %406 = arith.select %405, %403, %234 : vector<2x256xi1>, vector<2x256xf32>
      %407 = vector.broadcast %147 : f32 to vector<2x1xf32>
      %408 = vector.broadcast %196 : f32 to vector<2x1xf32>
      %409 = arith.select %233, %407, %408 : vector<2x1xi1>, vector<2x1xf32>
      %410 = vector.broadcast %409 : vector<2x1xf32> to vector<2x256xf32>
      %411 = arith.mulf %410, %406 : vector<2x256xf32>
      %412 = arith.addf %398, %411 : vector<2x256xf32>
      %c2_i32_79 = arith.constant 2 : i32
      %413 = tpu.dynamic_rotate %402 by %c2_i32_79 dim 1 : vector<2x256xf32>, i32 -> vector<2x256xf32>
      %414 = vector.shape_cast %82 : vector<1x256xi1> to vector<1x256xi1>
      %415 = vector.broadcast %414 : vector<1x256xi1> to vector<2x256xi1>
      %416 = arith.select %415, %413, %234 : vector<2x256xi1>, vector<2x256xf32>
      %417 = vector.broadcast %148 : f32 to vector<2x1xf32>
      %418 = vector.broadcast %197 : f32 to vector<2x1xf32>
      %419 = arith.select %233, %417, %418 : vector<2x1xi1>, vector<2x1xf32>
      %420 = vector.broadcast %419 : vector<2x1xf32> to vector<2x256xf32>
      %421 = arith.mulf %420, %416 : vector<2x256xf32>
      %422 = arith.addf %412, %421 : vector<2x256xf32>
      %c1_i32_80 = arith.constant 1 : i32
      %423 = tpu.dynamic_rotate %402 by %c1_i32_80 dim 1 : vector<2x256xf32>, i32 -> vector<2x256xf32>
      %424 = vector.shape_cast %92 : vector<1x256xi1> to vector<1x256xi1>
      %425 = vector.broadcast %424 : vector<1x256xi1> to vector<2x256xi1>
      %426 = arith.select %425, %423, %234 : vector<2x256xi1>, vector<2x256xf32>
      %427 = vector.broadcast %149 : f32 to vector<2x1xf32>
      %428 = vector.broadcast %198 : f32 to vector<2x1xf32>
      %429 = arith.select %233, %427, %428 : vector<2x1xi1>, vector<2x1xf32>
      %430 = vector.broadcast %429 : vector<2x1xf32> to vector<2x256xf32>
      %431 = arith.mulf %430, %426 : vector<2x256xf32>
      %432 = arith.addf %422, %431 : vector<2x256xf32>
      %433 = vector.shape_cast %102 : vector<1x256xi1> to vector<1x256xi1>
      %434 = vector.broadcast %433 : vector<1x256xi1> to vector<2x256xi1>
      %435 = arith.select %434, %402, %234 : vector<2x256xi1>, vector<2x256xf32>
      %436 = vector.broadcast %150 : f32 to vector<2x1xf32>
      %437 = vector.broadcast %199 : f32 to vector<2x1xf32>
      %438 = arith.select %233, %436, %437 : vector<2x1xi1>, vector<2x1xf32>
      %439 = vector.broadcast %438 : vector<2x1xf32> to vector<2x256xf32>
      %440 = arith.mulf %439, %435 : vector<2x256xf32>
      %441 = arith.addf %432, %440 : vector<2x256xf32>
      %c255_i32_81 = arith.constant 255 : i32
      %442 = tpu.dynamic_rotate %402 by %c255_i32_81 dim 1 : vector<2x256xf32>, i32 -> vector<2x256xf32>
      %443 = vector.shape_cast %112 : vector<1x256xi1> to vector<1x256xi1>
      %444 = vector.broadcast %443 : vector<1x256xi1> to vector<2x256xi1>
      %445 = arith.select %444, %442, %234 : vector<2x256xi1>, vector<2x256xf32>
      %446 = vector.broadcast %151 : f32 to vector<2x1xf32>
      %447 = vector.broadcast %200 : f32 to vector<2x1xf32>
      %448 = arith.select %233, %446, %447 : vector<2x1xi1>, vector<2x1xf32>
      %449 = vector.broadcast %448 : vector<2x1xf32> to vector<2x256xf32>
      %450 = arith.mulf %449, %445 : vector<2x256xf32>
      %451 = arith.addf %441, %450 : vector<2x256xf32>
      %c254_i32_82 = arith.constant 254 : i32
      %452 = tpu.dynamic_rotate %402 by %c254_i32_82 dim 1 : vector<2x256xf32>, i32 -> vector<2x256xf32>
      %453 = vector.shape_cast %122 : vector<1x256xi1> to vector<1x256xi1>
      %454 = vector.broadcast %453 : vector<1x256xi1> to vector<2x256xi1>
      %455 = arith.select %454, %452, %234 : vector<2x256xi1>, vector<2x256xf32>
      %456 = vector.broadcast %152 : f32 to vector<2x1xf32>
      %457 = vector.broadcast %201 : f32 to vector<2x1xf32>
      %458 = arith.select %233, %456, %457 : vector<2x1xi1>, vector<2x1xf32>
      %459 = vector.broadcast %458 : vector<2x1xf32> to vector<2x256xf32>
      %460 = arith.mulf %459, %455 : vector<2x256xf32>
      %461 = arith.addf %451, %460 : vector<2x256xf32>
      %c253_i32_83 = arith.constant 253 : i32
      %462 = tpu.dynamic_rotate %402 by %c253_i32_83 dim 1 : vector<2x256xf32>, i32 -> vector<2x256xf32>
      %463 = vector.shape_cast %132 : vector<1x256xi1> to vector<1x256xi1>
      %464 = vector.broadcast %463 : vector<1x256xi1> to vector<2x256xi1>
      %465 = arith.select %464, %462, %234 : vector<2x256xi1>, vector<2x256xf32>
      %466 = vector.broadcast %153 : f32 to vector<2x1xf32>
      %467 = vector.broadcast %202 : f32 to vector<2x1xf32>
      %468 = arith.select %233, %466, %467 : vector<2x1xi1>, vector<2x1xf32>
      %469 = vector.broadcast %468 : vector<2x1xf32> to vector<2x256xf32>
      %470 = arith.mulf %469, %465 : vector<2x256xf32>
      %471 = arith.addf %461, %470 : vector<2x256xf32>
      %472 = vector.shape_cast %97 : vector<1x256xi1> to vector<1x256xi1>
      %473 = vector.broadcast %472 : vector<1x256xi1> to vector<2x256xi1>
      %474 = arith.select %473, %251, %234 : vector<2x256xi1>, vector<2x256xf32>
      %c3_i32_84 = arith.constant 3 : i32
      %475 = tpu.dynamic_rotate %474 by %c3_i32_84 dim 1 : vector<2x256xf32>, i32 -> vector<2x256xf32>
      %476 = vector.shape_cast %72 : vector<1x256xi1> to vector<1x256xi1>
      %477 = vector.broadcast %476 : vector<1x256xi1> to vector<2x256xi1>
      %478 = arith.select %477, %475, %234 : vector<2x256xi1>, vector<2x256xf32>
      %479 = vector.broadcast %154 : f32 to vector<2x1xf32>
      %480 = vector.broadcast %203 : f32 to vector<2x1xf32>
      %481 = arith.select %233, %479, %480 : vector<2x1xi1>, vector<2x1xf32>
      %482 = vector.broadcast %481 : vector<2x1xf32> to vector<2x256xf32>
      %483 = arith.mulf %482, %478 : vector<2x256xf32>
      %484 = arith.addf %471, %483 : vector<2x256xf32>
      %c2_i32_85 = arith.constant 2 : i32
      %485 = tpu.dynamic_rotate %474 by %c2_i32_85 dim 1 : vector<2x256xf32>, i32 -> vector<2x256xf32>
      %486 = vector.shape_cast %82 : vector<1x256xi1> to vector<1x256xi1>
      %487 = vector.broadcast %486 : vector<1x256xi1> to vector<2x256xi1>
      %488 = arith.select %487, %485, %234 : vector<2x256xi1>, vector<2x256xf32>
      %489 = vector.broadcast %155 : f32 to vector<2x1xf32>
      %490 = vector.broadcast %204 : f32 to vector<2x1xf32>
      %491 = arith.select %233, %489, %490 : vector<2x1xi1>, vector<2x1xf32>
      %492 = vector.broadcast %491 : vector<2x1xf32> to vector<2x256xf32>
      %493 = arith.mulf %492, %488 : vector<2x256xf32>
      %494 = arith.addf %484, %493 : vector<2x256xf32>
      %c1_i32_86 = arith.constant 1 : i32
      %495 = tpu.dynamic_rotate %474 by %c1_i32_86 dim 1 : vector<2x256xf32>, i32 -> vector<2x256xf32>
      %496 = vector.shape_cast %92 : vector<1x256xi1> to vector<1x256xi1>
      %497 = vector.broadcast %496 : vector<1x256xi1> to vector<2x256xi1>
      %498 = arith.select %497, %495, %234 : vector<2x256xi1>, vector<2x256xf32>
      %499 = vector.broadcast %156 : f32 to vector<2x1xf32>
      %500 = vector.broadcast %205 : f32 to vector<2x1xf32>
      %501 = arith.select %233, %499, %500 : vector<2x1xi1>, vector<2x1xf32>
      %502 = vector.broadcast %501 : vector<2x1xf32> to vector<2x256xf32>
      %503 = arith.mulf %502, %498 : vector<2x256xf32>
      %504 = arith.addf %494, %503 : vector<2x256xf32>
      %505 = vector.shape_cast %102 : vector<1x256xi1> to vector<1x256xi1>
      %506 = vector.broadcast %505 : vector<1x256xi1> to vector<2x256xi1>
      %507 = arith.select %506, %474, %234 : vector<2x256xi1>, vector<2x256xf32>
      %508 = vector.broadcast %157 : f32 to vector<2x1xf32>
      %509 = vector.broadcast %206 : f32 to vector<2x1xf32>
      %510 = arith.select %233, %508, %509 : vector<2x1xi1>, vector<2x1xf32>
      %511 = vector.broadcast %510 : vector<2x1xf32> to vector<2x256xf32>
      %512 = arith.mulf %511, %507 : vector<2x256xf32>
      %513 = arith.addf %504, %512 : vector<2x256xf32>
      %c255_i32_87 = arith.constant 255 : i32
      %514 = tpu.dynamic_rotate %474 by %c255_i32_87 dim 1 : vector<2x256xf32>, i32 -> vector<2x256xf32>
      %515 = vector.shape_cast %112 : vector<1x256xi1> to vector<1x256xi1>
      %516 = vector.broadcast %515 : vector<1x256xi1> to vector<2x256xi1>
      %517 = arith.select %516, %514, %234 : vector<2x256xi1>, vector<2x256xf32>
      %518 = vector.broadcast %158 : f32 to vector<2x1xf32>
      %519 = vector.broadcast %207 : f32 to vector<2x1xf32>
      %520 = arith.select %233, %518, %519 : vector<2x1xi1>, vector<2x1xf32>
      %521 = vector.broadcast %520 : vector<2x1xf32> to vector<2x256xf32>
      %522 = arith.mulf %521, %517 : vector<2x256xf32>
      %523 = arith.addf %513, %522 : vector<2x256xf32>
      %c254_i32_88 = arith.constant 254 : i32
      %524 = tpu.dynamic_rotate %474 by %c254_i32_88 dim 1 : vector<2x256xf32>, i32 -> vector<2x256xf32>
      %525 = vector.shape_cast %122 : vector<1x256xi1> to vector<1x256xi1>
      %526 = vector.broadcast %525 : vector<1x256xi1> to vector<2x256xi1>
      %527 = arith.select %526, %524, %234 : vector<2x256xi1>, vector<2x256xf32>
      %528 = vector.broadcast %159 : f32 to vector<2x1xf32>
      %529 = vector.broadcast %208 : f32 to vector<2x1xf32>
      %530 = arith.select %233, %528, %529 : vector<2x1xi1>, vector<2x1xf32>
      %531 = vector.broadcast %530 : vector<2x1xf32> to vector<2x256xf32>
      %532 = arith.mulf %531, %527 : vector<2x256xf32>
      %533 = arith.addf %523, %532 : vector<2x256xf32>
      %c253_i32_89 = arith.constant 253 : i32
      %534 = tpu.dynamic_rotate %474 by %c253_i32_89 dim 1 : vector<2x256xf32>, i32 -> vector<2x256xf32>
      %535 = vector.shape_cast %132 : vector<1x256xi1> to vector<1x256xi1>
      %536 = vector.broadcast %535 : vector<1x256xi1> to vector<2x256xi1>
      %537 = arith.select %536, %534, %234 : vector<2x256xi1>, vector<2x256xf32>
      %538 = vector.broadcast %160 : f32 to vector<2x1xf32>
      %539 = vector.broadcast %209 : f32 to vector<2x1xf32>
      %540 = arith.select %233, %538, %539 : vector<2x1xi1>, vector<2x1xf32>
      %541 = vector.broadcast %540 : vector<2x1xf32> to vector<2x256xf32>
      %542 = arith.mulf %541, %537 : vector<2x256xf32>
      %543 = arith.addf %533, %542 : vector<2x256xf32>
      %c240_i32 = arith.constant 240 : i32
      %544 = tpu.dynamic_rotate %251 by %c240_i32 dim 1 : vector<2x256xf32>, i32 -> vector<2x256xf32>
      %545 = vector.shape_cast %107 : vector<1x256xi1> to vector<1x256xi1>
      %546 = vector.broadcast %545 : vector<1x256xi1> to vector<2x256xi1>
      %547 = arith.select %546, %544, %234 : vector<2x256xi1>, vector<2x256xf32>
      %c3_i32_90 = arith.constant 3 : i32
      %548 = tpu.dynamic_rotate %547 by %c3_i32_90 dim 1 : vector<2x256xf32>, i32 -> vector<2x256xf32>
      %549 = vector.shape_cast %72 : vector<1x256xi1> to vector<1x256xi1>
      %550 = vector.broadcast %549 : vector<1x256xi1> to vector<2x256xi1>
      %551 = arith.select %550, %548, %234 : vector<2x256xi1>, vector<2x256xf32>
      %552 = vector.broadcast %161 : f32 to vector<2x1xf32>
      %553 = vector.broadcast %210 : f32 to vector<2x1xf32>
      %554 = arith.select %233, %552, %553 : vector<2x1xi1>, vector<2x1xf32>
      %555 = vector.broadcast %554 : vector<2x1xf32> to vector<2x256xf32>
      %556 = arith.mulf %555, %551 : vector<2x256xf32>
      %557 = arith.addf %543, %556 : vector<2x256xf32>
      %c2_i32_91 = arith.constant 2 : i32
      %558 = tpu.dynamic_rotate %547 by %c2_i32_91 dim 1 : vector<2x256xf32>, i32 -> vector<2x256xf32>
      %559 = vector.shape_cast %82 : vector<1x256xi1> to vector<1x256xi1>
      %560 = vector.broadcast %559 : vector<1x256xi1> to vector<2x256xi1>
      %561 = arith.select %560, %558, %234 : vector<2x256xi1>, vector<2x256xf32>
      %562 = vector.broadcast %162 : f32 to vector<2x1xf32>
      %563 = vector.broadcast %211 : f32 to vector<2x1xf32>
      %564 = arith.select %233, %562, %563 : vector<2x1xi1>, vector<2x1xf32>
      %565 = vector.broadcast %564 : vector<2x1xf32> to vector<2x256xf32>
      %566 = arith.mulf %565, %561 : vector<2x256xf32>
      %567 = arith.addf %557, %566 : vector<2x256xf32>
      %c1_i32_92 = arith.constant 1 : i32
      %568 = tpu.dynamic_rotate %547 by %c1_i32_92 dim 1 : vector<2x256xf32>, i32 -> vector<2x256xf32>
      %569 = vector.shape_cast %92 : vector<1x256xi1> to vector<1x256xi1>
      %570 = vector.broadcast %569 : vector<1x256xi1> to vector<2x256xi1>
      %571 = arith.select %570, %568, %234 : vector<2x256xi1>, vector<2x256xf32>
      %572 = vector.broadcast %163 : f32 to vector<2x1xf32>
      %573 = vector.broadcast %212 : f32 to vector<2x1xf32>
      %574 = arith.select %233, %572, %573 : vector<2x1xi1>, vector<2x1xf32>
      %575 = vector.broadcast %574 : vector<2x1xf32> to vector<2x256xf32>
      %576 = arith.mulf %575, %571 : vector<2x256xf32>
      %577 = arith.addf %567, %576 : vector<2x256xf32>
      %578 = vector.shape_cast %102 : vector<1x256xi1> to vector<1x256xi1>
      %579 = vector.broadcast %578 : vector<1x256xi1> to vector<2x256xi1>
      %580 = arith.select %579, %547, %234 : vector<2x256xi1>, vector<2x256xf32>
      %581 = vector.broadcast %164 : f32 to vector<2x1xf32>
      %582 = vector.broadcast %213 : f32 to vector<2x1xf32>
      %583 = arith.select %233, %581, %582 : vector<2x1xi1>, vector<2x1xf32>
      %584 = vector.broadcast %583 : vector<2x1xf32> to vector<2x256xf32>
      %585 = arith.mulf %584, %580 : vector<2x256xf32>
      %586 = arith.addf %577, %585 : vector<2x256xf32>
      %c255_i32_93 = arith.constant 255 : i32
      %587 = tpu.dynamic_rotate %547 by %c255_i32_93 dim 1 : vector<2x256xf32>, i32 -> vector<2x256xf32>
      %588 = vector.shape_cast %112 : vector<1x256xi1> to vector<1x256xi1>
      %589 = vector.broadcast %588 : vector<1x256xi1> to vector<2x256xi1>
      %590 = arith.select %589, %587, %234 : vector<2x256xi1>, vector<2x256xf32>
      %591 = vector.broadcast %165 : f32 to vector<2x1xf32>
      %592 = vector.broadcast %214 : f32 to vector<2x1xf32>
      %593 = arith.select %233, %591, %592 : vector<2x1xi1>, vector<2x1xf32>
      %594 = vector.broadcast %593 : vector<2x1xf32> to vector<2x256xf32>
      %595 = arith.mulf %594, %590 : vector<2x256xf32>
      %596 = arith.addf %586, %595 : vector<2x256xf32>
      %c254_i32_94 = arith.constant 254 : i32
      %597 = tpu.dynamic_rotate %547 by %c254_i32_94 dim 1 : vector<2x256xf32>, i32 -> vector<2x256xf32>
      %598 = vector.shape_cast %122 : vector<1x256xi1> to vector<1x256xi1>
      %599 = vector.broadcast %598 : vector<1x256xi1> to vector<2x256xi1>
      %600 = arith.select %599, %597, %234 : vector<2x256xi1>, vector<2x256xf32>
      %601 = vector.broadcast %166 : f32 to vector<2x1xf32>
      %602 = vector.broadcast %215 : f32 to vector<2x1xf32>
      %603 = arith.select %233, %601, %602 : vector<2x1xi1>, vector<2x1xf32>
      %604 = vector.broadcast %603 : vector<2x1xf32> to vector<2x256xf32>
      %605 = arith.mulf %604, %600 : vector<2x256xf32>
      %606 = arith.addf %596, %605 : vector<2x256xf32>
      %c253_i32_95 = arith.constant 253 : i32
      %607 = tpu.dynamic_rotate %547 by %c253_i32_95 dim 1 : vector<2x256xf32>, i32 -> vector<2x256xf32>
      %608 = vector.shape_cast %132 : vector<1x256xi1> to vector<1x256xi1>
      %609 = vector.broadcast %608 : vector<1x256xi1> to vector<2x256xi1>
      %610 = arith.select %609, %607, %234 : vector<2x256xi1>, vector<2x256xf32>
      %611 = vector.broadcast %167 : f32 to vector<2x1xf32>
      %612 = vector.broadcast %216 : f32 to vector<2x1xf32>
      %613 = arith.select %233, %611, %612 : vector<2x1xi1>, vector<2x1xf32>
      %614 = vector.broadcast %613 : vector<2x1xf32> to vector<2x256xf32>
      %615 = arith.mulf %614, %610 : vector<2x256xf32>
      %616 = arith.addf %606, %615 : vector<2x256xf32>
      %c224_i32 = arith.constant 224 : i32
      %617 = tpu.dynamic_rotate %251 by %c224_i32 dim 1 : vector<2x256xf32>, i32 -> vector<2x256xf32>
      %618 = vector.shape_cast %117 : vector<1x256xi1> to vector<1x256xi1>
      %619 = vector.broadcast %618 : vector<1x256xi1> to vector<2x256xi1>
      %620 = arith.select %619, %617, %234 : vector<2x256xi1>, vector<2x256xf32>
      %c3_i32_96 = arith.constant 3 : i32
      %621 = tpu.dynamic_rotate %620 by %c3_i32_96 dim 1 : vector<2x256xf32>, i32 -> vector<2x256xf32>
      %622 = vector.shape_cast %72 : vector<1x256xi1> to vector<1x256xi1>
      %623 = vector.broadcast %622 : vector<1x256xi1> to vector<2x256xi1>
      %624 = arith.select %623, %621, %234 : vector<2x256xi1>, vector<2x256xf32>
      %625 = vector.broadcast %168 : f32 to vector<2x1xf32>
      %626 = vector.broadcast %217 : f32 to vector<2x1xf32>
      %627 = arith.select %233, %625, %626 : vector<2x1xi1>, vector<2x1xf32>
      %628 = vector.broadcast %627 : vector<2x1xf32> to vector<2x256xf32>
      %629 = arith.mulf %628, %624 : vector<2x256xf32>
      %630 = arith.addf %616, %629 : vector<2x256xf32>
      %c2_i32_97 = arith.constant 2 : i32
      %631 = tpu.dynamic_rotate %620 by %c2_i32_97 dim 1 : vector<2x256xf32>, i32 -> vector<2x256xf32>
      %632 = vector.shape_cast %82 : vector<1x256xi1> to vector<1x256xi1>
      %633 = vector.broadcast %632 : vector<1x256xi1> to vector<2x256xi1>
      %634 = arith.select %633, %631, %234 : vector<2x256xi1>, vector<2x256xf32>
      %635 = vector.broadcast %169 : f32 to vector<2x1xf32>
      %636 = vector.broadcast %218 : f32 to vector<2x1xf32>
      %637 = arith.select %233, %635, %636 : vector<2x1xi1>, vector<2x1xf32>
      %638 = vector.broadcast %637 : vector<2x1xf32> to vector<2x256xf32>
      %639 = arith.mulf %638, %634 : vector<2x256xf32>
      %640 = arith.addf %630, %639 : vector<2x256xf32>
      %c1_i32_98 = arith.constant 1 : i32
      %641 = tpu.dynamic_rotate %620 by %c1_i32_98 dim 1 : vector<2x256xf32>, i32 -> vector<2x256xf32>
      %642 = vector.shape_cast %92 : vector<1x256xi1> to vector<1x256xi1>
      %643 = vector.broadcast %642 : vector<1x256xi1> to vector<2x256xi1>
      %644 = arith.select %643, %641, %234 : vector<2x256xi1>, vector<2x256xf32>
      %645 = vector.broadcast %170 : f32 to vector<2x1xf32>
      %646 = vector.broadcast %219 : f32 to vector<2x1xf32>
      %647 = arith.select %233, %645, %646 : vector<2x1xi1>, vector<2x1xf32>
      %648 = vector.broadcast %647 : vector<2x1xf32> to vector<2x256xf32>
      %649 = arith.mulf %648, %644 : vector<2x256xf32>
      %650 = arith.addf %640, %649 : vector<2x256xf32>
      %651 = vector.shape_cast %102 : vector<1x256xi1> to vector<1x256xi1>
      %652 = vector.broadcast %651 : vector<1x256xi1> to vector<2x256xi1>
      %653 = arith.select %652, %620, %234 : vector<2x256xi1>, vector<2x256xf32>
      %654 = vector.broadcast %171 : f32 to vector<2x1xf32>
      %655 = vector.broadcast %220 : f32 to vector<2x1xf32>
      %656 = arith.select %233, %654, %655 : vector<2x1xi1>, vector<2x1xf32>
      %657 = vector.broadcast %656 : vector<2x1xf32> to vector<2x256xf32>
      %658 = arith.mulf %657, %653 : vector<2x256xf32>
      %659 = arith.addf %650, %658 : vector<2x256xf32>
      %c255_i32_99 = arith.constant 255 : i32
      %660 = tpu.dynamic_rotate %620 by %c255_i32_99 dim 1 : vector<2x256xf32>, i32 -> vector<2x256xf32>
      %661 = vector.shape_cast %112 : vector<1x256xi1> to vector<1x256xi1>
      %662 = vector.broadcast %661 : vector<1x256xi1> to vector<2x256xi1>
      %663 = arith.select %662, %660, %234 : vector<2x256xi1>, vector<2x256xf32>
      %664 = vector.broadcast %172 : f32 to vector<2x1xf32>
      %665 = vector.broadcast %221 : f32 to vector<2x1xf32>
      %666 = arith.select %233, %664, %665 : vector<2x1xi1>, vector<2x1xf32>
      %667 = vector.broadcast %666 : vector<2x1xf32> to vector<2x256xf32>
      %668 = arith.mulf %667, %663 : vector<2x256xf32>
      %669 = arith.addf %659, %668 : vector<2x256xf32>
      %c254_i32_100 = arith.constant 254 : i32
      %670 = tpu.dynamic_rotate %620 by %c254_i32_100 dim 1 : vector<2x256xf32>, i32 -> vector<2x256xf32>
      %671 = vector.shape_cast %122 : vector<1x256xi1> to vector<1x256xi1>
      %672 = vector.broadcast %671 : vector<1x256xi1> to vector<2x256xi1>
      %673 = arith.select %672, %670, %234 : vector<2x256xi1>, vector<2x256xf32>
      %674 = vector.broadcast %173 : f32 to vector<2x1xf32>
      %675 = vector.broadcast %222 : f32 to vector<2x1xf32>
      %676 = arith.select %233, %674, %675 : vector<2x1xi1>, vector<2x1xf32>
      %677 = vector.broadcast %676 : vector<2x1xf32> to vector<2x256xf32>
      %678 = arith.mulf %677, %673 : vector<2x256xf32>
      %679 = arith.addf %669, %678 : vector<2x256xf32>
      %c253_i32_101 = arith.constant 253 : i32
      %680 = tpu.dynamic_rotate %620 by %c253_i32_101 dim 1 : vector<2x256xf32>, i32 -> vector<2x256xf32>
      %681 = vector.shape_cast %132 : vector<1x256xi1> to vector<1x256xi1>
      %682 = vector.broadcast %681 : vector<1x256xi1> to vector<2x256xi1>
      %683 = arith.select %682, %680, %234 : vector<2x256xi1>, vector<2x256xf32>
      %684 = vector.broadcast %174 : f32 to vector<2x1xf32>
      %685 = vector.broadcast %223 : f32 to vector<2x1xf32>
      %686 = arith.select %233, %684, %685 : vector<2x1xi1>, vector<2x1xf32>
      %687 = vector.broadcast %686 : vector<2x1xf32> to vector<2x256xf32>
      %688 = arith.mulf %687, %683 : vector<2x256xf32>
      %689 = arith.addf %679, %688 : vector<2x256xf32>
      %c208_i32 = arith.constant 208 : i32
      %690 = tpu.dynamic_rotate %251 by %c208_i32 dim 1 : vector<2x256xf32>, i32 -> vector<2x256xf32>
      %691 = vector.shape_cast %127 : vector<1x256xi1> to vector<1x256xi1>
      %692 = vector.broadcast %691 : vector<1x256xi1> to vector<2x256xi1>
      %693 = arith.select %692, %690, %234 : vector<2x256xi1>, vector<2x256xf32>
      %c3_i32_102 = arith.constant 3 : i32
      %694 = tpu.dynamic_rotate %693 by %c3_i32_102 dim 1 : vector<2x256xf32>, i32 -> vector<2x256xf32>
      %695 = vector.shape_cast %72 : vector<1x256xi1> to vector<1x256xi1>
      %696 = vector.broadcast %695 : vector<1x256xi1> to vector<2x256xi1>
      %697 = arith.select %696, %694, %234 : vector<2x256xi1>, vector<2x256xf32>
      %698 = vector.broadcast %175 : f32 to vector<2x1xf32>
      %699 = vector.broadcast %224 : f32 to vector<2x1xf32>
      %700 = arith.select %233, %698, %699 : vector<2x1xi1>, vector<2x1xf32>
      %701 = vector.broadcast %700 : vector<2x1xf32> to vector<2x256xf32>
      %702 = arith.mulf %701, %697 : vector<2x256xf32>
      %703 = arith.addf %689, %702 : vector<2x256xf32>
      %c2_i32_103 = arith.constant 2 : i32
      %704 = tpu.dynamic_rotate %693 by %c2_i32_103 dim 1 : vector<2x256xf32>, i32 -> vector<2x256xf32>
      %705 = vector.shape_cast %82 : vector<1x256xi1> to vector<1x256xi1>
      %706 = vector.broadcast %705 : vector<1x256xi1> to vector<2x256xi1>
      %707 = arith.select %706, %704, %234 : vector<2x256xi1>, vector<2x256xf32>
      %708 = vector.broadcast %176 : f32 to vector<2x1xf32>
      %709 = vector.broadcast %225 : f32 to vector<2x1xf32>
      %710 = arith.select %233, %708, %709 : vector<2x1xi1>, vector<2x1xf32>
      %711 = vector.broadcast %710 : vector<2x1xf32> to vector<2x256xf32>
      %712 = arith.mulf %711, %707 : vector<2x256xf32>
      %713 = arith.addf %703, %712 : vector<2x256xf32>
      %c1_i32_104 = arith.constant 1 : i32
      %714 = tpu.dynamic_rotate %693 by %c1_i32_104 dim 1 : vector<2x256xf32>, i32 -> vector<2x256xf32>
      %715 = vector.shape_cast %92 : vector<1x256xi1> to vector<1x256xi1>
      %716 = vector.broadcast %715 : vector<1x256xi1> to vector<2x256xi1>
      %717 = arith.select %716, %714, %234 : vector<2x256xi1>, vector<2x256xf32>
      %718 = vector.broadcast %177 : f32 to vector<2x1xf32>
      %719 = vector.broadcast %226 : f32 to vector<2x1xf32>
      %720 = arith.select %233, %718, %719 : vector<2x1xi1>, vector<2x1xf32>
      %721 = vector.broadcast %720 : vector<2x1xf32> to vector<2x256xf32>
      %722 = arith.mulf %721, %717 : vector<2x256xf32>
      %723 = arith.addf %713, %722 : vector<2x256xf32>
      %724 = vector.shape_cast %102 : vector<1x256xi1> to vector<1x256xi1>
      %725 = vector.broadcast %724 : vector<1x256xi1> to vector<2x256xi1>
      %726 = arith.select %725, %693, %234 : vector<2x256xi1>, vector<2x256xf32>
      %727 = vector.broadcast %178 : f32 to vector<2x1xf32>
      %728 = vector.broadcast %227 : f32 to vector<2x1xf32>
      %729 = arith.select %233, %727, %728 : vector<2x1xi1>, vector<2x1xf32>
      %730 = vector.broadcast %729 : vector<2x1xf32> to vector<2x256xf32>
      %731 = arith.mulf %730, %726 : vector<2x256xf32>
      %732 = arith.addf %723, %731 : vector<2x256xf32>
      %c255_i32_105 = arith.constant 255 : i32
      %733 = tpu.dynamic_rotate %693 by %c255_i32_105 dim 1 : vector<2x256xf32>, i32 -> vector<2x256xf32>
      %734 = vector.shape_cast %112 : vector<1x256xi1> to vector<1x256xi1>
      %735 = vector.broadcast %734 : vector<1x256xi1> to vector<2x256xi1>
      %736 = arith.select %735, %733, %234 : vector<2x256xi1>, vector<2x256xf32>
      %737 = vector.broadcast %179 : f32 to vector<2x1xf32>
      %738 = vector.broadcast %228 : f32 to vector<2x1xf32>
      %739 = arith.select %233, %737, %738 : vector<2x1xi1>, vector<2x1xf32>
      %740 = vector.broadcast %739 : vector<2x1xf32> to vector<2x256xf32>
      %741 = arith.mulf %740, %736 : vector<2x256xf32>
      %742 = arith.addf %732, %741 : vector<2x256xf32>
      %c254_i32_106 = arith.constant 254 : i32
      %743 = tpu.dynamic_rotate %693 by %c254_i32_106 dim 1 : vector<2x256xf32>, i32 -> vector<2x256xf32>
      %744 = vector.shape_cast %122 : vector<1x256xi1> to vector<1x256xi1>
      %745 = vector.broadcast %744 : vector<1x256xi1> to vector<2x256xi1>
      %746 = arith.select %745, %743, %234 : vector<2x256xi1>, vector<2x256xf32>
      %747 = vector.broadcast %180 : f32 to vector<2x1xf32>
      %748 = vector.broadcast %229 : f32 to vector<2x1xf32>
      %749 = arith.select %233, %747, %748 : vector<2x1xi1>, vector<2x1xf32>
      %750 = vector.broadcast %749 : vector<2x1xf32> to vector<2x256xf32>
      %751 = arith.mulf %750, %746 : vector<2x256xf32>
      %752 = arith.addf %742, %751 : vector<2x256xf32>
      %c253_i32_107 = arith.constant 253 : i32
      %753 = tpu.dynamic_rotate %693 by %c253_i32_107 dim 1 : vector<2x256xf32>, i32 -> vector<2x256xf32>
      %754 = vector.shape_cast %132 : vector<1x256xi1> to vector<1x256xi1>
      %755 = vector.broadcast %754 : vector<1x256xi1> to vector<2x256xi1>
      %756 = arith.select %755, %753, %234 : vector<2x256xi1>, vector<2x256xf32>
      %757 = vector.broadcast %181 : f32 to vector<2x1xf32>
      %758 = vector.broadcast %230 : f32 to vector<2x1xf32>
      %759 = arith.select %233, %757, %758 : vector<2x1xi1>, vector<2x1xf32>
      %760 = vector.broadcast %759 : vector<2x1xf32> to vector<2x256xf32>
      %761 = arith.mulf %760, %756 : vector<2x256xf32>
      %762 = arith.addf %752, %761 : vector<2x256xf32>
      %cst_108 = arith.constant dense<0.000000e+00> : vector<256xf32>
      %763 = vector.multi_reduction <add>, %762, %cst_108 [0] : vector<2x256xf32> to vector<256xf32>
      %764 = vector.shape_cast %763 : vector<256xf32> to vector<1x256xf32>
      %765 = arith.negf %764 : vector<1x256xf32>
      %766 = math.exp %765 : vector<1x256xf32>
      %cst_109 = arith.constant 1.000000e+00 : f32
      %767 = vector.broadcast %cst_109 : f32 to vector<1x256xf32>
      %768 = arith.addf %767, %766 : vector<1x256xf32>
      %769 = arith.divf %767, %768 : vector<1x256xf32>
      %c0_110 = arith.constant 0 : index
      %c0_111 = arith.constant 0 : index
      %c0_112 = arith.constant 0 : index
      %770 = vector.load %arg5[%c0_110, %c0_111, %c0_112] : memref<2x1x256xf32, #tpu.memory_space<vmem>>, vector<1x1x256xf32>
      %771 = vector.shape_cast %770 : vector<1x1x256xf32> to vector<1x256xf32>
      %772 = vector.shape_cast %769 : vector<1x256xf32> to vector<1x1x256xf32>
      tpu.vector_store %arg5[%c0_110, %c0_111, %c0_112], %772 {strides = array<i32>} : memref<2x1x256xf32, #tpu.memory_space<vmem>>, vector<1x1x256xf32>,
      %c1_113 = arith.constant 1 : index
      %c0_114 = arith.constant 0 : index
      %c0_115 = arith.constant 0 : index
      %773 = vector.load %arg6[%c1_113, %c0_114, %c0_115] : memref<2x8x256xf32, #tpu.memory_space<vmem>>, vector<1x8x256xf32>
      %774 = vector.shape_cast %773 : vector<1x8x256xf32> to vector<8x256xf32>
      %cst_116 = arith.constant dense<0.000000e+00> : vector<256xf32>
      %775 = vector.multi_reduction <add>, %774, %cst_116 [0] : vector<8x256xf32> to vector<256xf32>
      %776 = vector.shape_cast %775 : vector<256xf32> to vector<1x256xf32>
      %cst_117 = arith.constant 2.500000e-01 : f32
      %777 = vector.broadcast %cst_117 : f32 to vector<1x256xf32>
      %778 = arith.mulf %776, %777 : vector<1x256xf32>
      %c1_118 = arith.constant 1 : index
      %c0_119 = arith.constant 0 : index
      %c0_120 = arith.constant 0 : index
      %779 = vector.load %arg7[%c1_118, %c0_119, %c0_120] : memref<2x8x256xf32, #tpu.memory_space<vmem>>, vector<1x8x256xf32>
      %780 = vector.shape_cast %779 : vector<1x8x256xf32> to vector<8x256xf32>
      %cst_121 = arith.constant dense<0xFF800000> : vector<256xf32>
      %781 = vector.multi_reduction <maximumf>, %780, %cst_121 [0] : vector<8x256xf32> to vector<256xf32>
      %782 = vector.shape_cast %781 : vector<256xf32> to vector<1x256xf32>
      %783 = vector.shape_cast %233 : vector<2x1xi1> to vector<2x1xi1>
      %784 = vector.broadcast %783 : vector<2x1xi1> to vector<2x256xi1>
      %785 = vector.shape_cast %778 : vector<1x256xf32> to vector<1x256xf32>
      %786 = vector.broadcast %785 : vector<1x256xf32> to vector<2x256xf32>
      %787 = vector.shape_cast %782 : vector<1x256xf32> to vector<1x256xf32>
      %788 = vector.broadcast %787 : vector<1x256xf32> to vector<2x256xf32>
      %789 = arith.select %784, %786, %788 : vector<2x256xi1>, vector<2x256xf32>
      %cst_122 = arith.constant 0.000000e+00 : f32
      %790 = vector.broadcast %cst_122 : f32 to vector<2x256xf32>
      %c48_i32_123 = arith.constant 48 : i32
      %791 = tpu.dynamic_rotate %789 by %c48_i32_123 dim 1 : vector<2x256xf32>, i32 -> vector<2x256xf32>
      %792 = vector.shape_cast %67 : vector<1x256xi1> to vector<1x256xi1>
      %793 = vector.broadcast %792 : vector<1x256xi1> to vector<2x256xi1>
      %794 = arith.select %793, %791, %234 : vector<2x256xi1>, vector<2x256xf32>
      %c3_i32_124 = arith.constant 3 : i32
      %795 = tpu.dynamic_rotate %794 by %c3_i32_124 dim 1 : vector<2x256xf32>, i32 -> vector<2x256xf32>
      %796 = vector.shape_cast %72 : vector<1x256xi1> to vector<1x256xi1>
      %797 = vector.broadcast %796 : vector<1x256xi1> to vector<2x256xi1>
      %798 = arith.select %797, %795, %234 : vector<2x256xi1>, vector<2x256xf32>
      %799 = vector.broadcast %133 : f32 to vector<2x1xf32>
      %800 = vector.broadcast %182 : f32 to vector<2x1xf32>
      %801 = arith.select %233, %799, %800 : vector<2x1xi1>, vector<2x1xf32>
      %802 = vector.broadcast %801 : vector<2x1xf32> to vector<2x256xf32>
      %803 = arith.mulf %802, %798 : vector<2x256xf32>
      %804 = arith.addf %790, %803 : vector<2x256xf32>
      %c2_i32_125 = arith.constant 2 : i32
      %805 = tpu.dynamic_rotate %794 by %c2_i32_125 dim 1 : vector<2x256xf32>, i32 -> vector<2x256xf32>
      %806 = vector.shape_cast %82 : vector<1x256xi1> to vector<1x256xi1>
      %807 = vector.broadcast %806 : vector<1x256xi1> to vector<2x256xi1>
      %808 = arith.select %807, %805, %234 : vector<2x256xi1>, vector<2x256xf32>
      %809 = vector.broadcast %134 : f32 to vector<2x1xf32>
      %810 = vector.broadcast %183 : f32 to vector<2x1xf32>
      %811 = arith.select %233, %809, %810 : vector<2x1xi1>, vector<2x1xf32>
      %812 = vector.broadcast %811 : vector<2x1xf32> to vector<2x256xf32>
      %813 = arith.mulf %812, %808 : vector<2x256xf32>
      %814 = arith.addf %804, %813 : vector<2x256xf32>
      %c1_i32_126 = arith.constant 1 : i32
      %815 = tpu.dynamic_rotate %794 by %c1_i32_126 dim 1 : vector<2x256xf32>, i32 -> vector<2x256xf32>
      %816 = vector.shape_cast %92 : vector<1x256xi1> to vector<1x256xi1>
      %817 = vector.broadcast %816 : vector<1x256xi1> to vector<2x256xi1>
      %818 = arith.select %817, %815, %234 : vector<2x256xi1>, vector<2x256xf32>
      %819 = vector.broadcast %135 : f32 to vector<2x1xf32>
      %820 = vector.broadcast %184 : f32 to vector<2x1xf32>
      %821 = arith.select %233, %819, %820 : vector<2x1xi1>, vector<2x1xf32>
      %822 = vector.broadcast %821 : vector<2x1xf32> to vector<2x256xf32>
      %823 = arith.mulf %822, %818 : vector<2x256xf32>
      %824 = arith.addf %814, %823 : vector<2x256xf32>
      %825 = vector.shape_cast %102 : vector<1x256xi1> to vector<1x256xi1>
      %826 = vector.broadcast %825 : vector<1x256xi1> to vector<2x256xi1>
      %827 = arith.select %826, %794, %234 : vector<2x256xi1>, vector<2x256xf32>
      %828 = vector.broadcast %136 : f32 to vector<2x1xf32>
      %829 = vector.broadcast %185 : f32 to vector<2x1xf32>
      %830 = arith.select %233, %828, %829 : vector<2x1xi1>, vector<2x1xf32>
      %831 = vector.broadcast %830 : vector<2x1xf32> to vector<2x256xf32>
      %832 = arith.mulf %831, %827 : vector<2x256xf32>
      %833 = arith.addf %824, %832 : vector<2x256xf32>
      %c255_i32_127 = arith.constant 255 : i32
      %834 = tpu.dynamic_rotate %794 by %c255_i32_127 dim 1 : vector<2x256xf32>, i32 -> vector<2x256xf32>
      %835 = vector.shape_cast %112 : vector<1x256xi1> to vector<1x256xi1>
      %836 = vector.broadcast %835 : vector<1x256xi1> to vector<2x256xi1>
      %837 = arith.select %836, %834, %234 : vector<2x256xi1>, vector<2x256xf32>
      %838 = vector.broadcast %137 : f32 to vector<2x1xf32>
      %839 = vector.broadcast %186 : f32 to vector<2x1xf32>
      %840 = arith.select %233, %838, %839 : vector<2x1xi1>, vector<2x1xf32>
      %841 = vector.broadcast %840 : vector<2x1xf32> to vector<2x256xf32>
      %842 = arith.mulf %841, %837 : vector<2x256xf32>
      %843 = arith.addf %833, %842 : vector<2x256xf32>
      %c254_i32_128 = arith.constant 254 : i32
      %844 = tpu.dynamic_rotate %794 by %c254_i32_128 dim 1 : vector<2x256xf32>, i32 -> vector<2x256xf32>
      %845 = vector.shape_cast %122 : vector<1x256xi1> to vector<1x256xi1>
      %846 = vector.broadcast %845 : vector<1x256xi1> to vector<2x256xi1>
      %847 = arith.select %846, %844, %234 : vector<2x256xi1>, vector<2x256xf32>
      %848 = vector.broadcast %138 : f32 to vector<2x1xf32>
      %849 = vector.broadcast %187 : f32 to vector<2x1xf32>
      %850 = arith.select %233, %848, %849 : vector<2x1xi1>, vector<2x1xf32>
      %851 = vector.broadcast %850 : vector<2x1xf32> to vector<2x256xf32>
      %852 = arith.mulf %851, %847 : vector<2x256xf32>
      %853 = arith.addf %843, %852 : vector<2x256xf32>
      %c253_i32_129 = arith.constant 253 : i32
      %854 = tpu.dynamic_rotate %794 by %c253_i32_129 dim 1 : vector<2x256xf32>, i32 -> vector<2x256xf32>
      %855 = vector.shape_cast %132 : vector<1x256xi1> to vector<1x256xi1>
      %856 = vector.broadcast %855 : vector<1x256xi1> to vector<2x256xi1>
      %857 = arith.select %856, %854, %234 : vector<2x256xi1>, vector<2x256xf32>
      %858 = vector.broadcast %139 : f32 to vector<2x1xf32>
      %859 = vector.broadcast %188 : f32 to vector<2x1xf32>
      %860 = arith.select %233, %858, %859 : vector<2x1xi1>, vector<2x1xf32>
      %861 = vector.broadcast %860 : vector<2x1xf32> to vector<2x256xf32>
      %862 = arith.mulf %861, %857 : vector<2x256xf32>
      %863 = arith.addf %853, %862 : vector<2x256xf32>
      %c32_i32_130 = arith.constant 32 : i32
      %864 = tpu.dynamic_rotate %789 by %c32_i32_130 dim 1 : vector<2x256xf32>, i32 -> vector<2x256xf32>
      %865 = vector.shape_cast %77 : vector<1x256xi1> to vector<1x256xi1>
      %866 = vector.broadcast %865 : vector<1x256xi1> to vector<2x256xi1>
      %867 = arith.select %866, %864, %234 : vector<2x256xi1>, vector<2x256xf32>
      %c3_i32_131 = arith.constant 3 : i32
      %868 = tpu.dynamic_rotate %867 by %c3_i32_131 dim 1 : vector<2x256xf32>, i32 -> vector<2x256xf32>
      %869 = vector.shape_cast %72 : vector<1x256xi1> to vector<1x256xi1>
      %870 = vector.broadcast %869 : vector<1x256xi1> to vector<2x256xi1>
      %871 = arith.select %870, %868, %234 : vector<2x256xi1>, vector<2x256xf32>
      %872 = vector.broadcast %140 : f32 to vector<2x1xf32>
      %873 = vector.broadcast %189 : f32 to vector<2x1xf32>
      %874 = arith.select %233, %872, %873 : vector<2x1xi1>, vector<2x1xf32>
      %875 = vector.broadcast %874 : vector<2x1xf32> to vector<2x256xf32>
      %876 = arith.mulf %875, %871 : vector<2x256xf32>
      %877 = arith.addf %863, %876 : vector<2x256xf32>
      %c2_i32_132 = arith.constant 2 : i32
      %878 = tpu.dynamic_rotate %867 by %c2_i32_132 dim 1 : vector<2x256xf32>, i32 -> vector<2x256xf32>
      %879 = vector.shape_cast %82 : vector<1x256xi1> to vector<1x256xi1>
      %880 = vector.broadcast %879 : vector<1x256xi1> to vector<2x256xi1>
      %881 = arith.select %880, %878, %234 : vector<2x256xi1>, vector<2x256xf32>
      %882 = vector.broadcast %141 : f32 to vector<2x1xf32>
      %883 = vector.broadcast %190 : f32 to vector<2x1xf32>
      %884 = arith.select %233, %882, %883 : vector<2x1xi1>, vector<2x1xf32>
      %885 = vector.broadcast %884 : vector<2x1xf32> to vector<2x256xf32>
      %886 = arith.mulf %885, %881 : vector<2x256xf32>
      %887 = arith.addf %877, %886 : vector<2x256xf32>
      %c1_i32_133 = arith.constant 1 : i32
      %888 = tpu.dynamic_rotate %867 by %c1_i32_133 dim 1 : vector<2x256xf32>, i32 -> vector<2x256xf32>
      %889 = vector.shape_cast %92 : vector<1x256xi1> to vector<1x256xi1>
      %890 = vector.broadcast %889 : vector<1x256xi1> to vector<2x256xi1>
      %891 = arith.select %890, %888, %234 : vector<2x256xi1>, vector<2x256xf32>
      %892 = vector.broadcast %142 : f32 to vector<2x1xf32>
      %893 = vector.broadcast %191 : f32 to vector<2x1xf32>
      %894 = arith.select %233, %892, %893 : vector<2x1xi1>, vector<2x1xf32>
      %895 = vector.broadcast %894 : vector<2x1xf32> to vector<2x256xf32>
      %896 = arith.mulf %895, %891 : vector<2x256xf32>
      %897 = arith.addf %887, %896 : vector<2x256xf32>
      %898 = vector.shape_cast %102 : vector<1x256xi1> to vector<1x256xi1>
      %899 = vector.broadcast %898 : vector<1x256xi1> to vector<2x256xi1>
      %900 = arith.select %899, %867, %234 : vector<2x256xi1>, vector<2x256xf32>
      %901 = vector.broadcast %143 : f32 to vector<2x1xf32>
      %902 = vector.broadcast %192 : f32 to vector<2x1xf32>
      %903 = arith.select %233, %901, %902 : vector<2x1xi1>, vector<2x1xf32>
      %904 = vector.broadcast %903 : vector<2x1xf32> to vector<2x256xf32>
      %905 = arith.mulf %904, %900 : vector<2x256xf32>
      %906 = arith.addf %897, %905 : vector<2x256xf32>
      %c255_i32_134 = arith.constant 255 : i32
      %907 = tpu.dynamic_rotate %867 by %c255_i32_134 dim 1 : vector<2x256xf32>, i32 -> vector<2x256xf32>
      %908 = vector.shape_cast %112 : vector<1x256xi1> to vector<1x256xi1>
      %909 = vector.broadcast %908 : vector<1x256xi1> to vector<2x256xi1>
      %910 = arith.select %909, %907, %234 : vector<2x256xi1>, vector<2x256xf32>
      %911 = vector.broadcast %144 : f32 to vector<2x1xf32>
      %912 = vector.broadcast %193 : f32 to vector<2x1xf32>
      %913 = arith.select %233, %911, %912 : vector<2x1xi1>, vector<2x1xf32>
      %914 = vector.broadcast %913 : vector<2x1xf32> to vector<2x256xf32>
      %915 = arith.mulf %914, %910 : vector<2x256xf32>
      %916 = arith.addf %906, %915 : vector<2x256xf32>
      %c254_i32_135 = arith.constant 254 : i32
      %917 = tpu.dynamic_rotate %867 by %c254_i32_135 dim 1 : vector<2x256xf32>, i32 -> vector<2x256xf32>
      %918 = vector.shape_cast %122 : vector<1x256xi1> to vector<1x256xi1>
      %919 = vector.broadcast %918 : vector<1x256xi1> to vector<2x256xi1>
      %920 = arith.select %919, %917, %234 : vector<2x256xi1>, vector<2x256xf32>
      %921 = vector.broadcast %145 : f32 to vector<2x1xf32>
      %922 = vector.broadcast %194 : f32 to vector<2x1xf32>
      %923 = arith.select %233, %921, %922 : vector<2x1xi1>, vector<2x1xf32>
      %924 = vector.broadcast %923 : vector<2x1xf32> to vector<2x256xf32>
      %925 = arith.mulf %924, %920 : vector<2x256xf32>
      %926 = arith.addf %916, %925 : vector<2x256xf32>
      %c253_i32_136 = arith.constant 253 : i32
      %927 = tpu.dynamic_rotate %867 by %c253_i32_136 dim 1 : vector<2x256xf32>, i32 -> vector<2x256xf32>
      %928 = vector.shape_cast %132 : vector<1x256xi1> to vector<1x256xi1>
      %929 = vector.broadcast %928 : vector<1x256xi1> to vector<2x256xi1>
      %930 = arith.select %929, %927, %234 : vector<2x256xi1>, vector<2x256xf32>
      %931 = vector.broadcast %146 : f32 to vector<2x1xf32>
      %932 = vector.broadcast %195 : f32 to vector<2x1xf32>
      %933 = arith.select %233, %931, %932 : vector<2x1xi1>, vector<2x1xf32>
      %934 = vector.broadcast %933 : vector<2x1xf32> to vector<2x256xf32>
      %935 = arith.mulf %934, %930 : vector<2x256xf32>
      %936 = arith.addf %926, %935 : vector<2x256xf32>
      %c16_i32_137 = arith.constant 16 : i32
      %937 = tpu.dynamic_rotate %789 by %c16_i32_137 dim 1 : vector<2x256xf32>, i32 -> vector<2x256xf32>
      %938 = vector.shape_cast %87 : vector<1x256xi1> to vector<1x256xi1>
      %939 = vector.broadcast %938 : vector<1x256xi1> to vector<2x256xi1>
      %940 = arith.select %939, %937, %234 : vector<2x256xi1>, vector<2x256xf32>
      %c3_i32_138 = arith.constant 3 : i32
      %941 = tpu.dynamic_rotate %940 by %c3_i32_138 dim 1 : vector<2x256xf32>, i32 -> vector<2x256xf32>
      %942 = vector.shape_cast %72 : vector<1x256xi1> to vector<1x256xi1>
      %943 = vector.broadcast %942 : vector<1x256xi1> to vector<2x256xi1>
      %944 = arith.select %943, %941, %234 : vector<2x256xi1>, vector<2x256xf32>
      %945 = vector.broadcast %147 : f32 to vector<2x1xf32>
      %946 = vector.broadcast %196 : f32 to vector<2x1xf32>
      %947 = arith.select %233, %945, %946 : vector<2x1xi1>, vector<2x1xf32>
      %948 = vector.broadcast %947 : vector<2x1xf32> to vector<2x256xf32>
      %949 = arith.mulf %948, %944 : vector<2x256xf32>
      %950 = arith.addf %936, %949 : vector<2x256xf32>
      %c2_i32_139 = arith.constant 2 : i32
      %951 = tpu.dynamic_rotate %940 by %c2_i32_139 dim 1 : vector<2x256xf32>, i32 -> vector<2x256xf32>
      %952 = vector.shape_cast %82 : vector<1x256xi1> to vector<1x256xi1>
      %953 = vector.broadcast %952 : vector<1x256xi1> to vector<2x256xi1>
      %954 = arith.select %953, %951, %234 : vector<2x256xi1>, vector<2x256xf32>
      %955 = vector.broadcast %148 : f32 to vector<2x1xf32>
      %956 = vector.broadcast %197 : f32 to vector<2x1xf32>
      %957 = arith.select %233, %955, %956 : vector<2x1xi1>, vector<2x1xf32>
      %958 = vector.broadcast %957 : vector<2x1xf32> to vector<2x256xf32>
      %959 = arith.mulf %958, %954 : vector<2x256xf32>
      %960 = arith.addf %950, %959 : vector<2x256xf32>
      %c1_i32_140 = arith.constant 1 : i32
      %961 = tpu.dynamic_rotate %940 by %c1_i32_140 dim 1 : vector<2x256xf32>, i32 -> vector<2x256xf32>
      %962 = vector.shape_cast %92 : vector<1x256xi1> to vector<1x256xi1>
      %963 = vector.broadcast %962 : vector<1x256xi1> to vector<2x256xi1>
      %964 = arith.select %963, %961, %234 : vector<2x256xi1>, vector<2x256xf32>
      %965 = vector.broadcast %149 : f32 to vector<2x1xf32>
      %966 = vector.broadcast %198 : f32 to vector<2x1xf32>
      %967 = arith.select %233, %965, %966 : vector<2x1xi1>, vector<2x1xf32>
      %968 = vector.broadcast %967 : vector<2x1xf32> to vector<2x256xf32>
      %969 = arith.mulf %968, %964 : vector<2x256xf32>
      %970 = arith.addf %960, %969 : vector<2x256xf32>
      %971 = vector.shape_cast %102 : vector<1x256xi1> to vector<1x256xi1>
      %972 = vector.broadcast %971 : vector<1x256xi1> to vector<2x256xi1>
      %973 = arith.select %972, %940, %234 : vector<2x256xi1>, vector<2x256xf32>
      %974 = vector.broadcast %150 : f32 to vector<2x1xf32>
      %975 = vector.broadcast %199 : f32 to vector<2x1xf32>
      %976 = arith.select %233, %974, %975 : vector<2x1xi1>, vector<2x1xf32>
      %977 = vector.broadcast %976 : vector<2x1xf32> to vector<2x256xf32>
      %978 = arith.mulf %977, %973 : vector<2x256xf32>
      %979 = arith.addf %970, %978 : vector<2x256xf32>
      %c255_i32_141 = arith.constant 255 : i32
      %980 = tpu.dynamic_rotate %940 by %c255_i32_141 dim 1 : vector<2x256xf32>, i32 -> vector<2x256xf32>
      %981 = vector.shape_cast %112 : vector<1x256xi1> to vector<1x256xi1>
      %982 = vector.broadcast %981 : vector<1x256xi1> to vector<2x256xi1>
      %983 = arith.select %982, %980, %234 : vector<2x256xi1>, vector<2x256xf32>
      %984 = vector.broadcast %151 : f32 to vector<2x1xf32>
      %985 = vector.broadcast %200 : f32 to vector<2x1xf32>
      %986 = arith.select %233, %984, %985 : vector<2x1xi1>, vector<2x1xf32>
      %987 = vector.broadcast %986 : vector<2x1xf32> to vector<2x256xf32>
      %988 = arith.mulf %987, %983 : vector<2x256xf32>
      %989 = arith.addf %979, %988 : vector<2x256xf32>
      %c254_i32_142 = arith.constant 254 : i32
      %990 = tpu.dynamic_rotate %940 by %c254_i32_142 dim 1 : vector<2x256xf32>, i32 -> vector<2x256xf32>
      %991 = vector.shape_cast %122 : vector<1x256xi1> to vector<1x256xi1>
      %992 = vector.broadcast %991 : vector<1x256xi1> to vector<2x256xi1>
      %993 = arith.select %992, %990, %234 : vector<2x256xi1>, vector<2x256xf32>
      %994 = vector.broadcast %152 : f32 to vector<2x1xf32>
      %995 = vector.broadcast %201 : f32 to vector<2x1xf32>
      %996 = arith.select %233, %994, %995 : vector<2x1xi1>, vector<2x1xf32>
      %997 = vector.broadcast %996 : vector<2x1xf32> to vector<2x256xf32>
      %998 = arith.mulf %997, %993 : vector<2x256xf32>
      %999 = arith.addf %989, %998 : vector<2x256xf32>
      %c253_i32_143 = arith.constant 253 : i32
      %1000 = tpu.dynamic_rotate %940 by %c253_i32_143 dim 1 : vector<2x256xf32>, i32 -> vector<2x256xf32>
      %1001 = vector.shape_cast %132 : vector<1x256xi1> to vector<1x256xi1>
      %1002 = vector.broadcast %1001 : vector<1x256xi1> to vector<2x256xi1>
      %1003 = arith.select %1002, %1000, %234 : vector<2x256xi1>, vector<2x256xf32>
      %1004 = vector.broadcast %153 : f32 to vector<2x1xf32>
      %1005 = vector.broadcast %202 : f32 to vector<2x1xf32>
      %1006 = arith.select %233, %1004, %1005 : vector<2x1xi1>, vector<2x1xf32>
      %1007 = vector.broadcast %1006 : vector<2x1xf32> to vector<2x256xf32>
      %1008 = arith.mulf %1007, %1003 : vector<2x256xf32>
      %1009 = arith.addf %999, %1008 : vector<2x256xf32>
      %1010 = vector.shape_cast %97 : vector<1x256xi1> to vector<1x256xi1>
      %1011 = vector.broadcast %1010 : vector<1x256xi1> to vector<2x256xi1>
      %1012 = arith.select %1011, %789, %234 : vector<2x256xi1>, vector<2x256xf32>
      %c3_i32_144 = arith.constant 3 : i32
      %1013 = tpu.dynamic_rotate %1012 by %c3_i32_144 dim 1 : vector<2x256xf32>, i32 -> vector<2x256xf32>
      %1014 = vector.shape_cast %72 : vector<1x256xi1> to vector<1x256xi1>
      %1015 = vector.broadcast %1014 : vector<1x256xi1> to vector<2x256xi1>
      %1016 = arith.select %1015, %1013, %234 : vector<2x256xi1>, vector<2x256xf32>
      %1017 = vector.broadcast %154 : f32 to vector<2x1xf32>
      %1018 = vector.broadcast %203 : f32 to vector<2x1xf32>
      %1019 = arith.select %233, %1017, %1018 : vector<2x1xi1>, vector<2x1xf32>
      %1020 = vector.broadcast %1019 : vector<2x1xf32> to vector<2x256xf32>
      %1021 = arith.mulf %1020, %1016 : vector<2x256xf32>
      %1022 = arith.addf %1009, %1021 : vector<2x256xf32>
      %c2_i32_145 = arith.constant 2 : i32
      %1023 = tpu.dynamic_rotate %1012 by %c2_i32_145 dim 1 : vector<2x256xf32>, i32 -> vector<2x256xf32>
      %1024 = vector.shape_cast %82 : vector<1x256xi1> to vector<1x256xi1>
      %1025 = vector.broadcast %1024 : vector<1x256xi1> to vector<2x256xi1>
      %1026 = arith.select %1025, %1023, %234 : vector<2x256xi1>, vector<2x256xf32>
      %1027 = vector.broadcast %155 : f32 to vector<2x1xf32>
      %1028 = vector.broadcast %204 : f32 to vector<2x1xf32>
      %1029 = arith.select %233, %1027, %1028 : vector<2x1xi1>, vector<2x1xf32>
      %1030 = vector.broadcast %1029 : vector<2x1xf32> to vector<2x256xf32>
      %1031 = arith.mulf %1030, %1026 : vector<2x256xf32>
      %1032 = arith.addf %1022, %1031 : vector<2x256xf32>
      %c1_i32_146 = arith.constant 1 : i32
      %1033 = tpu.dynamic_rotate %1012 by %c1_i32_146 dim 1 : vector<2x256xf32>, i32 -> vector<2x256xf32>
      %1034 = vector.shape_cast %92 : vector<1x256xi1> to vector<1x256xi1>
      %1035 = vector.broadcast %1034 : vector<1x256xi1> to vector<2x256xi1>
      %1036 = arith.select %1035, %1033, %234 : vector<2x256xi1>, vector<2x256xf32>
      %1037 = vector.broadcast %156 : f32 to vector<2x1xf32>
      %1038 = vector.broadcast %205 : f32 to vector<2x1xf32>
      %1039 = arith.select %233, %1037, %1038 : vector<2x1xi1>, vector<2x1xf32>
      %1040 = vector.broadcast %1039 : vector<2x1xf32> to vector<2x256xf32>
      %1041 = arith.mulf %1040, %1036 : vector<2x256xf32>
      %1042 = arith.addf %1032, %1041 : vector<2x256xf32>
      %1043 = vector.shape_cast %102 : vector<1x256xi1> to vector<1x256xi1>
      %1044 = vector.broadcast %1043 : vector<1x256xi1> to vector<2x256xi1>
      %1045 = arith.select %1044, %1012, %234 : vector<2x256xi1>, vector<2x256xf32>
      %1046 = vector.broadcast %157 : f32 to vector<2x1xf32>
      %1047 = vector.broadcast %206 : f32 to vector<2x1xf32>
      %1048 = arith.select %233, %1046, %1047 : vector<2x1xi1>, vector<2x1xf32>
      %1049 = vector.broadcast %1048 : vector<2x1xf32> to vector<2x256xf32>
      %1050 = arith.mulf %1049, %1045 : vector<2x256xf32>
      %1051 = arith.addf %1042, %1050 : vector<2x256xf32>
      %c255_i32_147 = arith.constant 255 : i32
      %1052 = tpu.dynamic_rotate %1012 by %c255_i32_147 dim 1 : vector<2x256xf32>, i32 -> vector<2x256xf32>
      %1053 = vector.shape_cast %112 : vector<1x256xi1> to vector<1x256xi1>
      %1054 = vector.broadcast %1053 : vector<1x256xi1> to vector<2x256xi1>
      %1055 = arith.select %1054, %1052, %234 : vector<2x256xi1>, vector<2x256xf32>
      %1056 = vector.broadcast %158 : f32 to vector<2x1xf32>
      %1057 = vector.broadcast %207 : f32 to vector<2x1xf32>
      %1058 = arith.select %233, %1056, %1057 : vector<2x1xi1>, vector<2x1xf32>
      %1059 = vector.broadcast %1058 : vector<2x1xf32> to vector<2x256xf32>
      %1060 = arith.mulf %1059, %1055 : vector<2x256xf32>
      %1061 = arith.addf %1051, %1060 : vector<2x256xf32>
      %c254_i32_148 = arith.constant 254 : i32
      %1062 = tpu.dynamic_rotate %1012 by %c254_i32_148 dim 1 : vector<2x256xf32>, i32 -> vector<2x256xf32>
      %1063 = vector.shape_cast %122 : vector<1x256xi1> to vector<1x256xi1>
      %1064 = vector.broadcast %1063 : vector<1x256xi1> to vector<2x256xi1>
      %1065 = arith.select %1064, %1062, %234 : vector<2x256xi1>, vector<2x256xf32>
      %1066 = vector.broadcast %159 : f32 to vector<2x1xf32>
      %1067 = vector.broadcast %208 : f32 to vector<2x1xf32>
      %1068 = arith.select %233, %1066, %1067 : vector<2x1xi1>, vector<2x1xf32>
      %1069 = vector.broadcast %1068 : vector<2x1xf32> to vector<2x256xf32>
      %1070 = arith.mulf %1069, %1065 : vector<2x256xf32>
      %1071 = arith.addf %1061, %1070 : vector<2x256xf32>
      %c253_i32_149 = arith.constant 253 : i32
      %1072 = tpu.dynamic_rotate %1012 by %c253_i32_149 dim 1 : vector<2x256xf32>, i32 -> vector<2x256xf32>
      %1073 = vector.shape_cast %132 : vector<1x256xi1> to vector<1x256xi1>
      %1074 = vector.broadcast %1073 : vector<1x256xi1> to vector<2x256xi1>
      %1075 = arith.select %1074, %1072, %234 : vector<2x256xi1>, vector<2x256xf32>
      %1076 = vector.broadcast %160 : f32 to vector<2x1xf32>
      %1077 = vector.broadcast %209 : f32 to vector<2x1xf32>
      %1078 = arith.select %233, %1076, %1077 : vector<2x1xi1>, vector<2x1xf32>
      %1079 = vector.broadcast %1078 : vector<2x1xf32> to vector<2x256xf32>
      %1080 = arith.mulf %1079, %1075 : vector<2x256xf32>
      %1081 = arith.addf %1071, %1080 : vector<2x256xf32>
      %c240_i32_150 = arith.constant 240 : i32
      %1082 = tpu.dynamic_rotate %789 by %c240_i32_150 dim 1 : vector<2x256xf32>, i32 -> vector<2x256xf32>
      %1083 = vector.shape_cast %107 : vector<1x256xi1> to vector<1x256xi1>
      %1084 = vector.broadcast %1083 : vector<1x256xi1> to vector<2x256xi1>
      %1085 = arith.select %1084, %1082, %234 : vector<2x256xi1>, vector<2x256xf32>
      %c3_i32_151 = arith.constant 3 : i32
      %1086 = tpu.dynamic_rotate %1085 by %c3_i32_151 dim 1 : vector<2x256xf32>, i32 -> vector<2x256xf32>
      %1087 = vector.shape_cast %72 : vector<1x256xi1> to vector<1x256xi1>
      %1088 = vector.broadcast %1087 : vector<1x256xi1> to vector<2x256xi1>
      %1089 = arith.select %1088, %1086, %234 : vector<2x256xi1>, vector<2x256xf32>
      %1090 = vector.broadcast %161 : f32 to vector<2x1xf32>
      %1091 = vector.broadcast %210 : f32 to vector<2x1xf32>
      %1092 = arith.select %233, %1090, %1091 : vector<2x1xi1>, vector<2x1xf32>
      %1093 = vector.broadcast %1092 : vector<2x1xf32> to vector<2x256xf32>
      %1094 = arith.mulf %1093, %1089 : vector<2x256xf32>
      %1095 = arith.addf %1081, %1094 : vector<2x256xf32>
      %c2_i32_152 = arith.constant 2 : i32
      %1096 = tpu.dynamic_rotate %1085 by %c2_i32_152 dim 1 : vector<2x256xf32>, i32 -> vector<2x256xf32>
      %1097 = vector.shape_cast %82 : vector<1x256xi1> to vector<1x256xi1>
      %1098 = vector.broadcast %1097 : vector<1x256xi1> to vector<2x256xi1>
      %1099 = arith.select %1098, %1096, %234 : vector<2x256xi1>, vector<2x256xf32>
      %1100 = vector.broadcast %162 : f32 to vector<2x1xf32>
      %1101 = vector.broadcast %211 : f32 to vector<2x1xf32>
      %1102 = arith.select %233, %1100, %1101 : vector<2x1xi1>, vector<2x1xf32>
      %1103 = vector.broadcast %1102 : vector<2x1xf32> to vector<2x256xf32>
      %1104 = arith.mulf %1103, %1099 : vector<2x256xf32>
      %1105 = arith.addf %1095, %1104 : vector<2x256xf32>
      %c1_i32_153 = arith.constant 1 : i32
      %1106 = tpu.dynamic_rotate %1085 by %c1_i32_153 dim 1 : vector<2x256xf32>, i32 -> vector<2x256xf32>
      %1107 = vector.shape_cast %92 : vector<1x256xi1> to vector<1x256xi1>
      %1108 = vector.broadcast %1107 : vector<1x256xi1> to vector<2x256xi1>
      %1109 = arith.select %1108, %1106, %234 : vector<2x256xi1>, vector<2x256xf32>
      %1110 = vector.broadcast %163 : f32 to vector<2x1xf32>
      %1111 = vector.broadcast %212 : f32 to vector<2x1xf32>
      %1112 = arith.select %233, %1110, %1111 : vector<2x1xi1>, vector<2x1xf32>
      %1113 = vector.broadcast %1112 : vector<2x1xf32> to vector<2x256xf32>
      %1114 = arith.mulf %1113, %1109 : vector<2x256xf32>
      %1115 = arith.addf %1105, %1114 : vector<2x256xf32>
      %1116 = vector.shape_cast %102 : vector<1x256xi1> to vector<1x256xi1>
      %1117 = vector.broadcast %1116 : vector<1x256xi1> to vector<2x256xi1>
      %1118 = arith.select %1117, %1085, %234 : vector<2x256xi1>, vector<2x256xf32>
      %1119 = vector.broadcast %164 : f32 to vector<2x1xf32>
      %1120 = vector.broadcast %213 : f32 to vector<2x1xf32>
      %1121 = arith.select %233, %1119, %1120 : vector<2x1xi1>, vector<2x1xf32>
      %1122 = vector.broadcast %1121 : vector<2x1xf32> to vector<2x256xf32>
      %1123 = arith.mulf %1122, %1118 : vector<2x256xf32>
      %1124 = arith.addf %1115, %1123 : vector<2x256xf32>
      %c255_i32_154 = arith.constant 255 : i32
      %1125 = tpu.dynamic_rotate %1085 by %c255_i32_154 dim 1 : vector<2x256xf32>, i32 -> vector<2x256xf32>
      %1126 = vector.shape_cast %112 : vector<1x256xi1> to vector<1x256xi1>
      %1127 = vector.broadcast %1126 : vector<1x256xi1> to vector<2x256xi1>
      %1128 = arith.select %1127, %1125, %234 : vector<2x256xi1>, vector<2x256xf32>
      %1129 = vector.broadcast %165 : f32 to vector<2x1xf32>
      %1130 = vector.broadcast %214 : f32 to vector<2x1xf32>
      %1131 = arith.select %233, %1129, %1130 : vector<2x1xi1>, vector<2x1xf32>
      %1132 = vector.broadcast %1131 : vector<2x1xf32> to vector<2x256xf32>
      %1133 = arith.mulf %1132, %1128 : vector<2x256xf32>
      %1134 = arith.addf %1124, %1133 : vector<2x256xf32>
      %c254_i32_155 = arith.constant 254 : i32
      %1135 = tpu.dynamic_rotate %1085 by %c254_i32_155 dim 1 : vector<2x256xf32>, i32 -> vector<2x256xf32>
      %1136 = vector.shape_cast %122 : vector<1x256xi1> to vector<1x256xi1>
      %1137 = vector.broadcast %1136 : vector<1x256xi1> to vector<2x256xi1>
      %1138 = arith.select %1137, %1135, %234 : vector<2x256xi1>, vector<2x256xf32>
      %1139 = vector.broadcast %166 : f32 to vector<2x1xf32>
      %1140 = vector.broadcast %215 : f32 to vector<2x1xf32>
      %1141 = arith.select %233, %1139, %1140 : vector<2x1xi1>, vector<2x1xf32>
      %1142 = vector.broadcast %1141 : vector<2x1xf32> to vector<2x256xf32>
      %1143 = arith.mulf %1142, %1138 : vector<2x256xf32>
      %1144 = arith.addf %1134, %1143 : vector<2x256xf32>
      %c253_i32_156 = arith.constant 253 : i32
      %1145 = tpu.dynamic_rotate %1085 by %c253_i32_156 dim 1 : vector<2x256xf32>, i32 -> vector<2x256xf32>
      %1146 = vector.shape_cast %132 : vector<1x256xi1> to vector<1x256xi1>
      %1147 = vector.broadcast %1146 : vector<1x256xi1> to vector<2x256xi1>
      %1148 = arith.select %1147, %1145, %234 : vector<2x256xi1>, vector<2x256xf32>
      %1149 = vector.broadcast %167 : f32 to vector<2x1xf32>
      %1150 = vector.broadcast %216 : f32 to vector<2x1xf32>
      %1151 = arith.select %233, %1149, %1150 : vector<2x1xi1>, vector<2x1xf32>
      %1152 = vector.broadcast %1151 : vector<2x1xf32> to vector<2x256xf32>
      %1153 = arith.mulf %1152, %1148 : vector<2x256xf32>
      %1154 = arith.addf %1144, %1153 : vector<2x256xf32>
      %c224_i32_157 = arith.constant 224 : i32
      %1155 = tpu.dynamic_rotate %789 by %c224_i32_157 dim 1 : vector<2x256xf32>, i32 -> vector<2x256xf32>
      %1156 = vector.shape_cast %117 : vector<1x256xi1> to vector<1x256xi1>
      %1157 = vector.broadcast %1156 : vector<1x256xi1> to vector<2x256xi1>
      %1158 = arith.select %1157, %1155, %234 : vector<2x256xi1>, vector<2x256xf32>
      %c3_i32_158 = arith.constant 3 : i32
      %1159 = tpu.dynamic_rotate %1158 by %c3_i32_158 dim 1 : vector<2x256xf32>, i32 -> vector<2x256xf32>
      %1160 = vector.shape_cast %72 : vector<1x256xi1> to vector<1x256xi1>
      %1161 = vector.broadcast %1160 : vector<1x256xi1> to vector<2x256xi1>
      %1162 = arith.select %1161, %1159, %234 : vector<2x256xi1>, vector<2x256xf32>
      %1163 = vector.broadcast %168 : f32 to vector<2x1xf32>
      %1164 = vector.broadcast %217 : f32 to vector<2x1xf32>
      %1165 = arith.select %233, %1163, %1164 : vector<2x1xi1>, vector<2x1xf32>
      %1166 = vector.broadcast %1165 : vector<2x1xf32> to vector<2x256xf32>
      %1167 = arith.mulf %1166, %1162 : vector<2x256xf32>
      %1168 = arith.addf %1154, %1167 : vector<2x256xf32>
      %c2_i32_159 = arith.constant 2 : i32
      %1169 = tpu.dynamic_rotate %1158 by %c2_i32_159 dim 1 : vector<2x256xf32>, i32 -> vector<2x256xf32>
      %1170 = vector.shape_cast %82 : vector<1x256xi1> to vector<1x256xi1>
      %1171 = vector.broadcast %1170 : vector<1x256xi1> to vector<2x256xi1>
      %1172 = arith.select %1171, %1169, %234 : vector<2x256xi1>, vector<2x256xf32>
      %1173 = vector.broadcast %169 : f32 to vector<2x1xf32>
      %1174 = vector.broadcast %218 : f32 to vector<2x1xf32>
      %1175 = arith.select %233, %1173, %1174 : vector<2x1xi1>, vector<2x1xf32>
      %1176 = vector.broadcast %1175 : vector<2x1xf32> to vector<2x256xf32>
      %1177 = arith.mulf %1176, %1172 : vector<2x256xf32>
      %1178 = arith.addf %1168, %1177 : vector<2x256xf32>
      %c1_i32_160 = arith.constant 1 : i32
      %1179 = tpu.dynamic_rotate %1158 by %c1_i32_160 dim 1 : vector<2x256xf32>, i32 -> vector<2x256xf32>
      %1180 = vector.shape_cast %92 : vector<1x256xi1> to vector<1x256xi1>
      %1181 = vector.broadcast %1180 : vector<1x256xi1> to vector<2x256xi1>
      %1182 = arith.select %1181, %1179, %234 : vector<2x256xi1>, vector<2x256xf32>
      %1183 = vector.broadcast %170 : f32 to vector<2x1xf32>
      %1184 = vector.broadcast %219 : f32 to vector<2x1xf32>
      %1185 = arith.select %233, %1183, %1184 : vector<2x1xi1>, vector<2x1xf32>
      %1186 = vector.broadcast %1185 : vector<2x1xf32> to vector<2x256xf32>
      %1187 = arith.mulf %1186, %1182 : vector<2x256xf32>
      %1188 = arith.addf %1178, %1187 : vector<2x256xf32>
      %1189 = vector.shape_cast %102 : vector<1x256xi1> to vector<1x256xi1>
      %1190 = vector.broadcast %1189 : vector<1x256xi1> to vector<2x256xi1>
      %1191 = arith.select %1190, %1158, %234 : vector<2x256xi1>, vector<2x256xf32>
      %1192 = vector.broadcast %171 : f32 to vector<2x1xf32>
      %1193 = vector.broadcast %220 : f32 to vector<2x1xf32>
      %1194 = arith.select %233, %1192, %1193 : vector<2x1xi1>, vector<2x1xf32>
      %1195 = vector.broadcast %1194 : vector<2x1xf32> to vector<2x256xf32>
      %1196 = arith.mulf %1195, %1191 : vector<2x256xf32>
      %1197 = arith.addf %1188, %1196 : vector<2x256xf32>
      %c255_i32_161 = arith.constant 255 : i32
      %1198 = tpu.dynamic_rotate %1158 by %c255_i32_161 dim 1 : vector<2x256xf32>, i32 -> vector<2x256xf32>
      %1199 = vector.shape_cast %112 : vector<1x256xi1> to vector<1x256xi1>
      %1200 = vector.broadcast %1199 : vector<1x256xi1> to vector<2x256xi1>
      %1201 = arith.select %1200, %1198, %234 : vector<2x256xi1>, vector<2x256xf32>
      %1202 = vector.broadcast %172 : f32 to vector<2x1xf32>
      %1203 = vector.broadcast %221 : f32 to vector<2x1xf32>
      %1204 = arith.select %233, %1202, %1203 : vector<2x1xi1>, vector<2x1xf32>
      %1205 = vector.broadcast %1204 : vector<2x1xf32> to vector<2x256xf32>
      %1206 = arith.mulf %1205, %1201 : vector<2x256xf32>
      %1207 = arith.addf %1197, %1206 : vector<2x256xf32>
      %c254_i32_162 = arith.constant 254 : i32
      %1208 = tpu.dynamic_rotate %1158 by %c254_i32_162 dim 1 : vector<2x256xf32>, i32 -> vector<2x256xf32>
      %1209 = vector.shape_cast %122 : vector<1x256xi1> to vector<1x256xi1>
      %1210 = vector.broadcast %1209 : vector<1x256xi1> to vector<2x256xi1>
      %1211 = arith.select %1210, %1208, %234 : vector<2x256xi1>, vector<2x256xf32>
      %1212 = vector.broadcast %173 : f32 to vector<2x1xf32>
      %1213 = vector.broadcast %222 : f32 to vector<2x1xf32>
      %1214 = arith.select %233, %1212, %1213 : vector<2x1xi1>, vector<2x1xf32>
      %1215 = vector.broadcast %1214 : vector<2x1xf32> to vector<2x256xf32>
      %1216 = arith.mulf %1215, %1211 : vector<2x256xf32>
      %1217 = arith.addf %1207, %1216 : vector<2x256xf32>
      %c253_i32_163 = arith.constant 253 : i32
      %1218 = tpu.dynamic_rotate %1158 by %c253_i32_163 dim 1 : vector<2x256xf32>, i32 -> vector<2x256xf32>
      %1219 = vector.shape_cast %132 : vector<1x256xi1> to vector<1x256xi1>
      %1220 = vector.broadcast %1219 : vector<1x256xi1> to vector<2x256xi1>
      %1221 = arith.select %1220, %1218, %234 : vector<2x256xi1>, vector<2x256xf32>
      %1222 = vector.broadcast %174 : f32 to vector<2x1xf32>
      %1223 = vector.broadcast %223 : f32 to vector<2x1xf32>
      %1224 = arith.select %233, %1222, %1223 : vector<2x1xi1>, vector<2x1xf32>
      %1225 = vector.broadcast %1224 : vector<2x1xf32> to vector<2x256xf32>
      %1226 = arith.mulf %1225, %1221 : vector<2x256xf32>
      %1227 = arith.addf %1217, %1226 : vector<2x256xf32>
      %c208_i32_164 = arith.constant 208 : i32
      %1228 = tpu.dynamic_rotate %789 by %c208_i32_164 dim 1 : vector<2x256xf32>, i32 -> vector<2x256xf32>
      %1229 = vector.shape_cast %127 : vector<1x256xi1> to vector<1x256xi1>
      %1230 = vector.broadcast %1229 : vector<1x256xi1> to vector<2x256xi1>
      %1231 = arith.select %1230, %1228, %234 : vector<2x256xi1>, vector<2x256xf32>
      %c3_i32_165 = arith.constant 3 : i32
      %1232 = tpu.dynamic_rotate %1231 by %c3_i32_165 dim 1 : vector<2x256xf32>, i32 -> vector<2x256xf32>
      %1233 = vector.shape_cast %72 : vector<1x256xi1> to vector<1x256xi1>
      %1234 = vector.broadcast %1233 : vector<1x256xi1> to vector<2x256xi1>
      %1235 = arith.select %1234, %1232, %234 : vector<2x256xi1>, vector<2x256xf32>
      %1236 = vector.broadcast %175 : f32 to vector<2x1xf32>
      %1237 = vector.broadcast %224 : f32 to vector<2x1xf32>
      %1238 = arith.select %233, %1236, %1237 : vector<2x1xi1>, vector<2x1xf32>
      %1239 = vector.broadcast %1238 : vector<2x1xf32> to vector<2x256xf32>
      %1240 = arith.mulf %1239, %1235 : vector<2x256xf32>
      %1241 = arith.addf %1227, %1240 : vector<2x256xf32>
      %c2_i32_166 = arith.constant 2 : i32
      %1242 = tpu.dynamic_rotate %1231 by %c2_i32_166 dim 1 : vector<2x256xf32>, i32 -> vector<2x256xf32>
      %1243 = vector.shape_cast %82 : vector<1x256xi1> to vector<1x256xi1>
      %1244 = vector.broadcast %1243 : vector<1x256xi1> to vector<2x256xi1>
      %1245 = arith.select %1244, %1242, %234 : vector<2x256xi1>, vector<2x256xf32>
      %1246 = vector.broadcast %176 : f32 to vector<2x1xf32>
      %1247 = vector.broadcast %225 : f32 to vector<2x1xf32>
      %1248 = arith.select %233, %1246, %1247 : vector<2x1xi1>, vector<2x1xf32>
      %1249 = vector.broadcast %1248 : vector<2x1xf32> to vector<2x256xf32>
      %1250 = arith.mulf %1249, %1245 : vector<2x256xf32>
      %1251 = arith.addf %1241, %1250 : vector<2x256xf32>
      %c1_i32_167 = arith.constant 1 : i32
      %1252 = tpu.dynamic_rotate %1231 by %c1_i32_167 dim 1 : vector<2x256xf32>, i32 -> vector<2x256xf32>
      %1253 = vector.shape_cast %92 : vector<1x256xi1> to vector<1x256xi1>
      %1254 = vector.broadcast %1253 : vector<1x256xi1> to vector<2x256xi1>
      %1255 = arith.select %1254, %1252, %234 : vector<2x256xi1>, vector<2x256xf32>
      %1256 = vector.broadcast %177 : f32 to vector<2x1xf32>
      %1257 = vector.broadcast %226 : f32 to vector<2x1xf32>
      %1258 = arith.select %233, %1256, %1257 : vector<2x1xi1>, vector<2x1xf32>
      %1259 = vector.broadcast %1258 : vector<2x1xf32> to vector<2x256xf32>
      %1260 = arith.mulf %1259, %1255 : vector<2x256xf32>
      %1261 = arith.addf %1251, %1260 : vector<2x256xf32>
      %1262 = vector.shape_cast %102 : vector<1x256xi1> to vector<1x256xi1>
      %1263 = vector.broadcast %1262 : vector<1x256xi1> to vector<2x256xi1>
      %1264 = arith.select %1263, %1231, %234 : vector<2x256xi1>, vector<2x256xf32>
      %1265 = vector.broadcast %178 : f32 to vector<2x1xf32>
      %1266 = vector.broadcast %227 : f32 to vector<2x1xf32>
      %1267 = arith.select %233, %1265, %1266 : vector<2x1xi1>, vector<2x1xf32>
      %1268 = vector.broadcast %1267 : vector<2x1xf32> to vector<2x256xf32>
      %1269 = arith.mulf %1268, %1264 : vector<2x256xf32>
      %1270 = arith.addf %1261, %1269 : vector<2x256xf32>
      %c255_i32_168 = arith.constant 255 : i32
      %1271 = tpu.dynamic_rotate %1231 by %c255_i32_168 dim 1 : vector<2x256xf32>, i32 -> vector<2x256xf32>
      %1272 = vector.shape_cast %112 : vector<1x256xi1> to vector<1x256xi1>
      %1273 = vector.broadcast %1272 : vector<1x256xi1> to vector<2x256xi1>
      %1274 = arith.select %1273, %1271, %234 : vector<2x256xi1>, vector<2x256xf32>
      %1275 = vector.broadcast %179 : f32 to vector<2x1xf32>
      %1276 = vector.broadcast %228 : f32 to vector<2x1xf32>
      %1277 = arith.select %233, %1275, %1276 : vector<2x1xi1>, vector<2x1xf32>
      %1278 = vector.broadcast %1277 : vector<2x1xf32> to vector<2x256xf32>
      %1279 = arith.mulf %1278, %1274 : vector<2x256xf32>
      %1280 = arith.addf %1270, %1279 : vector<2x256xf32>
      %c254_i32_169 = arith.constant 254 : i32
      %1281 = tpu.dynamic_rotate %1231 by %c254_i32_169 dim 1 : vector<2x256xf32>, i32 -> vector<2x256xf32>
      %1282 = vector.shape_cast %122 : vector<1x256xi1> to vector<1x256xi1>
      %1283 = vector.broadcast %1282 : vector<1x256xi1> to vector<2x256xi1>
      %1284 = arith.select %1283, %1281, %234 : vector<2x256xi1>, vector<2x256xf32>
      %1285 = vector.broadcast %180 : f32 to vector<2x1xf32>
      %1286 = vector.broadcast %229 : f32 to vector<2x1xf32>
      %1287 = arith.select %233, %1285, %1286 : vector<2x1xi1>, vector<2x1xf32>
      %1288 = vector.broadcast %1287 : vector<2x1xf32> to vector<2x256xf32>
      %1289 = arith.mulf %1288, %1284 : vector<2x256xf32>
      %1290 = arith.addf %1280, %1289 : vector<2x256xf32>
      %c253_i32_170 = arith.constant 253 : i32
      %1291 = tpu.dynamic_rotate %1231 by %c253_i32_170 dim 1 : vector<2x256xf32>, i32 -> vector<2x256xf32>
      %1292 = vector.shape_cast %132 : vector<1x256xi1> to vector<1x256xi1>
      %1293 = vector.broadcast %1292 : vector<1x256xi1> to vector<2x256xi1>
      %1294 = arith.select %1293, %1291, %234 : vector<2x256xi1>, vector<2x256xf32>
      %1295 = vector.broadcast %181 : f32 to vector<2x1xf32>
      %1296 = vector.broadcast %230 : f32 to vector<2x1xf32>
      %1297 = arith.select %233, %1295, %1296 : vector<2x1xi1>, vector<2x1xf32>
      %1298 = vector.broadcast %1297 : vector<2x1xf32> to vector<2x256xf32>
      %1299 = arith.mulf %1298, %1294 : vector<2x256xf32>
      %1300 = arith.addf %1290, %1299 : vector<2x256xf32>
      %cst_171 = arith.constant dense<0.000000e+00> : vector<256xf32>
      %1301 = vector.multi_reduction <add>, %1300, %cst_171 [0] : vector<2x256xf32> to vector<256xf32>
      %1302 = vector.shape_cast %1301 : vector<256xf32> to vector<1x256xf32>
      %1303 = arith.negf %1302 : vector<1x256xf32>
      %1304 = math.exp %1303 : vector<1x256xf32>
      %cst_172 = arith.constant 1.000000e+00 : f32
      %1305 = vector.broadcast %cst_172 : f32 to vector<1x256xf32>
      %1306 = arith.addf %1305, %1304 : vector<1x256xf32>
      %1307 = arith.divf %1305, %1306 : vector<1x256xf32>
      %c1_173 = arith.constant 1 : index
      %c0_174 = arith.constant 0 : index
      %c0_175 = arith.constant 0 : index
      %1308 = vector.load %arg5[%c1_173, %c0_174, %c0_175] : memref<2x1x256xf32, #tpu.memory_space<vmem>>, vector<1x1x256xf32>
      %1309 = vector.shape_cast %1308 : vector<1x1x256xf32> to vector<1x256xf32>
      %1310 = vector.shape_cast %1307 : vector<1x256xf32> to vector<1x1x256xf32>
      tpu.vector_store %arg5[%c1_173, %c0_174, %c0_175], %1310 {strides = array<i32>} : memref<2x1x256xf32, #tpu.memory_space<vmem>>, vector<1x1x256xf32>,
    } else {
    }
    return
  }
  func.func @transform_0(%arg0: i32, %arg1: i32, %arg2: memref<98xf32, #tpu.memory_space<smem>>) -> (i32, i32) {
    %c0_i32 = arith.constant 0 : i32
    %c0_i32_0 = arith.constant 0 : i32
    %c0_i32_1 = arith.constant 0 : i32
    return %c0_i32, %c0_i32_0 : i32, i32
  }
  func.func @transform_1(%arg0: i32, %arg1: i32, %arg2: memref<98xf32, #tpu.memory_space<smem>>) -> (i32, i32, i32) {
    %c0_i32 = arith.constant 0 : i32
    %c0_i32_0 = arith.constant 0 : i32
    return %arg0, %arg1, %c0_i32 : i32, i32, i32
  }
  func.func @transform_2(%arg0: i32, %arg1: i32, %arg2: memref<98xf32, #tpu.memory_space<smem>>) -> (i32, i32, i32) {
    %c0_i32 = arith.constant 0 : i32
    %c0_i32_0 = arith.constant 0 : i32
    %c0_i32_1 = arith.constant 0 : i32
    return %arg0, %c0_i32, %c0_i32_0 : i32, i32, i32
  }
}

</mosaic_0001>

<llo_original>
// kernel: tpu_custom_call.1
$region0: #{tpu_custom_call.1}
  #allocation0 [shape = 'u32[]', space=smem, size = 0x4, offset = 0x4, fixed_abs, tag = 'smem constant byte address 0x4 - core index']
  #allocation1 [shape = 'u32[144,128]{1,0:T(1,128)}', space=vmem, size = 0x12000, scoped, tag = 'internal scratch']
  #allocation2 [shape = 'f32[2,8,256]{2,1,0:T(8,128)}', space=vmem, size = 0x4000, scoped, tag = 'scratch operand']
  #allocation3 [shape = 'f32[2,8,256]{2,1,0:T(8,128)}', space=vmem, size = 0x4000, scoped, tag = 'scratch operand']
  #allocation4 [shape = 's32[1]{0}', space=sflag, size = 0x4, scoped, tag = 'scoped memory for tpu_custom_call.1']
  #allocation5 [shape = 'u8[512]{0}', space=smem, size = 0x200, scoped, tag = 'prefetched SMEM operand 0']
  %s0 = inlined_call_operand.hbm [shape: f32[98], index: 0, kind: input, shape index: {}]
  %s1 = inlined_call_operand.hbm [shape: s32[2,256], index: 1, kind: input, shape index: {}]
  %s2 = inlined_call_operand.hbm [shape: f32[2,4,256], index: 2, kind: input, shape index: {}]
  %s3 = inlined_call_operand.hbm [shape: f32[2,1,256], index: 3, kind: output, shape index: {}]
  %s4 = sld [smem:[#allocation0]]
  $region34: #{tpu_custom_call.1} parent=0
    _
  %s6 = ssub.s32 1, %s4
  %s7 = scalar_select 0, %s6, %s4
  %9 = dma.hbm_to_smem %s0, 16, [#allocation5], [#allocation4]
  %10 = dma.done [#allocation4], 16
  %11 = sfence
  $region1: #{tpu_custom_call.1} parent=0
    #allocation6 [shape = 'u8[2048]{0}', space=vmem, size = 0x800, scoped, tag = 'input window, operand 1, single buffered']
    #allocation7 [shape = 's32[1]{0}', space=sflag, size = 0x4, scoped, tag = 'scoped memory for tpu_custom_call.1']
    #allocation8 [shape = 's32[1]{0}', space=sflag, size = 0x4, scoped, tag = 'scoped memory for tpu_custom_call.1']
    #allocation9 [shape = 'u8[8192]{0}', space=vmem, size = 0x2000, scoped, tag = 'input window, operand 2, single buffered']
    #allocation10 [shape = 's32[1]{0}', space=sflag, size = 0x4, scoped, tag = 'scoped memory for tpu_custom_call.1']
    #allocation11 [shape = 'u8[2048]{0}', space=vmem, size = 0x800, scoped, tag = 'output window, operand 0, single buffered']
    %12 = vsyncpa [#allocation7], 0
    %13 = vsyncpa [#allocation10], 0
    %14 = vsyncpa [#allocation8], 0
    // Predicated region
    $region2: #{tpu_custom_call.1} parent=1 // pred_check
      _
    $region3: #{tpu_custom_call.1} parent=1 // pred_check_branch
      %16 = sbr.rel (0) target = $region5
    $region4: #{tpu_custom_call.1} parent=1 // pred_region
      %s18 = ssub.s32 64, 64
      %19 = vsyncadd [#allocation7], %s18
      %s21 = sshll.u32 [#allocation6], 4
      %s22 = int_to_ptr.vmem [resolvable:$true] %s21
      %24 = dma.hbm_to_vmem [thread:$0]  %s1, 64, %s22, [#allocation7]
    $region5: #{tpu_custom_call.1} parent=1 // pred_fallthru
      _
    // Predicated region
    $region6: #{tpu_custom_call.1} parent=1 // pred_check
      _
    $region7: #{tpu_custom_call.1} parent=1 // pred_check_branch
      %26 = sbr.rel (0) target = $region9
    $region8: #{tpu_custom_call.1} parent=1 // pred_region
      %s28 = ssub.s32 256, 256
      %29 = vsyncadd [#allocation10], %s28
      %s30 = sshll.u32 [#allocation9], 4
      %s31 = int_to_ptr.vmem [resolvable:$true] %s30
      %36 = dma.hbm_to_vmem [thread:$0]  %s2, 256, %s31, [#allocation10], 128, 128, 8
    $region9: #{tpu_custom_call.1} parent=1 // pred_fallthru
      _
    // Predicated region
    $region10: #{tpu_custom_call.1} parent=1 // pred_check
      _
    $region11: #{tpu_custom_call.1} parent=1 // pred_check_branch
      %38 = sbr.rel (0) target = $region13
    $region12: #{tpu_custom_call.1} parent=1 // pred_region
      %39 = dma.done [#allocation7], 64
    $region13: #{tpu_custom_call.1} parent=1 // pred_fallthru
      _
    // Predicated region
    $region14: #{tpu_custom_call.1} parent=1 // pred_check
      _
    $region15: #{tpu_custom_call.1} parent=1 // pred_check_branch
      %41 = sbr.rel (0) target = $region17
    $region16: #{tpu_custom_call.1} parent=1 // pred_region
      %42 = dma.done [#allocation10], 256
    $region17: #{tpu_custom_call.1} parent=1 // pred_fallthru
      _
    %p43 = scmp.eq.s32.totalorder 0, 0
    // Predicated region
    $region18: #{tpu_custom_call.1} parent=1 // pred_check
      %p44 = pneg %p43
    $region19: #{tpu_custom_call.1} parent=1 // pred_check_branch
      %46 = sbr.rel (%p44) target = $region21
    $region20: #{tpu_custom_call.1} parent=1 // pred_region
      %47 = vst [vmem:[#allocation2] sm:$0xff] 0.0
      %48 = vst [vmem:[#allocation2 + $0x8] sm:$0xff] 0.0
      %49 = vst [vmem:[#allocation2 + $0x10] sm:$0xff] 0.0
      %50 = vst [vmem:[#allocation2 + $0x18] sm:$0xff] 0.0
      %51 = vst [vmem:[#allocation3] sm:$0xff] -inf
      %52 = vst [vmem:[#allocation3 + $0x8] sm:$0xff] -inf
      %53 = vst [vmem:[#allocation3 + $0x10] sm:$0xff] -inf
      %54 = vst [vmem:[#allocation3 + $0x18] sm:$0xff] -inf
    $region21: #{tpu_custom_call.1} parent=1 // pred_fallthru
      _
    %v55 = vlaneseq
    %v56 = vshrl.u32 %v55, 7
    %vm57 = vcmp.eq.s32.totalorder %v56, 0
    %v58 = vld [vmem:[#allocation2] sm:$0xff]
    %v59 = vld [vmem:[#allocation2 + $0x8] sm:$0xff]
    %v60 = vld [vmem:[#allocation3] sm:$0xff]
    %v61 = vld [vmem:[#allocation3 + $0x8] sm:$0xff]
    %v62 = vld [vmem:[#allocation9] sm:$0xff]
    %v64 = vcombine.high %v62, %v62
    %vm66 = vcmask 1043456
    %v67 = vsel %vm66, %v62, 0.0
    %v68 = vrot.slane %v67, 4
    %v69 = vadd.f32 %v67, %v68
    %v70 = vrot.slane %v69, 2
    %v71 = vadd.f32 %v69, %v70
    %v72 = vrot.slane %v71, 1
    %v73 = vadd.f32 %v71, %v72
    %v74 = vsel %vm66, %v64, 0.0
    %v75 = vrot.slane %v74, 4
    %v76 = vadd.f32 %v74, %v75
    %v77 = vrot.slane %v76, 2
    %v78 = vadd.f32 %v76, %v77
    %v79 = vrot.slane %v78, 1
    %v80 = vadd.f32 %v78, %v79
    %v81 = vsel %vm66, %v62, -inf
    %v82 = vrot.slane %v81, 4
    %v83 = vmax.f32 %v81, %v82
    %v84 = vrot.slane %v83, 2
    %v85 = vmax.f32 %v83, %v84
    %v86 = vrot.slane %v85, 1
    %v87 = vmax.f32 %v85, %v86
    %v88 = vsel %vm66, %v64, -inf
    %v89 = vrot.slane %v88, 4
    %v90 = vmax.f32 %v88, %v89
    %v91 = vrot.slane %v90, 2
    %v92 = vmax.f32 %v90, %v91
    %v93 = vrot.slane %v92, 1
    %v94 = vmax.f32 %v92, %v93
    %v95 = vadd.f32 %v58, %v73
    %v96 = vadd.f32 %v59, %v80
    %v97 = vsel %vm57, 1, 0
    %vm98 = vcmp.eq.s32.totalorder %v97, 1
    %v99 = vsel %vm98, %v95, %v58
    %v100 = vsel %vm98, %v96, %v59
    %v101 = vmax.f32 %v60, %v87
    %v102 = vmax.f32 %v61, %v94
    %v103 = vsel %vm98, %v101, %v60
    %v104 = vsel %vm98, %v102, %v61
    %105 = vst [vmem:[#allocation2] sm:$0xff] %v99
    %106 = vst [vmem:[#allocation2 + $0x8] sm:$0xff] %v100
    %107 = vst [vmem:[#allocation3] sm:$0xff] %v103
    %108 = vst [vmem:[#allocation3 + $0x8] sm:$0xff] %v104
    %s109 = scalar_lea.vmem [#allocation2], 16
    %v110 = vld [vmem:[%s109] sm:$0xff]
    %v111 = vld [vmem:[%s109 + $0x8] sm:$0xff]
    %s112 = scalar_lea.vmem [#allocation3], 16
    %v113 = vld [vmem:[%s112] sm:$0xff]
    %v114 = vld [vmem:[%s112 + $0x8] sm:$0xff]
    %s115 = scalar_lea.vmem [#allocation9], 8
    %v116 = vld [vmem:[%s115] sm:$0xff]
    %v118 = vcombine.high %v116, %v116
    %v120 = vsel %vm66, %v116, 0.0
    %v121 = vrot.slane %v120, 4
    %v122 = vadd.f32 %v120, %v121
    %v123 = vrot.slane %v122, 2
    %v124 = vadd.f32 %v122, %v123
    %v125 = vrot.slane %v124, 1
    %v126 = vadd.f32 %v124, %v125
    %v127 = vsel %vm66, %v118, 0.0
    %v128 = vrot.slane %v127, 4
    %v129 = vadd.f32 %v127, %v128
    %v130 = vrot.slane %v129, 2
    %v131 = vadd.f32 %v129, %v130
    %v132 = vrot.slane %v131, 1
    %v133 = vadd.f32 %v131, %v132
    %v134 = vsel %vm66, %v116, -inf
    %v135 = vrot.slane %v134, 4
    %v136 = vmax.f32 %v134, %v135
    %v137 = vrot.slane %v136, 2
    %v138 = vmax.f32 %v136, %v137
    %v139 = vrot.slane %v138, 1
    %v140 = vmax.f32 %v138, %v139
    %v141 = vsel %vm66, %v118, -inf
    %v142 = vrot.slane %v141, 4
    %v143 = vmax.f32 %v141, %v142
    %v144 = vrot.slane %v143, 2
    %v145 = vmax.f32 %v143, %v144
    %v146 = vrot.slane %v145, 1
    %v147 = vmax.f32 %v145, %v146
    %v148 = vadd.f32 %v110, %v126
    %v149 = vadd.f32 %v111, %v133
    %v150 = vsel %vm98, %v148, %v110
    %v151 = vsel %vm98, %v149, %v111
    %v152 = vmax.f32 %v113, %v140
    %v153 = vmax.f32 %v114, %v147
    %v154 = vsel %vm98, %v152, %v113
    %v155 = vsel %vm98, %v153, %v114
    %156 = vst [vmem:[%s109] sm:$0xff] %v150
    %157 = vst [vmem:[%s109 + $0x8] sm:$0xff] %v151
    %158 = vst [vmem:[%s112] sm:$0xff] %v154
    %159 = vst [vmem:[%s112 + $0x8] sm:$0xff] %v155
    // Predicated region
    $region22: #{tpu_custom_call.1} parent=1 // pred_check
      %p160 = pneg %p43
    $region23: #{tpu_custom_call.1} parent=1 // pred_check_branch
      %162 = sbr.rel (%p160) target = $region25
    $region24: #{tpu_custom_call.1} parent=1 // pred_region
      %v163 = vld [vmem:[#allocation6] ss:$2 sm:$0x3]
      %s164 = scalar_lea.vmem [#allocation6], 1
      %v165 = vld [vmem:[%s164] ss:$2 sm:$0x3]
      %vm166 = vcmp.ge.s32.totalorder %v163, 3
      %vm167 = vcmp.le.s32.totalorder %v163, 18
      %vm168 = vmand %vm166, %vm167
      %vm169 = vcmp.ge.s32.totalorder %v165, 3
      %vm170 = vcmp.le.s32.totalorder %v165, 18
      %vm171 = vmand %vm169, %vm170
      %vm172 = vcmp.ge.s32.totalorder %v163, 2
      %vm173 = vcmp.le.s32.totalorder %v163, 17
      %vm174 = vmand %vm172, %vm173
      %vm175 = vcmp.ge.s32.totalorder %v165, 2
      %vm176 = vcmp.le.s32.totalorder %v165, 17
      %vm177 = vmand %vm175, %vm176
      %vm178 = vcmp.ge.s32.totalorder %v163, 1
      %vm179 = vcmp.le.s32.totalorder %v163, 16
      %vm180 = vmand %vm178, %vm179
      %vm181 = vcmp.ge.s32.totalorder %v165, 1
      %vm182 = vcmp.le.s32.totalorder %v165, 16
      %vm183 = vmand %vm181, %vm182
      %vm184 = vcmp.ge.s32.totalorder %v163, 0
      %vm185 = vcmp.le.s32.totalorder %v163, 15
      %vm186 = vmand %vm184, %vm185
      %vm187 = vcmp.ge.s32.totalorder %v165, 0
      %vm188 = vcmp.le.s32.totalorder %v165, 15
      %vm189 = vmand %vm187, %vm188
      %vm190 = vcmp.ge.s32.totalorder %v163, 4294967295
      %vm191 = vcmp.le.s32.totalorder %v163, 14
      %vm192 = vmand %vm190, %vm191
      %vm193 = vcmp.ge.s32.totalorder %v165, 4294967295
      %vm194 = vcmp.le.s32.totalorder %v165, 14
      %vm195 = vmand %vm193, %vm194
      %vm196 = vcmp.ge.s32.totalorder %v163, 4294967294
      %vm197 = vcmp.le.s32.totalorder %v163, 13
      %vm198 = vmand %vm196, %vm197
      %vm199 = vcmp.ge.s32.totalorder %v165, 4294967294
      %vm200 = vcmp.le.s32.totalorder %v165, 13
      %vm201 = vmand %vm199, %vm200
      %vm202 = vcmp.ge.s32.totalorder %v163, 4294967293
      %vm203 = vcmp.le.s32.totalorder %v163, 12
      %vm204 = vmand %vm202, %vm203
      %vm205 = vcmp.ge.s32.totalorder %v165, 4294967293
      %vm206 = vcmp.le.s32.totalorder %v165, 12
      %vm207 = vmand %vm205, %vm206
      %s208 = sld [smem:[#allocation5]]
      %s209 = sld [smem:[#allocation5 + $0x1]]
      %s210 = sld [smem:[#allocation5 + $0x2]]
      %s211 = sld [smem:[#allocation5 + $0x3]]
      %s212 = sld [smem:[#allocation5 + $0x4]]
      %s213 = sld [smem:[#allocation5 + $0x5]]
      %s214 = sld [smem:[#allocation5 + $0x6]]
      %s215 = sld [smem:[#allocation5 + $0x7]]
      %s216 = sld [smem:[#allocation5 + $0x8]]
      %s217 = sld [smem:[#allocation5 + $0x9]]
      %s218 = sld [smem:[#allocation5 + $0xa]]
      %s219 = sld [smem:[#allocation5 + $0xb]]
      %s220 = sld [smem:[#allocation5 + $0xc]]
      %s221 = sld [smem:[#allocation5 + $0xd]]
      %s222 = sld [smem:[#allocation5 + $0xe]]
      %s223 = sld [smem:[#allocation5 + $0xf]]
      %s224 = sld [smem:[#allocation5 + $0x10]]
      %s225 = sld [smem:[#allocation5 + $0x11]]
      %s226 = sld [smem:[#allocation5 + $0x12]]
      %s227 = sld [smem:[#allocation5 + $0x13]]
      %s228 = sld [smem:[#allocation5 + $0x14]]
      %s229 = sld [smem:[#allocation5 + $0x15]]
      %s230 = sld [smem:[#allocation5 + $0x16]]
      %s231 = sld [smem:[#allocation5 + $0x17]]
      %s232 = sld [smem:[#allocation5 + $0x18]]
      %s233 = sld [smem:[#allocation5 + $0x19]]
      %s234 = sld [smem:[#allocation5 + $0x1a]]
      %s235 = sld [smem:[#allocation5 + $0x1b]]
      %s236 = sld [smem:[#allocation5 + $0x1c]]
      %s237 = sld [smem:[#allocation5 + $0x1d]]
      %s238 = sld [smem:[#allocation5 + $0x1e]]
      %s239 = sld [smem:[#allocation5 + $0x1f]]
      %s240 = sld [smem:[#allocation5 + $0x20]]
      %s241 = sld [smem:[#allocation5 + $0x21]]
      %s242 = sld [smem:[#allocation5 + $0x22]]
      %s243 = sld [smem:[#allocation5 + $0x23]]
      %s244 = sld [smem:[#allocation5 + $0x24]]
      %s245 = sld [smem:[#allocation5 + $0x25]]
      %s246 = sld [smem:[#allocation5 + $0x26]]
      %s247 = sld [smem:[#allocation5 + $0x27]]
      %s248 = sld [smem:[#allocation5 + $0x28]]
      %s249 = sld [smem:[#allocation5 + $0x29]]
      %s250 = sld [smem:[#allocation5 + $0x2a]]
      %s251 = sld [smem:[#allocation5 + $0x2b]]
      %s252 = sld [smem:[#allocation5 + $0x2c]]
      %s253 = sld [smem:[#allocation5 + $0x2d]]
      %s254 = sld [smem:[#allocation5 + $0x2e]]
      %s255 = sld [smem:[#allocation5 + $0x2f]]
      %s256 = sld [smem:[#allocation5 + $0x30]]
      %s257 = sld [smem:[#allocation5 + $0x31]]
      %s258 = sld [smem:[#allocation5 + $0x32]]
      %s259 = sld [smem:[#allocation5 + $0x33]]
      %s260 = sld [smem:[#allocation5 + $0x34]]
      %s261 = sld [smem:[#allocation5 + $0x35]]
      %s262 = sld [smem:[#allocation5 + $0x36]]
      %s263 = sld [smem:[#allocation5 + $0x37]]
      %s264 = sld [smem:[#allocation5 + $0x38]]
      %s265 = sld [smem:[#allocation5 + $0x39]]
      %s266 = sld [smem:[#allocation5 + $0x3a]]
      %s267 = sld [smem:[#allocation5 + $0x3b]]
      %s268 = sld [smem:[#allocation5 + $0x3c]]
      %s269 = sld [smem:[#allocation5 + $0x3d]]
      %s270 = sld [smem:[#allocation5 + $0x3e]]
      %s271 = sld [smem:[#allocation5 + $0x3f]]
      %s272 = sld [smem:[#allocation5 + $0x40]]
      %s273 = sld [smem:[#allocation5 + $0x41]]
      %s274 = sld [smem:[#allocation5 + $0x42]]
      %s275 = sld [smem:[#allocation5 + $0x43]]
      %s276 = sld [smem:[#allocation5 + $0x44]]
      %s277 = sld [smem:[#allocation5 + $0x45]]
      %s278 = sld [smem:[#allocation5 + $0x46]]
      %s279 = sld [smem:[#allocation5 + $0x47]]
      %s280 = sld [smem:[#allocation5 + $0x48]]
      %s281 = sld [smem:[#allocation5 + $0x49]]
      %s282 = sld [smem:[#allocation5 + $0x4a]]
      %s283 = sld [smem:[#allocation5 + $0x4b]]
      %s284 = sld [smem:[#allocation5 + $0x4c]]
      %s285 = sld [smem:[#allocation5 + $0x4d]]
      %s286 = sld [smem:[#allocation5 + $0x4e]]
      %s287 = sld [smem:[#allocation5 + $0x4f]]
      %s288 = sld [smem:[#allocation5 + $0x50]]
      %s289 = sld [smem:[#allocation5 + $0x51]]
      %s290 = sld [smem:[#allocation5 + $0x52]]
      %s291 = sld [smem:[#allocation5 + $0x53]]
      %s292 = sld [smem:[#allocation5 + $0x54]]
      %s293 = sld [smem:[#allocation5 + $0x55]]
      %s294 = sld [smem:[#allocation5 + $0x56]]
      %s295 = sld [smem:[#allocation5 + $0x57]]
      %s296 = sld [smem:[#allocation5 + $0x58]]
      %s297 = sld [smem:[#allocation5 + $0x59]]
      %s298 = sld [smem:[#allocation5 + $0x5a]]
      %s299 = sld [smem:[#allocation5 + $0x5b]]
      %s300 = sld [smem:[#allocation5 + $0x5c]]
      %s301 = sld [smem:[#allocation5 + $0x5d]]
      %s302 = sld [smem:[#allocation5 + $0x5e]]
      %s303 = sld [smem:[#allocation5 + $0x5f]]
      %s304 = sld [smem:[#allocation5 + $0x60]]
      %s305 = sld [smem:[#allocation5 + $0x61]]
      %v306 = vld [vmem:[#allocation2] sm:$0xff]
      %v307 = vld [vmem:[#allocation2 + $0x8] sm:$0xff]
      %v308 = vrot.slane %v306, 4
      %v309 = vadd.f32 %v306, %v308
      %v310 = vrot.slane %v309, 2
      %v311 = vadd.f32 %v309, %v310
      %v312 = vrot.slane %v311, 1
      %v313 = vadd.f32 %v311, %v312
      %v314 = vrot.slane %v307, 4
      %v315 = vadd.f32 %v307, %v314
      %v316 = vrot.slane %v315, 2
      %v317 = vadd.f32 %v315, %v316
      %v318 = vrot.slane %v317, 1
      %v319 = vadd.f32 %v317, %v318
      %v320 = vmul.f32 %v313, 0.25
      %v321 = vmul.f32 %v319, 0.25
      %v322 = vld [vmem:[#allocation3] sm:$0xff]
      %v323 = vld [vmem:[#allocation3 + $0x8] sm:$0xff]
      %v324 = vrot.slane %v322, 4
      %v325 = vmax.f32 %v322, %v324
      %v326 = vrot.slane %v325, 2
      %v327 = vmax.f32 %v325, %v326
      %v328 = vrot.slane %v327, 1
      %v329 = vmax.f32 %v327, %v328
      %v330 = vrot.slane %v323, 4
      %v331 = vmax.f32 %v323, %v330
      %v332 = vrot.slane %v331, 2
      %v333 = vmax.f32 %v331, %v332
      %v334 = vrot.slane %v333, 1
      %v335 = vmax.f32 %v333, %v334
      %v336 = vsel %vm98, %v320, %v329
      %v337 = vsel %vm98, %v321, %v335
      %338 = vrot.lane.b32.xlu0 %v336, 48
      %v339 = vpop.permute.xlu0 %338
      %340 = vrot.lane.b32.xlu0 %v337, 48
      %v341 = vpop.permute.xlu0 %340
      %v342 = vlaneseq
      %v343 = vand.u32 %v342, 127
      %vm344 = vcmp.lt.s32.totalorder %v343, 48
      %v345 = vsel %vm344, %v339, %v341
      %v346 = vsel %vm344, %v341, %v339
      %v347 = vsel %vm168, 1, 0
      %v348 = vlaneseq
      %v349 = vshrl.u32 %v348, 7
      %v350 = vsub.s32 0, %v349
      %v351 = vrot.slane %v347, %v350
      %v352 = vlaneseq
      %v353 = vshrl.u32 %v352, 7
      %v354 = vsub.s32 1, %v353
      %v355 = vrot.slane %v347, %v354
      %vm356 = vcmp.eq.s32.totalorder %v351, 1
      %vm357 = vcmp.eq.s32.totalorder %v355, 1
      %v358 = vsel %vm356, %v346, 0.0
      %v359 = vsel %vm357, %v345, 0.0
      %360 = vrot.lane.b32.xlu0 %v358, 3
      %v361 = vpop.permute.xlu0 %360
      %362 = vrot.lane.b32.xlu0 %v359, 3
      %v363 = vpop.permute.xlu0 %362
      %vm364 = vcmp.lt.s32.totalorder %v343, 3
      %v365 = vsel %vm364, %v361, %v363
      %v366 = vsel %vm364, %v363, %v361
      %v367 = vsel %vm171, 1, 0
      %v368 = vlaneseq
      %v369 = vshrl.u32 %v368, 7
      %v370 = vsub.s32 0, %v369
      %v371 = vrot.slane %v367, %v370
      %v372 = vlaneseq
      %v373 = vshrl.u32 %v372, 7
      %v374 = vsub.s32 1, %v373
      %v375 = vrot.slane %v367, %v374
      %vm376 = vcmp.eq.s32.totalorder %v371, 1
      %vm377 = vcmp.eq.s32.totalorder %v375, 1
      %v378 = vsel %vm376, %v366, 0.0
      %v379 = vsel %vm377, %v365, 0.0
      %v380 = vstv %s208
      %v381 = vstv %s257
      %v382 = vsel %vm57, %v380, %v381
      %v383 = vmul.f32 %v382, %v378
      %v384 = vmul.f32 %v382, %v379
      %v385 = vadd.f32 %v383, 0.0
      %v386 = vadd.f32 %v384, 0.0
      %387 = vrot.lane.b32.xlu0 %v358, 2
      %v388 = vpop.permute.xlu0 %387
      %389 = vrot.lane.b32.xlu0 %v359, 2
      %v390 = vpop.permute.xlu0 %389
      %vm391 = vcmp.lt.s32.totalorder %v343, 2
      %v392 = vsel %vm391, %v388, %v390
      %v393 = vsel %vm391, %v390, %v388
      %v394 = vsel %vm177, 1, 0
      %v395 = vlaneseq
      %v396 = vshrl.u32 %v395, 7
      %v397 = vsub.s32 0, %v396
      %v398 = vrot.slane %v394, %v397
      %v399 = vlaneseq
      %v400 = vshrl.u32 %v399, 7
      %v401 = vsub.s32 1, %v400
      %v402 = vrot.slane %v394, %v401
      %vm403 = vcmp.eq.s32.totalorder %v398, 1
      %vm404 = vcmp.eq.s32.totalorder %v402, 1
      %v405 = vsel %vm403, %v393, 0.0
      %v406 = vsel %vm404, %v392, 0.0
      %v407 = vstv %s209
      %v408 = vstv %s258
      %v409 = vsel %vm57, %v407, %v408
      %v410 = vmul.f32 %v409, %v405
      %v411 = vmul.f32 %v409, %v406
      %v412 = vadd.f32 %v385, %v410
      %v413 = vadd.f32 %v386, %v411
      %414 = vrot.lane.b32.xlu0 %v358, 1
      %v415 = vpop.permute.xlu0 %414
      %416 = vrot.lane.b32.xlu0 %v359, 1
      %v417 = vpop.permute.xlu0 %416
      %vm418 = vcmp.lt.s32.totalorder %v343, 1
      %v419 = vsel %vm418, %v415, %v417
      %v420 = vsel %vm418, %v417, %v415
      %v421 = vsel %vm183, 1, 0
      %v422 = vlaneseq
      %v423 = vshrl.u32 %v422, 7
      %v424 = vsub.s32 0, %v423
      %v425 = vrot.slane %v421, %v424
      %v426 = vlaneseq
      %v427 = vshrl.u32 %v426, 7
      %v428 = vsub.s32 1, %v427
      %v429 = vrot.slane %v421, %v428
      %vm430 = vcmp.eq.s32.totalorder %v425, 1
      %vm431 = vcmp.eq.s32.totalorder %v429, 1
      %v432 = vsel %vm430, %v420, 0.0
      %v433 = vsel %vm431, %v419, 0.0
      %v434 = vstv %s210
      %v435 = vstv %s259
      %v436 = vsel %vm57, %v434, %v435
      %v437 = vmul.f32 %v436, %v432
      %v438 = vmul.f32 %v436, %v433
      %v439 = vadd.f32 %v412, %v437
      %v440 = vadd.f32 %v413, %v438
      %v441 = vsel %vm189, 1, 0
      %v442 = vlaneseq
      %v443 = vshrl.u32 %v442, 7
      %v444 = vsub.s32 0, %v443
      %v445 = vrot.slane %v441, %v444
      %v446 = vlaneseq
      %v447 = vshrl.u32 %v446, 7
      %v448 = vsub.s32 1, %v447
      %v449 = vrot.slane %v441, %v448
      %vm450 = vcmp.eq.s32.totalorder %v445, 1
      %vm451 = vcmp.eq.s32.totalorder %v449, 1
      %v452 = vsel %vm450, %v358, 0.0
      %v453 = vsel %vm451, %v359, 0.0
      %v454 = vstv %s211
      %v455 = vstv %s260
      %v456 = vsel %vm57, %v454, %v455
      %v457 = vmul.f32 %v456, %v452
      %v458 = vmul.f32 %v456, %v453
      %v459 = vadd.f32 %v439, %v457
      %v460 = vadd.f32 %v440, %v458
      %461 = vrot.lane.b32.xlu0 %v358, 127
      %v462 = vpop.permute.xlu0 %461
      %463 = vrot.lane.b32.xlu0 %v359, 127
      %v464 = vpop.permute.xlu0 %463
      %vm465 = vcmp.lt.s32.totalorder %v343, 127
      %v466 = vsel %vm465, %v462, %v464
      %v467 = vsel %vm465, %v464, %v462
      %v468 = vsel %vm195, 1, 0
      %v469 = vlaneseq
      %v470 = vshrl.u32 %v469, 7
      %v471 = vsub.s32 0, %v470
      %v472 = vrot.slane %v468, %v471
      %v473 = vlaneseq
      %v474 = vshrl.u32 %v473, 7
      %v475 = vsub.s32 1, %v474
      %v476 = vrot.slane %v468, %v475
      %vm477 = vcmp.eq.s32.totalorder %v472, 1
      %vm478 = vcmp.eq.s32.totalorder %v476, 1
      %v479 = vsel %vm477, %v466, 0.0
      %v480 = vsel %vm478, %v467, 0.0
      %v481 = vstv %s212
      %v482 = vstv %s261
      %v483 = vsel %vm57, %v481, %v482
      %v484 = vmul.f32 %v483, %v479
      %v485 = vmul.f32 %v483, %v480
      %v486 = vadd.f32 %v459, %v484
      %v487 = vadd.f32 %v460, %v485
      %488 = vrot.lane.b32.xlu0 %v358, 126
      %v489 = vpop.permute.xlu0 %488
      %490 = vrot.lane.b32.xlu0 %v359, 126
      %v491 = vpop.permute.xlu0 %490
      %vm492 = vcmp.lt.s32.totalorder %v343, 126
      %v493 = vsel %vm492, %v489, %v491
      %v494 = vsel %vm492, %v491, %v489
      %v495 = vsel %vm201, 1, 0
      %v496 = vlaneseq
      %v497 = vshrl.u32 %v496, 7
      %v498 = vsub.s32 0, %v497
      %v499 = vrot.slane %v495, %v498
      %v500 = vlaneseq
      %v501 = vshrl.u32 %v500, 7
      %v502 = vsub.s32 1, %v501
      %v503 = vrot.slane %v495, %v502
      %vm504 = vcmp.eq.s32.totalorder %v499, 1
      %vm505 = vcmp.eq.s32.totalorder %v503, 1
      %v506 = vsel %vm504, %v493, 0.0
      %v507 = vsel %vm505, %v494, 0.0
      %v508 = vstv %s213
      %v509 = vstv %s262
      %v510 = vsel %vm57, %v508, %v509
      %v511 = vmul.f32 %v510, %v506
      %v512 = vmul.f32 %v510, %v507
      %v513 = vadd.f32 %v486, %v511
      %v514 = vadd.f32 %v487, %v512
      %515 = vrot.lane.b32.xlu0 %v358, 125
      %v516 = vpop.permute.xlu0 %515
      %517 = vrot.lane.b32.xlu0 %v359, 125
      %v518 = vpop.permute.xlu0 %517
      %vm519 = vcmp.lt.s32.totalorder %v343, 125
      %v520 = vsel %vm519, %v516, %v518
      %v521 = vsel %vm519, %v518, %v516
      %v522 = vsel %vm207, 1, 0
      %v523 = vlaneseq
      %v524 = vshrl.u32 %v523, 7
      %v525 = vsub.s32 0, %v524
      %v526 = vrot.slane %v522, %v525
      %v527 = vlaneseq
      %v528 = vshrl.u32 %v527, 7
      %v529 = vsub.s32 1, %v528
      %v530 = vrot.slane %v522, %v529
      %vm531 = vcmp.eq.s32.totalorder %v526, 1
      %vm532 = vcmp.eq.s32.totalorder %v530, 1
      %v533 = vsel %vm531, %v520, 0.0
      %v534 = vsel %vm532, %v521, 0.0
      %v535 = vstv %s214
      %v536 = vstv %s263
      %v537 = vsel %vm57, %v535, %v536
      %v538 = vmul.f32 %v537, %v533
      %v539 = vmul.f32 %v537, %v534
      %v540 = vadd.f32 %v513, %v538
      %v541 = vadd.f32 %v514, %v539
      %542 = vrot.lane.b32.xlu0 %v336, 32
      %v543 = vpop.permute.xlu0 %542
      %544 = vrot.lane.b32.xlu0 %v337, 32
      %v545 = vpop.permute.xlu0 %544
      %vm546 = vcmp.lt.s32.totalorder %v343, 32
      %v547 = vsel %vm546, %v543, %v545
      %v548 = vsel %vm546, %v545, %v543
      %v549 = vsel %vm174, 1, 0
      %v550 = vlaneseq
      %v551 = vshrl.u32 %v550, 7
      %v552 = vsub.s32 0, %v551
      %v553 = vrot.slane %v549, %v552
      %v554 = vlaneseq
      %v555 = vshrl.u32 %v554, 7
      %v556 = vsub.s32 1, %v555
      %v557 = vrot.slane %v549, %v556
      %vm558 = vcmp.eq.s32.totalorder %v553, 1
      %vm559 = vcmp.eq.s32.totalorder %v557, 1
      %v560 = vsel %vm558, %v548, 0.0
      %v561 = vsel %vm559, %v547, 0.0
      %562 = vrot.lane.b32.xlu0 %v560, 3
      %v563 = vpop.permute.xlu0 %562
      %564 = vrot.lane.b32.xlu0 %v561, 3
      %v565 = vpop.permute.xlu0 %564
      %v566 = vsel %vm364, %v563, %v565
      %v567 = vsel %vm364, %v565, %v563
      %v568 = vsel %vm376, %v567, 0.0
      %v569 = vsel %vm377, %v566, 0.0
      %v570 = vstv %s215
      %v571 = vstv %s264
      %v572 = vsel %vm57, %v570, %v571
      %v573 = vmul.f32 %v572, %v568
      %v574 = vmul.f32 %v572, %v569
      %v575 = vadd.f32 %v540, %v573
      %v576 = vadd.f32 %v541, %v574
      %577 = vrot.lane.b32.xlu0 %v560, 2
      %v578 = vpop.permute.xlu0 %577
      %579 = vrot.lane.b32.xlu0 %v561, 2
      %v580 = vpop.permute.xlu0 %579
      %v581 = vsel %vm391, %v578, %v580
      %v582 = vsel %vm391, %v580, %v578
      %v583 = vsel %vm403, %v582, 0.0
      %v584 = vsel %vm404, %v581, 0.0
      %v585 = vstv %s216
      %v586 = vstv %s265
      %v587 = vsel %vm57, %v585, %v586
      %v588 = vmul.f32 %v587, %v583
      %v589 = vmul.f32 %v587, %v584
      %v590 = vadd.f32 %v575, %v588
      %v591 = vadd.f32 %v576, %v589
      %592 = vrot.lane.b32.xlu0 %v560, 1
      %v593 = vpop.permute.xlu0 %592
      %594 = vrot.lane.b32.xlu0 %v561, 1
      %v595 = vpop.permute.xlu0 %594
      %v596 = vsel %vm418, %v593, %v595
      %v597 = vsel %vm418, %v595, %v593
      %v598 = vsel %vm430, %v597, 0.0
      %v599 = vsel %vm431, %v596, 0.0
      %v600 = vstv %s217
      %v601 = vstv %s266
      %v602 = vsel %vm57, %v600, %v601
      %v603 = vmul.f32 %v602, %v598
      %v604 = vmul.f32 %v602, %v599
      %v605 = vadd.f32 %v590, %v603
      %v606 = vadd.f32 %v591, %v604
      %v607 = vsel %vm450, %v560, 0.0
      %v608 = vsel %vm451, %v561, 0.0
      %v609 = vstv %s218
      %v610 = vstv %s267
      %v611 = vsel %vm57, %v609, %v610
      %v612 = vmul.f32 %v611, %v607
      %v613 = vmul.f32 %v611, %v608
      %v614 = vadd.f32 %v605, %v612
      %v615 = vadd.f32 %v606, %v613
      %616 = vrot.lane.b32.xlu0 %v560, 127
      %v617 = vpop.permute.xlu0 %616
      %618 = vrot.lane.b32.xlu0 %v561, 127
      %v619 = vpop.permute.xlu0 %618
      %v620 = vsel %vm465, %v617, %v619
      %v621 = vsel %vm465, %v619, %v617
      %v622 = vsel %vm477, %v620, 0.0
      %v623 = vsel %vm478, %v621, 0.0
      %v624 = vstv %s219
      %v625 = vstv %s268
      %v626 = vsel %vm57, %v624, %v625
      %v627 = vmul.f32 %v626, %v622
      %v628 = vmul.f32 %v626, %v623
      %v629 = vadd.f32 %v614, %v627
      %v630 = vadd.f32 %v615, %v628
      %631 = vrot.lane.b32.xlu0 %v560, 126
      %v632 = vpop.permute.xlu0 %631
      %633 = vrot.lane.b32.xlu0 %v561, 126
      %v634 = vpop.permute.xlu0 %633
      %v635 = vsel %vm492, %v632, %v634
      %v636 = vsel %vm492, %v634, %v632
      %v637 = vsel %vm504, %v635, 0.0
      %v638 = vsel %vm505, %v636, 0.0
      %v639 = vstv %s220
      %v640 = vstv %s269
      %v641 = vsel %vm57, %v639, %v640
      %v642 = vmul.f32 %v641, %v637
      %v643 = vmul.f32 %v641, %v638
      %v644 = vadd.f32 %v629, %v642
      %v645 = vadd.f32 %v630, %v643
      %646 = vrot.lane.b32.xlu0 %v560, 125
      %v647 = vpop.permute.xlu0 %646
      %648 = vrot.lane.b32.xlu0 %v561, 125
      %v649 = vpop.permute.xlu0 %648
      %v650 = vsel %vm519, %v647, %v649
      %v651 = vsel %vm519, %v649, %v647
      %v652 = vsel %vm531, %v650, 0.0
      %v653 = vsel %vm532, %v651, 0.0
      %v654 = vstv %s221
      %v655 = vstv %s270
      %v656 = vsel %vm57, %v654, %v655
      %v657 = vmul.f32 %v656, %v652
      %v658 = vmul.f32 %v656, %v653
      %v659 = vadd.f32 %v644, %v657
      %v660 = vadd.f32 %v645, %v658
      %661 = vrot.lane.b32.xlu0 %v336, 16
      %v662 = vpop.permute.xlu0 %661
      %663 = vrot.lane.b32.xlu0 %v337, 16
      %v664 = vpop.permute.xlu0 %663
      %vm665 = vcmp.lt.s32.totalorder %v343, 16
      %v666 = vsel %vm665, %v662, %v664
      %v667 = vsel %vm665, %v664, %v662
      %v668 = vsel %vm180, 1, 0
      %v669 = vlaneseq
      %v670 = vshrl.u32 %v669, 7
      %v671 = vsub.s32 0, %v670
      %v672 = vrot.slane %v668, %v671
      %v673 = vlaneseq
      %v674 = vshrl.u32 %v673, 7
      %v675 = vsub.s32 1, %v674
      %v676 = vrot.slane %v668, %v675
      %vm677 = vcmp.eq.s32.totalorder %v672, 1
      %vm678 = vcmp.eq.s32.totalorder %v676, 1
      %v679 = vsel %vm677, %v667, 0.0
      %v680 = vsel %vm678, %v666, 0.0
      %681 = vrot.lane.b32.xlu0 %v679, 3
      %v682 = vpop.permute.xlu0 %681
      %683 = vrot.lane.b32.xlu0 %v680, 3
      %v684 = vpop.permute.xlu0 %683
      %v685 = vsel %vm364, %v682, %v684
      %v686 = vsel %vm364, %v684, %v682
      %v687 = vsel %vm376, %v686, 0.0
      %v688 = vsel %vm377, %v685, 0.0
      %v689 = vstv %s222
      %v690 = vstv %s271
      %v691 = vsel %vm57, %v689, %v690
      %v692 = vmul.f32 %v691, %v687
      %v693 = vmul.f32 %v691, %v688
      %v694 = vadd.f32 %v659, %v692
      %v695 = vadd.f32 %v660, %v693
      %696 = vrot.lane.b32.xlu0 %v679, 2
      %v697 = vpop.permute.xlu0 %696
      %698 = vrot.lane.b32.xlu0 %v680, 2
      %v699 = vpop.permute.xlu0 %698
      %v700 = vsel %vm391, %v697, %v699
      %v701 = vsel %vm391, %v699, %v697
      %v702 = vsel %vm403, %v701, 0.0
      %v703 = vsel %vm404, %v700, 0.0
      %v704 = vstv %s223
      %v705 = vstv %s272
      %v706 = vsel %vm57, %v704, %v705
      %v707 = vmul.f32 %v706, %v702
      %v708 = vmul.f32 %v706, %v703
      %v709 = vadd.f32 %v694, %v707
      %v710 = vadd.f32 %v695, %v708
      %711 = vrot.lane.b32.xlu0 %v679, 1
      %v712 = vpop.permute.xlu0 %711
      %713 = vrot.lane.b32.xlu0 %v680, 1
      %v714 = vpop.permute.xlu0 %713
      %v715 = vsel %vm418, %v712, %v714
      %v716 = vsel %vm418, %v714, %v712
      %v717 = vsel %vm430, %v716, 0.0
      %v718 = vsel %vm431, %v715, 0.0
      %v719 = vstv %s224
      %v720 = vstv %s273
      %v721 = vsel %vm57, %v719, %v720
      %v722 = vmul.f32 %v721, %v717
      %v723 = vmul.f32 %v721, %v718
      %v724 = vadd.f32 %v709, %v722
      %v725 = vadd.f32 %v710, %v723
      %v726 = vsel %vm450, %v679, 0.0
      %v727 = vsel %vm451, %v680, 0.0
      %v728 = vstv %s225
      %v729 = vstv %s274
      %v730 = vsel %vm57, %v728, %v729
      %v731 = vmul.f32 %v730, %v726
      %v732 = vmul.f32 %v730, %v727
      %v733 = vadd.f32 %v724, %v731
      %v734 = vadd.f32 %v725, %v732
      %735 = vrot.lane.b32.xlu0 %v679, 127
      %v736 = vpop.permute.xlu0 %735
      %737 = vrot.lane.b32.xlu0 %v680, 127
      %v738 = vpop.permute.xlu0 %737
      %v739 = vsel %vm465, %v736, %v738
      %v740 = vsel %vm465, %v738, %v736
      %v741 = vsel %vm477, %v739, 0.0
      %v742 = vsel %vm478, %v740, 0.0
      %v743 = vstv %s226
      %v744 = vstv %s275
      %v745 = vsel %vm57, %v743, %v744
      %v746 = vmul.f32 %v745, %v741
      %v747 = vmul.f32 %v745, %v742
      %v748 = vadd.f32 %v733, %v746
      %v749 = vadd.f32 %v734, %v747
      %750 = vrot.lane.b32.xlu0 %v679, 126
      %v751 = vpop.permute.xlu0 %750
      %752 = vrot.lane.b32.xlu0 %v680, 126
      %v753 = vpop.permute.xlu0 %752
      %v754 = vsel %vm492, %v751, %v753
      %v755 = vsel %vm492, %v753, %v751
      %v756 = vsel %vm504, %v754, 0.0
      %v757 = vsel %vm505, %v755, 0.0
      %v758 = vstv %s227
      %v759 = vstv %s276
      %v760 = vsel %vm57, %v758, %v759
      %v761 = vmul.f32 %v760, %v756
      %v762 = vmul.f32 %v760, %v757
      %v763 = vadd.f32 %v748, %v761
      %v764 = vadd.f32 %v749, %v762
      %765 = vrot.lane.b32.xlu0 %v679, 125
      %v766 = vpop.permute.xlu0 %765
      %767 = vrot.lane.b32.xlu0 %v680, 125
      %v768 = vpop.permute.xlu0 %767
      %v769 = vsel %vm519, %v766, %v768
      %v770 = vsel %vm519, %v768, %v766
      %v771 = vsel %vm531, %v769, 0.0
      %v772 = vsel %vm532, %v770, 0.0
      %v773 = vstv %s228
      %v774 = vstv %s277
      %v775 = vsel %vm57, %v773, %v774
      %v776 = vmul.f32 %v775, %v771
      %v777 = vmul.f32 %v775, %v772
      %v778 = vadd.f32 %v763, %v776
      %v779 = vadd.f32 %v764, %v777
      %v780 = vsel %vm186, 1, 0
      %v781 = vlaneseq
      %v782 = vshrl.u32 %v781, 7
      %v783 = vsub.s32 0, %v782
      %v784 = vrot.slane %v780, %v783
      %v785 = vlaneseq
      %v786 = vshrl.u32 %v785, 7
      %v787 = vsub.s32 1, %v786
      %v788 = vrot.slane %v780, %v787
      %vm789 = vcmp.eq.s32.totalorder %v784, 1
      %vm790 = vcmp.eq.s32.totalorder %v788, 1
      %v791 = vsel %vm789, %v336, 0.0
      %v792 = vsel %vm790, %v337, 0.0
      %793 = vrot.lane.b32.xlu0 %v791, 3
      %v794 = vpop.permute.xlu0 %793
      %795 = vrot.lane.b32.xlu0 %v792, 3
      %v796 = vpop.permute.xlu0 %795
      %v797 = vsel %vm364, %v794, %v796
      %v798 = vsel %vm364, %v796, %v794
      %v799 = vsel %vm376, %v798, 0.0
      %v800 = vsel %vm377, %v797, 0.0
      %v801 = vstv %s229
      %v802 = vstv %s278
      %v803 = vsel %vm57, %v801, %v802
      %v804 = vmul.f32 %v803, %v799
      %v805 = vmul.f32 %v803, %v800
      %v806 = vadd.f32 %v778, %v804
      %v807 = vadd.f32 %v779, %v805
      %808 = vrot.lane.b32.xlu0 %v791, 2
      %v809 = vpop.permute.xlu0 %808
      %810 = vrot.lane.b32.xlu0 %v792, 2
      %v811 = vpop.permute.xlu0 %810
      %v812 = vsel %vm391, %v809, %v811
      %v813 = vsel %vm391, %v811, %v809
      %v814 = vsel %vm403, %v813, 0.0
      %v815 = vsel %vm404, %v812, 0.0
      %v816 = vstv %s230
      %v817 = vstv %s279
      %v818 = vsel %vm57, %v816, %v817
      %v819 = vmul.f32 %v818, %v814
      %v820 = vmul.f32 %v818, %v815
      %v821 = vadd.f32 %v806, %v819
      %v822 = vadd.f32 %v807, %v820
      %823 = vrot.lane.b32.xlu0 %v791, 1
      %v824 = vpop.permute.xlu0 %823
      %825 = vrot.lane.b32.xlu0 %v792, 1
      %v826 = vpop.permute.xlu0 %825
      %v827 = vsel %vm418, %v824, %v826
      %v828 = vsel %vm418, %v826, %v824
      %v829 = vsel %vm430, %v828, 0.0
      %v830 = vsel %vm431, %v827, 0.0
      %v831 = vstv %s231
      %v832 = vstv %s280
      %v833 = vsel %vm57, %v831, %v832
      %v834 = vmul.f32 %v833, %v829
      %v835 = vmul.f32 %v833, %v830
      %v836 = vadd.f32 %v821, %v834
      %v837 = vadd.f32 %v822, %v835
      %v838 = vsel %vm450, %v791, 0.0
      %v839 = vsel %vm451, %v792, 0.0
      %v840 = vstv %s232
      %v841 = vstv %s281
      %v842 = vsel %vm57, %v840, %v841
      %v843 = vmul.f32 %v842, %v838
      %v844 = vmul.f32 %v842, %v839
      %v845 = vadd.f32 %v836, %v843
      %v846 = vadd.f32 %v837, %v844
      %847 = vrot.lane.b32.xlu0 %v791, 127
      %v848 = vpop.permute.xlu0 %847
      %849 = vrot.lane.b32.xlu0 %v792, 127
      %v850 = vpop.permute.xlu0 %849
      %v851 = vsel %vm465, %v848, %v850
      %v852 = vsel %vm465, %v850, %v848
      %v853 = vsel %vm477, %v851, 0.0
      %v854 = vsel %vm478, %v852, 0.0
      %v855 = vstv %s233
      %v856 = vstv %s282
      %v857 = vsel %vm57, %v855, %v856
      %v858 = vmul.f32 %v857, %v853
      %v859 = vmul.f32 %v857, %v854
      %v860 = vadd.f32 %v845, %v858
      %v861 = vadd.f32 %v846, %v859
      %862 = vrot.lane.b32.xlu0 %v791, 126
      %v863 = vpop.permute.xlu0 %862
      %864 = vrot.lane.b32.xlu0 %v792, 126
      %v865 = vpop.permute.xlu0 %864
      %v866 = vsel %vm492, %v863, %v865
      %v867 = vsel %vm492, %v865, %v863
      %v868 = vsel %vm504, %v866, 0.0
      %v869 = vsel %vm505, %v867, 0.0
      %v870 = vstv %s234
      %v871 = vstv %s283
      %v872 = vsel %vm57, %v870, %v871
      %v873 = vmul.f32 %v872, %v868
      %v874 = vmul.f32 %v872, %v869
      %v875 = vadd.f32 %v860, %v873
      %v876 = vadd.f32 %v861, %v874
      %877 = vrot.lane.b32.xlu0 %v791, 125
      %v878 = vpop.permute.xlu0 %877
      %879 = vrot.lane.b32.xlu0 %v792, 125
      %v880 = vpop.permute.xlu0 %879
      %v881 = vsel %vm519, %v878, %v880
      %v882 = vsel %vm519, %v880, %v878
      %v883 = vsel %vm531, %v881, 0.0
      %v884 = vsel %vm532, %v882, 0.0
      %v885 = vstv %s235
      %v886 = vstv %s284
      %v887 = vsel %vm57, %v885, %v886
      %v888 = vmul.f32 %v887, %v883
      %v889 = vmul.f32 %v887, %v884
      %v890 = vadd.f32 %v875, %v888
      %v891 = vadd.f32 %v876, %v889
      %892 = vrot.lane.b32.xlu0 %v336, 112
      %v893 = vpop.permute.xlu0 %892
      %894 = vrot.lane.b32.xlu0 %v337, 112
      %v895 = vpop.permute.xlu0 %894
      %vm896 = vcmp.lt.s32.totalorder %v343, 112
      %v897 = vsel %vm896, %v893, %v895
      %v898 = vsel %vm896, %v895, %v893
      %v899 = vsel %vm192, 1, 0
      %v900 = vlaneseq
      %v901 = vshrl.u32 %v900, 7
      %v902 = vsub.s32 0, %v901
      %v903 = vrot.slane %v899, %v902
      %v904 = vlaneseq
      %v905 = vshrl.u32 %v904, 7
      %v906 = vsub.s32 1, %v905
      %v907 = vrot.slane %v899, %v906
      %vm908 = vcmp.eq.s32.totalorder %v903, 1
      %vm909 = vcmp.eq.s32.totalorder %v907, 1
      %v910 = vsel %vm908, %v897, 0.0
      %v911 = vsel %vm909, %v898, 0.0
      %912 = vrot.lane.b32.xlu0 %v910, 3
      %v913 = vpop.permute.xlu0 %912
      %914 = vrot.lane.b32.xlu0 %v911, 3
      %v915 = vpop.permute.xlu0 %914
      %v916 = vsel %vm364, %v913, %v915
      %v917 = vsel %vm364, %v915, %v913
      %v918 = vsel %vm376, %v917, 0.0
      %v919 = vsel %vm377, %v916, 0.0
      %v920 = vstv %s236
      %v921 = vstv %s285
      %v922 = vsel %vm57, %v920, %v921
      %v923 = vmul.f32 %v922, %v918
      %v924 = vmul.f32 %v922, %v919
      %v925 = vadd.f32 %v890, %v923
      %v926 = vadd.f32 %v891, %v924
      %927 = vrot.lane.b32.xlu0 %v910, 2
      %v928 = vpop.permute.xlu0 %927
      %929 = vrot.lane.b32.xlu0 %v911, 2
      %v930 = vpop.permute.xlu0 %929
      %v931 = vsel %vm391, %v928, %v930
      %v932 = vsel %vm391, %v930, %v928
      %v933 = vsel %vm403, %v932, 0.0
      %v934 = vsel %vm404, %v931, 0.0
      %v935 = vstv %s237
      %v936 = vstv %s286
      %v937 = vsel %vm57, %v935, %v936
      %v938 = vmul.f32 %v937, %v933
      %v939 = vmul.f32 %v937, %v934
      %v940 = vadd.f32 %v925, %v938
      %v941 = vadd.f32 %v926, %v939
      %942 = vrot.lane.b32.xlu0 %v910, 1
      %v943 = vpop.permute.xlu0 %942
      %944 = vrot.lane.b32.xlu0 %v911, 1
      %v945 = vpop.permute.xlu0 %944
      %v946 = vsel %vm418, %v943, %v945
      %v947 = vsel %vm418, %v945, %v943
      %v948 = vsel %vm430, %v947, 0.0
      %v949 = vsel %vm431, %v946, 0.0
      %v950 = vstv %s238
      %v951 = vstv %s287
      %v952 = vsel %vm57, %v950, %v951
      %v953 = vmul.f32 %v952, %v948
      %v954 = vmul.f32 %v952, %v949
      %v955 = vadd.f32 %v940, %v953
      %v956 = vadd.f32 %v941, %v954
      %v957 = vsel %vm450, %v910, 0.0
      %v958 = vsel %vm451, %v911, 0.0
      %v959 = vstv %s239
      %v960 = vstv %s288
      %v961 = vsel %vm57, %v959, %v960
      %v962 = vmul.f32 %v961, %v957
      %v963 = vmul.f32 %v961, %v958
      %v964 = vadd.f32 %v955, %v962
      %v965 = vadd.f32 %v956, %v963
      %966 = vrot.lane.b32.xlu0 %v910, 127
      %v967 = vpop.permute.xlu0 %966
      %968 = vrot.lane.b32.xlu0 %v911, 127
      %v969 = vpop.permute.xlu0 %968
      %v970 = vsel %vm465, %v967, %v969
      %v971 = vsel %vm465, %v969, %v967
      %v972 = vsel %vm477, %v970, 0.0
      %v973 = vsel %vm478, %v971, 0.0
      %v974 = vstv %s240
      %v975 = vstv %s289
      %v976 = vsel %vm57, %v974, %v975
      %v977 = vmul.f32 %v976, %v972
      %v978 = vmul.f32 %v976, %v973
      %v979 = vadd.f32 %v964, %v977
      %v980 = vadd.f32 %v965, %v978
      %981 = vrot.lane.b32.xlu0 %v910, 126
      %v982 = vpop.permute.xlu0 %981
      %983 = vrot.lane.b32.xlu0 %v911, 126
      %v984 = vpop.permute.xlu0 %983
      %v985 = vsel %vm492, %v982, %v984
      %v986 = vsel %vm492, %v984, %v982
      %v987 = vsel %vm504, %v985, 0.0
      %v988 = vsel %vm505, %v986, 0.0
      %v989 = vstv %s241
      %v990 = vstv %s290
      %v991 = vsel %vm57, %v989, %v990
      %v992 = vmul.f32 %v991, %v987
      %v993 = vmul.f32 %v991, %v988
      %v994 = vadd.f32 %v979, %v992
      %v995 = vadd.f32 %v980, %v993
      %996 = vrot.lane.b32.xlu0 %v910, 125
      %v997 = vpop.permute.xlu0 %996
      %998 = vrot.lane.b32.xlu0 %v911, 125
      %v999 = vpop.permute.xlu0 %998
      %v1000 = vsel %vm519, %v997, %v999
      %v1001 = vsel %vm519, %v999, %v997
      %v1002 = vsel %vm531, %v1000, 0.0
      %v1003 = vsel %vm532, %v1001, 0.0
      %v1004 = vstv %s242
      %v1005 = vstv %s291
      %v1006 = vsel %vm57, %v1004, %v1005
      %v1007 = vmul.f32 %v1006, %v1002
      %v1008 = vmul.f32 %v1006, %v1003
      %v1009 = vadd.f32 %v994, %v1007
      %v1010 = vadd.f32 %v995, %v1008
      %1011 = vrot.lane.b32.xlu0 %v336, 96
      %v1012 = vpop.permute.xlu0 %1011
      %1013 = vrot.lane.b32.xlu0 %v337, 96
      %v1014 = vpop.permute.xlu0 %1013
      %vm1015 = vcmp.lt.s32.totalorder %v343, 96
      %v1016 = vsel %vm1015, %v1012, %v1014
      %v1017 = vsel %vm1015, %v1014, %v1012
      %v1018 = vsel %vm198, 1, 0
      %v1019 = vlaneseq
      %v1020 = vshrl.u32 %v1019, 7
      %v1021 = vsub.s32 0, %v1020
      %v1022 = vrot.slane %v1018, %v1021
      %v1023 = vlaneseq
      %v1024 = vshrl.u32 %v1023, 7
      %v1025 = vsub.s32 1, %v1024
      %v1026 = vrot.slane %v1018, %v1025
      %vm1027 = vcmp.eq.s32.totalorder %v1022, 1
      %vm1028 = vcmp.eq.s32.totalorder %v1026, 1
      %v1029 = vsel %vm1027, %v1016, 0.0
      %v1030 = vsel %vm1028, %v1017, 0.0
      %1031 = vrot.lane.b32.xlu0 %v1029, 3
      %v1032 = vpop.permute.xlu0 %1031
      %1033 = vrot.lane.b32.xlu0 %v1030, 3
      %v1034 = vpop.permute.xlu0 %1033
      %v1035 = vsel %vm364, %v1032, %v1034
      %v1036 = vsel %vm364, %v1034, %v1032
      %v1037 = vsel %vm376, %v1036, 0.0
      %v1038 = vsel %vm377, %v1035, 0.0
      %v1039 = vstv %s243
      %v1040 = vstv %s292
      %v1041 = vsel %vm57, %v1039, %v1040
      %v1042 = vmul.f32 %v1041, %v1037
      %v1043 = vmul.f32 %v1041, %v1038
      %v1044 = vadd.f32 %v1009, %v1042
      %v1045 = vadd.f32 %v1010, %v1043
      %1046 = vrot.lane.b32.xlu0 %v1029, 2
      %v1047 = vpop.permute.xlu0 %1046
      %1048 = vrot.lane.b32.xlu0 %v1030, 2
      %v1049 = vpop.permute.xlu0 %1048
      %v1050 = vsel %vm391, %v1047, %v1049
      %v1051 = vsel %vm391, %v1049, %v1047
      %v1052 = vsel %vm403, %v1051, 0.0
      %v1053 = vsel %vm404, %v1050, 0.0
      %v1054 = vstv %s244
      %v1055 = vstv %s293
      %v1056 = vsel %vm57, %v1054, %v1055
      %v1057 = vmul.f32 %v1056, %v1052
      %v1058 = vmul.f32 %v1056, %v1053
      %v1059 = vadd.f32 %v1044, %v1057
      %v1060 = vadd.f32 %v1045, %v1058
      %1061 = vrot.lane.b32.xlu0 %v1029, 1
      %v1062 = vpop.permute.xlu0 %1061
      %1063 = vrot.lane.b32.xlu0 %v1030, 1
      %v1064 = vpop.permute.xlu0 %1063
      %v1065 = vsel %vm418, %v1062, %v1064
      %v1066 = vsel %vm418, %v1064, %v1062
      %v1067 = vsel %vm430, %v1066, 0.0
      %v1068 = vsel %vm431, %v1065, 0.0
      %v1069 = vstv %s245
      %v1070 = vstv %s294
      %v1071 = vsel %vm57, %v1069, %v1070
      %v1072 = vmul.f32 %v1071, %v1067
      %v1073 = vmul.f32 %v1071, %v1068
      %v1074 = vadd.f32 %v1059, %v1072
      %v1075 = vadd.f32 %v1060, %v1073
      %v1076 = vsel %vm450, %v1029, 0.0
      %v1077 = vsel %vm451, %v1030, 0.0
      %v1078 = vstv %s246
      %v1079 = vstv %s295
      %v1080 = vsel %vm57, %v1078, %v1079
      %v1081 = vmul.f32 %v1080, %v1076
      %v1082 = vmul.f32 %v1080, %v1077
      %v1083 = vadd.f32 %v1074, %v1081
      %v1084 = vadd.f32 %v1075, %v1082
      %1085 = vrot.lane.b32.xlu0 %v1029, 127
      %v1086 = vpop.permute.xlu0 %1085
      %1087 = vrot.lane.b32.xlu0 %v1030, 127
      %v1088 = vpop.permute.xlu0 %1087
      %v1089 = vsel %vm465, %v1086, %v1088
      %v1090 = vsel %vm465, %v1088, %v1086
      %v1091 = vsel %vm477, %v1089, 0.0
      %v1092 = vsel %vm478, %v1090, 0.0
      %v1093 = vstv %s247
      %v1094 = vstv %s296
      %v1095 = vsel %vm57, %v1093, %v1094
      %v1096 = vmul.f32 %v1095, %v1091
      %v1097 = vmul.f32 %v1095, %v1092
      %v1098 = vadd.f32 %v1083, %v1096
      %v1099 = vadd.f32 %v1084, %v1097
      %1100 = vrot.lane.b32.xlu0 %v1029, 126
      %v1101 = vpop.permute.xlu0 %1100
      %1102 = vrot.lane.b32.xlu0 %v1030, 126
      %v1103 = vpop.permute.xlu0 %1102
      %v1104 = vsel %vm492, %v1101, %v1103
      %v1105 = vsel %vm492, %v1103, %v1101
      %v1106 = vsel %vm504, %v1104, 0.0
      %v1107 = vsel %vm505, %v1105, 0.0
      %v1108 = vstv %s248
      %v1109 = vstv %s297
      %v1110 = vsel %vm57, %v1108, %v1109
      %v1111 = vmul.f32 %v1110, %v1106
      %v1112 = vmul.f32 %v1110, %v1107
      %v1113 = vadd.f32 %v1098, %v1111
      %v1114 = vadd.f32 %v1099, %v1112
      %1115 = vrot.lane.b32.xlu0 %v1029, 125
      %v1116 = vpop.permute.xlu0 %1115
      %1117 = vrot.lane.b32.xlu0 %v1030, 125
      %v1118 = vpop.permute.xlu0 %1117
      %v1119 = vsel %vm519, %v1116, %v1118
      %v1120 = vsel %vm519, %v1118, %v1116
      %v1121 = vsel %vm531, %v1119, 0.0
      %v1122 = vsel %vm532, %v1120, 0.0
      %v1123 = vstv %s249
      %v1124 = vstv %s298
      %v1125 = vsel %vm57, %v1123, %v1124
      %v1126 = vmul.f32 %v1125, %v1121
      %v1127 = vmul.f32 %v1125, %v1122
      %v1128 = vadd.f32 %v1113, %v1126
      %v1129 = vadd.f32 %v1114, %v1127
      %1130 = vrot.lane.b32.xlu0 %v336, 80
      %v1131 = vpop.permute.xlu0 %1130
      %1132 = vrot.lane.b32.xlu0 %v337, 80
      %v1133 = vpop.permute.xlu0 %1132
      %vm1134 = vcmp.lt.s32.totalorder %v343, 80
      %v1135 = vsel %vm1134, %v1131, %v1133
      %v1136 = vsel %vm1134, %v1133, %v1131
      %v1137 = vsel %vm204, 1, 0
      %v1138 = vlaneseq
      %v1139 = vshrl.u32 %v1138, 7
      %v1140 = vsub.s32 0, %v1139
      %v1141 = vrot.slane %v1137, %v1140
      %v1142 = vlaneseq
      %v1143 = vshrl.u32 %v1142, 7
      %v1144 = vsub.s32 1, %v1143
      %v1145 = vrot.slane %v1137, %v1144
      %vm1146 = vcmp.eq.s32.totalorder %v1141, 1
      %vm1147 = vcmp.eq.s32.totalorder %v1145, 1
      %v1148 = vsel %vm1146, %v1135, 0.0
      %v1149 = vsel %vm1147, %v1136, 0.0
      %1150 = vrot.lane.b32.xlu0 %v1148, 3
      %v1151 = vpop.permute.xlu0 %1150
      %1152 = vrot.lane.b32.xlu0 %v1149, 3
      %v1153 = vpop.permute.xlu0 %1152
      %v1154 = vsel %vm364, %v1151, %v1153
      %v1155 = vsel %vm364, %v1153, %v1151
      %v1156 = vsel %vm376, %v1155, 0.0
      %v1157 = vsel %vm377, %v1154, 0.0
      %v1158 = vstv %s250
      %v1159 = vstv %s299
      %v1160 = vsel %vm57, %v1158, %v1159
      %v1161 = vmul.f32 %v1160, %v1156
      %v1162 = vmul.f32 %v1160, %v1157
      %v1163 = vadd.f32 %v1128, %v1161
      %v1164 = vadd.f32 %v1129, %v1162
      %1165 = vrot.lane.b32.xlu0 %v1148, 2
      %v1166 = vpop.permute.xlu0 %1165
      %1167 = vrot.lane.b32.xlu0 %v1149, 2
      %v1168 = vpop.permute.xlu0 %1167
      %v1169 = vsel %vm391, %v1166, %v1168
      %v1170 = vsel %vm391, %v1168, %v1166
      %v1171 = vsel %vm403, %v1170, 0.0
      %v1172 = vsel %vm404, %v1169, 0.0
      %v1173 = vstv %s251
      %v1174 = vstv %s300
      %v1175 = vsel %vm57, %v1173, %v1174
      %v1176 = vmul.f32 %v1175, %v1171
      %v1177 = vmul.f32 %v1175, %v1172
      %v1178 = vadd.f32 %v1163, %v1176
      %v1179 = vadd.f32 %v1164, %v1177
      %1180 = vrot.lane.b32.xlu0 %v1148, 1
      %v1181 = vpop.permute.xlu0 %1180
      %1182 = vrot.lane.b32.xlu0 %v1149, 1
      %v1183 = vpop.permute.xlu0 %1182
      %v1184 = vsel %vm418, %v1181, %v1183
      %v1185 = vsel %vm418, %v1183, %v1181
      %v1186 = vsel %vm430, %v1185, 0.0
      %v1187 = vsel %vm431, %v1184, 0.0
      %v1188 = vstv %s252
      %v1189 = vstv %s301
      %v1190 = vsel %vm57, %v1188, %v1189
      %v1191 = vmul.f32 %v1190, %v1186
      %v1192 = vmul.f32 %v1190, %v1187
      %v1193 = vadd.f32 %v1178, %v1191
      %v1194 = vadd.f32 %v1179, %v1192
      %v1195 = vsel %vm450, %v1148, 0.0
      %v1196 = vsel %vm451, %v1149, 0.0
      %v1197 = vstv %s253
      %v1198 = vstv %s302
      %v1199 = vsel %vm57, %v1197, %v1198
      %v1200 = vmul.f32 %v1199, %v1195
      %v1201 = vmul.f32 %v1199, %v1196
      %v1202 = vadd.f32 %v1193, %v1200
      %v1203 = vadd.f32 %v1194, %v1201
      %1204 = vrot.lane.b32.xlu0 %v1148, 127
      %v1205 = vpop.permute.xlu0 %1204
      %1206 = vrot.lane.b32.xlu0 %v1149, 127
      %v1207 = vpop.permute.xlu0 %1206
      %v1208 = vsel %vm465, %v1205, %v1207
      %v1209 = vsel %vm465, %v1207, %v1205
      %v1210 = vsel %vm477, %v1208, 0.0
      %v1211 = vsel %vm478, %v1209, 0.0
      %v1212 = vstv %s254
      %v1213 = vstv %s303
      %v1214 = vsel %vm57, %v1212, %v1213
      %v1215 = vmul.f32 %v1214, %v1210
      %v1216 = vmul.f32 %v1214, %v1211
      %v1217 = vadd.f32 %v1202, %v1215
      %v1218 = vadd.f32 %v1203, %v1216
      %1219 = vrot.lane.b32.xlu0 %v1148, 126
      %v1220 = vpop.permute.xlu0 %1219
      %1221 = vrot.lane.b32.xlu0 %v1149, 126
      %v1222 = vpop.permute.xlu0 %1221
      %v1223 = vsel %vm492, %v1220, %v1222
      %v1224 = vsel %vm492, %v1222, %v1220
      %v1225 = vsel %vm504, %v1223, 0.0
      %v1226 = vsel %vm505, %v1224, 0.0
      %v1227 = vstv %s255
      %v1228 = vstv %s304
      %v1229 = vsel %vm57, %v1227, %v1228
      %v1230 = vmul.f32 %v1229, %v1225
      %v1231 = vmul.f32 %v1229, %v1226
      %v1232 = vadd.f32 %v1217, %v1230
      %v1233 = vadd.f32 %v1218, %v1231
      %1234 = vrot.lane.b32.xlu0 %v1148, 125
      %v1235 = vpop.permute.xlu0 %1234
      %1236 = vrot.lane.b32.xlu0 %v1149, 125
      %v1237 = vpop.permute.xlu0 %1236
      %v1238 = vsel %vm519, %v1235, %v1237
      %v1239 = vsel %vm519, %v1237, %v1235
      %v1240 = vsel %vm531, %v1238, 0.0
      %v1241 = vsel %vm532, %v1239, 0.0
      %v1242 = vstv %s256
      %v1243 = vstv %s305
      %v1244 = vsel %vm57, %v1242, %v1243
      %v1245 = vmul.f32 %v1244, %v1240
      %v1246 = vmul.f32 %v1244, %v1241
      %v1247 = vadd.f32 %v1232, %v1245
      %v1248 = vadd.f32 %v1233, %v1246
      %vm1249 = vcmask 1041408
      %v1250 = vsel %vm1249, %v1247, 0.0
      %v1251 = vrot.slane %v1250, 4
      %v1252 = vadd.f32 %v1250, %v1251
      %v1253 = vrot.slane %v1252, 2
      %v1254 = vadd.f32 %v1252, %v1253
      %v1255 = vrot.slane %v1254, 1
      %v1256 = vadd.f32 %v1254, %v1255
      %v1257 = vsel %vm1249, %v1248, 0.0
      %v1258 = vrot.slane %v1257, 4
      %v1259 = vadd.f32 %v1257, %v1258
      %v1260 = vrot.slane %v1259, 2
      %v1261 = vadd.f32 %v1259, %v1260
      %v1262 = vrot.slane %v1261, 1
      %v1263 = vadd.f32 %v1261, %v1262
      %v1264 = vxor.u32 %v1256, 2147483648
      %v1265 = vxor.u32 %v1263, 2147483648
      %v1266 = vmul.f32 %v1264, 1.442695
      %v1267 = vpow.pop %v1266
      %v1268 = vmul.f32 %v1265, 1.442695
      %v1269 = vpow.pop %v1268
      %v1270 = vadd.f32 %v1267, 1.0
      %v1271 = vadd.f32 %v1269, 1.0
      %v1272 = vrcp.pop %v1270
      %v1273 = vmul.f32 1.0, %v1272
      %v1274 = vrcp.pop %v1271
      %v1275 = vmul.f32 1.0, %v1274
      %v1278 = vcombine.low %v1273, %v1275
      %v1280 = vunpack.c.l.s4 1966171168
      %v1281 = vunpack.c.0.s8 %v1280
      %v1282 = vlaneseq
      %v1283 = vshrl.u32 %v1282, 7
      %v1284 = vsub.s32 %v1281, %v1283
      %v1285 = vrot.slane %v1278, %v1284
      %v1287 = vunpack.c.l.s4 1966171168
      %v1288 = vunpack.c.0.s8 %v1287
      %v1289 = vlaneseq
      %v1290 = vshrl.u32 %v1289, 7
      %v1291 = vsub.s32 %v1288, %v1290
      %v1292 = vrot.slane %v1285, %v1291
      %v1294 = vlaneseq
      %vm1295 = vcmp.ge.s32.totalorder %v1294, 0
      %vm1296 = vcmp.lt.s32.totalorder %v1294, 256
      %vm1297 = vmand %vm1295, %vm1296
      %1298 = vst.msk [vmem:[#allocation11] sm:$0x3] %vm1297, %v1292
      %v1299 = vld [vmem:[%s109] sm:$0xff]
      %v1300 = vld [vmem:[%s109 + $0x8] sm:$0xff]
      %v1301 = vrot.slane %v1299, 4
      %v1302 = vadd.f32 %v1299, %v1301
      %v1303 = vrot.slane %v1302, 2
      %v1304 = vadd.f32 %v1302, %v1303
      %v1305 = vrot.slane %v1304, 1
      %v1306 = vadd.f32 %v1304, %v1305
      %v1307 = vrot.slane %v1300, 4
      %v1308 = vadd.f32 %v1300, %v1307
      %v1309 = vrot.slane %v1308, 2
      %v1310 = vadd.f32 %v1308, %v1309
      %v1311 = vrot.slane %v1310, 1
      %v1312 = vadd.f32 %v1310, %v1311
      %v1313 = vmul.f32 %v1306, 0.25
      %v1314 = vmul.f32 %v1312, 0.25
      %v1315 = vld [vmem:[%s112] sm:$0xff]
      %v1316 = vld [vmem:[%s112 + $0x8] sm:$0xff]
      %v1317 = vrot.slane %v1315, 4
      %v1318 = vmax.f32 %v1315, %v1317
      %v1319 = vrot.slane %v1318, 2
      %v1320 = vmax.f32 %v1318, %v1319
      %v1321 = vrot.slane %v1320, 1
      %v1322 = vmax.f32 %v1320, %v1321
      %v1323 = vrot.slane %v1316, 4
      %v1324 = vmax.f32 %v1316, %v1323
      %v1325 = vrot.slane %v1324, 2
      %v1326 = vmax.f32 %v1324, %v1325
      %v1327 = vrot.slane %v1326, 1
      %v1328 = vmax.f32 %v1326, %v1327
      %v1329 = vsel %vm98, %v1313, %v1322
      %v1330 = vsel %vm98, %v1314, %v1328
      %1331 = vrot.lane.b32.xlu0 %v1329, 48
      %v1332 = vpop.permute.xlu0 %1331
      %1333 = vrot.lane.b32.xlu0 %v1330, 48
      %v1334 = vpop.permute.xlu0 %1333
      %v1335 = vsel %vm344, %v1332, %v1334
      %v1336 = vsel %vm344, %v1334, %v1332
      %v1337 = vsel %vm356, %v1336, 0.0
      %v1338 = vsel %vm357, %v1335, 0.0
      %1339 = vrot.lane.b32.xlu0 %v1337, 3
      %v1340 = vpop.permute.xlu0 %1339
      %1341 = vrot.lane.b32.xlu0 %v1338, 3
      %v1342 = vpop.permute.xlu0 %1341
      %v1343 = vsel %vm364, %v1340, %v1342
      %v1344 = vsel %vm364, %v1342, %v1340
      %v1345 = vsel %vm376, %v1344, 0.0
      %v1346 = vsel %vm377, %v1343, 0.0
      %v1347 = vmul.f32 %v382, %v1345
      %v1348 = vmul.f32 %v382, %v1346
      %v1349 = vadd.f32 %v1347, 0.0
      %v1350 = vadd.f32 %v1348, 0.0
      %1351 = vrot.lane.b32.xlu0 %v1337, 2
      %v1352 = vpop.permute.xlu0 %1351
      %1353 = vrot.lane.b32.xlu0 %v1338, 2
      %v1354 = vpop.permute.xlu0 %1353
      %v1355 = vsel %vm391, %v1352, %v1354
      %v1356 = vsel %vm391, %v1354, %v1352
      %v1357 = vsel %vm403, %v1356, 0.0
      %v1358 = vsel %vm404, %v1355, 0.0
      %v1359 = vmul.f32 %v409, %v1357
      %v1360 = vmul.f32 %v409, %v1358
      %v1361 = vadd.f32 %v1349, %v1359
      %v1362 = vadd.f32 %v1350, %v1360
      %1363 = vrot.lane.b32.xlu0 %v1337, 1
      %v1364 = vpop.permute.xlu0 %1363
      %1365 = vrot.lane.b32.xlu0 %v1338, 1
      %v1366 = vpop.permute.xlu0 %1365
      %v1367 = vsel %vm418, %v1364, %v1366
      %v1368 = vsel %vm418, %v1366, %v1364
      %v1369 = vsel %vm430, %v1368, 0.0
      %v1370 = vsel %vm431, %v1367, 0.0
      %v1371 = vmul.f32 %v436, %v1369
      %v1372 = vmul.f32 %v436, %v1370
      %v1373 = vadd.f32 %v1361, %v1371
      %v1374 = vadd.f32 %v1362, %v1372
      %v1375 = vsel %vm450, %v1337, 0.0
      %v1376 = vsel %vm451, %v1338, 0.0
      %v1377 = vmul.f32 %v456, %v1375
      %v1378 = vmul.f32 %v456, %v1376
      %v1379 = vadd.f32 %v1373, %v1377
      %v1380 = vadd.f32 %v1374, %v1378
      %1381 = vrot.lane.b32.xlu0 %v1337, 127
      %v1382 = vpop.permute.xlu0 %1381
      %1383 = vrot.lane.b32.xlu0 %v1338, 127
      %v1384 = vpop.permute.xlu0 %1383
      %v1385 = vsel %vm465, %v1382, %v1384
      %v1386 = vsel %vm465, %v1384, %v1382
      %v1387 = vsel %vm477, %v1385, 0.0
      %v1388 = vsel %vm478, %v1386, 0.0
      %v1389 = vmul.f32 %v483, %v1387
      %v1390 = vmul.f32 %v483, %v1388
      %v1391 = vadd.f32 %v1379, %v1389
      %v1392 = vadd.f32 %v1380, %v1390
      %1393 = vrot.lane.b32.xlu0 %v1337, 126
      %v1394 = vpop.permute.xlu0 %1393
      %1395 = vrot.lane.b32.xlu0 %v1338, 126
      %v1396 = vpop.permute.xlu0 %1395
      %v1397 = vsel %vm492, %v1394, %v1396
      %v1398 = vsel %vm492, %v1396, %v1394
      %v1399 = vsel %vm504, %v1397, 0.0
      %v1400 = vsel %vm505, %v1398, 0.0
      %v1401 = vmul.f32 %v510, %v1399
      %v1402 = vmul.f32 %v510, %v1400
      %v1403 = vadd.f32 %v1391, %v1401
      %v1404 = vadd.f32 %v1392, %v1402
      %1405 = vrot.lane.b32.xlu0 %v1337, 125
      %v1406 = vpop.permute.xlu0 %1405
      %1407 = vrot.lane.b32.xlu0 %v1338, 125
      %v1408 = vpop.permute.xlu0 %1407
      %v1409 = vsel %vm519, %v1406, %v1408
      %v1410 = vsel %vm519, %v1408, %v1406
      %v1411 = vsel %vm531, %v1409, 0.0
      %v1412 = vsel %vm532, %v1410, 0.0
      %v1413 = vmul.f32 %v537, %v1411
      %v1414 = vmul.f32 %v537, %v1412
      %v1415 = vadd.f32 %v1403, %v1413
      %v1416 = vadd.f32 %v1404, %v1414
      %1417 = vrot.lane.b32.xlu0 %v1329, 32
      %v1418 = vpop.permute.xlu0 %1417
      %1419 = vrot.lane.b32.xlu0 %v1330, 32
      %v1420 = vpop.permute.xlu0 %1419
      %v1421 = vsel %vm546, %v1418, %v1420
      %v1422 = vsel %vm546, %v1420, %v1418
      %v1423 = vsel %vm558, %v1422, 0.0
      %v1424 = vsel %vm559, %v1421, 0.0
      %1425 = vrot.lane.b32.xlu0 %v1423, 3
      %v1426 = vpop.permute.xlu0 %1425
      %1427 = vrot.lane.b32.xlu0 %v1424, 3
      %v1428 = vpop.permute.xlu0 %1427
      %v1429 = vsel %vm364, %v1426, %v1428
      %v1430 = vsel %vm364, %v1428, %v1426
      %v1431 = vsel %vm376, %v1430, 0.0
      %v1432 = vsel %vm377, %v1429, 0.0
      %v1433 = vmul.f32 %v572, %v1431
      %v1434 = vmul.f32 %v572, %v1432
      %v1435 = vadd.f32 %v1415, %v1433
      %v1436 = vadd.f32 %v1416, %v1434
      %1437 = vrot.lane.b32.xlu0 %v1423, 2
      %v1438 = vpop.permute.xlu0 %1437
      %1439 = vrot.lane.b32.xlu0 %v1424, 2
      %v1440 = vpop.permute.xlu0 %1439
      %v1441 = vsel %vm391, %v1438, %v1440
      %v1442 = vsel %vm391, %v1440, %v1438
      %v1443 = vsel %vm403, %v1442, 0.0
      %v1444 = vsel %vm404, %v1441, 0.0
      %v1445 = vmul.f32 %v587, %v1443
      %v1446 = vmul.f32 %v587, %v1444
      %v1447 = vadd.f32 %v1435, %v1445
      %v1448 = vadd.f32 %v1436, %v1446
      %1449 = vrot.lane.b32.xlu0 %v1423, 1
      %v1450 = vpop.permute.xlu0 %1449
      %1451 = vrot.lane.b32.xlu0 %v1424, 1
      %v1452 = vpop.permute.xlu0 %1451
      %v1453 = vsel %vm418, %v1450, %v1452
      %v1454 = vsel %vm418, %v1452, %v1450
      %v1455 = vsel %vm430, %v1454, 0.0
      %v1456 = vsel %vm431, %v1453, 0.0
      %v1457 = vmul.f32 %v602, %v1455
      %v1458 = vmul.f32 %v602, %v1456
      %v1459 = vadd.f32 %v1447, %v1457
      %v1460 = vadd.f32 %v1448, %v1458
      %v1461 = vsel %vm450, %v1423, 0.0
      %v1462 = vsel %vm451, %v1424, 0.0
      %v1463 = vmul.f32 %v611, %v1461
      %v1464 = vmul.f32 %v611, %v1462
      %v1465 = vadd.f32 %v1459, %v1463
      %v1466 = vadd.f32 %v1460, %v1464
      %1467 = vrot.lane.b32.xlu0 %v1423, 127
      %v1468 = vpop.permute.xlu0 %1467
      %1469 = vrot.lane.b32.xlu0 %v1424, 127
      %v1470 = vpop.permute.xlu0 %1469
      %v1471 = vsel %vm465, %v1468, %v1470
      %v1472 = vsel %vm465, %v1470, %v1468
      %v1473 = vsel %vm477, %v1471, 0.0
      %v1474 = vsel %vm478, %v1472, 0.0
      %v1475 = vmul.f32 %v626, %v1473
      %v1476 = vmul.f32 %v626, %v1474
      %v1477 = vadd.f32 %v1465, %v1475
      %v1478 = vadd.f32 %v1466, %v1476
      %1479 = vrot.lane.b32.xlu0 %v1423, 126
      %v1480 = vpop.permute.xlu0 %1479
      %1481 = vrot.lane.b32.xlu0 %v1424, 126
      %v1482 = vpop.permute.xlu0 %1481
      %v1483 = vsel %vm492, %v1480, %v1482
      %v1484 = vsel %vm492, %v1482, %v1480
      %v1485 = vsel %vm504, %v1483, 0.0
      %v1486 = vsel %vm505, %v1484, 0.0
      %v1487 = vmul.f32 %v641, %v1485
      %v1488 = vmul.f32 %v641, %v1486
      %v1489 = vadd.f32 %v1477, %v1487
      %v1490 = vadd.f32 %v1478, %v1488
      %1491 = vrot.lane.b32.xlu0 %v1423, 125
      %v1492 = vpop.permute.xlu0 %1491
      %1493 = vrot.lane.b32.xlu0 %v1424, 125
      %v1494 = vpop.permute.xlu0 %1493
      %v1495 = vsel %vm519, %v1492, %v1494
      %v1496 = vsel %vm519, %v1494, %v1492
      %v1497 = vsel %vm531, %v1495, 0.0
      %v1498 = vsel %vm532, %v1496, 0.0
      %v1499 = vmul.f32 %v656, %v1497
      %v1500 = vmul.f32 %v656, %v1498
      %v1501 = vadd.f32 %v1489, %v1499
      %v1502 = vadd.f32 %v1490, %v1500
      %1503 = vrot.lane.b32.xlu0 %v1329, 16
      %v1504 = vpop.permute.xlu0 %1503
      %1505 = vrot.lane.b32.xlu0 %v1330, 16
      %v1506 = vpop.permute.xlu0 %1505
      %v1507 = vsel %vm665, %v1504, %v1506
      %v1508 = vsel %vm665, %v1506, %v1504
      %v1509 = vsel %vm677, %v1508, 0.0
      %v1510 = vsel %vm678, %v1507, 0.0
      %1511 = vrot.lane.b32.xlu0 %v1509, 3
      %v1512 = vpop.permute.xlu0 %1511
      %1513 = vrot.lane.b32.xlu0 %v1510, 3
      %v1514 = vpop.permute.xlu0 %1513
      %v1515 = vsel %vm364, %v1512, %v1514
      %v1516 = vsel %vm364, %v1514, %v1512
      %v1517 = vsel %vm376, %v1516, 0.0
      %v1518 = vsel %vm377, %v1515, 0.0
      %v1519 = vmul.f32 %v691, %v1517
      %v1520 = vmul.f32 %v691, %v1518
      %v1521 = vadd.f32 %v1501, %v1519
      %v1522 = vadd.f32 %v1502, %v1520
      %1523 = vrot.lane.b32.xlu0 %v1509, 2
      %v1524 = vpop.permute.xlu0 %1523
      %1525 = vrot.lane.b32.xlu0 %v1510, 2
      %v1526 = vpop.permute.xlu0 %1525
      %v1527 = vsel %vm391, %v1524, %v1526
      %v1528 = vsel %vm391, %v1526, %v1524
      %v1529 = vsel %vm403, %v1528, 0.0
      %v1530 = vsel %vm404, %v1527, 0.0
      %v1531 = vmul.f32 %v706, %v1529
      %v1532 = vmul.f32 %v706, %v1530
      %v1533 = vadd.f32 %v1521, %v1531
      %v1534 = vadd.f32 %v1522, %v1532
      %1535 = vrot.lane.b32.xlu0 %v1509, 1
      %v1536 = vpop.permute.xlu0 %1535
      %1537 = vrot.lane.b32.xlu0 %v1510, 1
      %v1538 = vpop.permute.xlu0 %1537
      %v1539 = vsel %vm418, %v1536, %v1538
      %v1540 = vsel %vm418, %v1538, %v1536
      %v1541 = vsel %vm430, %v1540, 0.0
      %v1542 = vsel %vm431, %v1539, 0.0
      %v1543 = vmul.f32 %v721, %v1541
      %v1544 = vmul.f32 %v721, %v1542
      %v1545 = vadd.f32 %v1533, %v1543
      %v1546 = vadd.f32 %v1534, %v1544
      %v1547 = vsel %vm450, %v1509, 0.0
      %v1548 = vsel %vm451, %v1510, 0.0
      %v1549 = vmul.f32 %v730, %v1547
      %v1550 = vmul.f32 %v730, %v1548
      %v1551 = vadd.f32 %v1545, %v1549
      %v1552 = vadd.f32 %v1546, %v1550
      %1553 = vrot.lane.b32.xlu0 %v1509, 127
      %v1554 = vpop.permute.xlu0 %1553
      %1555 = vrot.lane.b32.xlu0 %v1510, 127
      %v1556 = vpop.permute.xlu0 %1555
      %v1557 = vsel %vm465, %v1554, %v1556
      %v1558 = vsel %vm465, %v1556, %v1554
      %v1559 = vsel %vm477, %v1557, 0.0
      %v1560 = vsel %vm478, %v1558, 0.0
      %v1561 = vmul.f32 %v745, %v1559
      %v1562 = vmul.f32 %v745, %v1560
      %v1563 = vadd.f32 %v1551, %v1561
      %v1564 = vadd.f32 %v1552, %v1562
      %1565 = vrot.lane.b32.xlu0 %v1509, 126
      %v1566 = vpop.permute.xlu0 %1565
      %1567 = vrot.lane.b32.xlu0 %v1510, 126
      %v1568 = vpop.permute.xlu0 %1567
      %v1569 = vsel %vm492, %v1566, %v1568
      %v1570 = vsel %vm492, %v1568, %v1566
      %v1571 = vsel %vm504, %v1569, 0.0
      %v1572 = vsel %vm505, %v1570, 0.0
      %v1573 = vmul.f32 %v760, %v1571
      %v1574 = vmul.f32 %v760, %v1572
      %v1575 = vadd.f32 %v1563, %v1573
      %v1576 = vadd.f32 %v1564, %v1574
      %1577 = vrot.lane.b32.xlu0 %v1509, 125
      %v1578 = vpop.permute.xlu0 %1577
      %1579 = vrot.lane.b32.xlu0 %v1510, 125
      %v1580 = vpop.permute.xlu0 %1579
      %v1581 = vsel %vm519, %v1578, %v1580
      %v1582 = vsel %vm519, %v1580, %v1578
      %v1583 = vsel %vm531, %v1581, 0.0
      %v1584 = vsel %vm532, %v1582, 0.0
      %v1585 = vmul.f32 %v775, %v1583
      %v1586 = vmul.f32 %v775, %v1584
      %v1587 = vadd.f32 %v1575, %v1585
      %v1588 = vadd.f32 %v1576, %v1586
      %v1589 = vsel %vm789, %v1329, 0.0
      %v1590 = vsel %vm790, %v1330, 0.0
      %1591 = vrot.lane.b32.xlu0 %v1589, 3
      %v1592 = vpop.permute.xlu0 %1591
      %1593 = vrot.lane.b32.xlu0 %v1590, 3
      %v1594 = vpop.permute.xlu0 %1593
      %v1595 = vsel %vm364, %v1592, %v1594
      %v1596 = vsel %vm364, %v1594, %v1592
      %v1597 = vsel %vm376, %v1596, 0.0
      %v1598 = vsel %vm377, %v1595, 0.0
      %v1599 = vmul.f32 %v803, %v1597
      %v1600 = vmul.f32 %v803, %v1598
      %v1601 = vadd.f32 %v1587, %v1599
      %v1602 = vadd.f32 %v1588, %v1600
      %1603 = vrot.lane.b32.xlu0 %v1589, 2
      %v1604 = vpop.permute.xlu0 %1603
      %1605 = vrot.lane.b32.xlu0 %v1590, 2
      %v1606 = vpop.permute.xlu0 %1605
      %v1607 = vsel %vm391, %v1604, %v1606
      %v1608 = vsel %vm391, %v1606, %v1604
      %v1609 = vsel %vm403, %v1608, 0.0
      %v1610 = vsel %vm404, %v1607, 0.0
      %v1611 = vmul.f32 %v818, %v1609
      %v1612 = vmul.f32 %v818, %v1610
      %v1613 = vadd.f32 %v1601, %v1611
      %v1614 = vadd.f32 %v1602, %v1612
      %1615 = vrot.lane.b32.xlu0 %v1589, 1
      %v1616 = vpop.permute.xlu0 %1615
      %1617 = vrot.lane.b32.xlu0 %v1590, 1
      %v1618 = vpop.permute.xlu0 %1617
      %v1619 = vsel %vm418, %v1616, %v1618
      %v1620 = vsel %vm418, %v1618, %v1616
      %v1621 = vsel %vm430, %v1620, 0.0
      %v1622 = vsel %vm431, %v1619, 0.0
      %v1623 = vmul.f32 %v833, %v1621
      %v1624 = vmul.f32 %v833, %v1622
      %v1625 = vadd.f32 %v1613, %v1623
      %v1626 = vadd.f32 %v1614, %v1624
      %v1627 = vsel %vm450, %v1589, 0.0
      %v1628 = vsel %vm451, %v1590, 0.0
      %v1629 = vmul.f32 %v842, %v1627
      %v1630 = vmul.f32 %v842, %v1628
      %v1631 = vadd.f32 %v1625, %v1629
      %v1632 = vadd.f32 %v1626, %v1630
      %1633 = vrot.lane.b32.xlu0 %v1589, 127
      %v1634 = vpop.permute.xlu0 %1633
      %1635 = vrot.lane.b32.xlu0 %v1590, 127
      %v1636 = vpop.permute.xlu0 %1635
      %v1637 = vsel %vm465, %v1634, %v1636
      %v1638 = vsel %vm465, %v1636, %v1634
      %v1639 = vsel %vm477, %v1637, 0.0
      %v1640 = vsel %vm478, %v1638, 0.0
      %v1641 = vmul.f32 %v857, %v1639
      %v1642 = vmul.f32 %v857, %v1640
      %v1643 = vadd.f32 %v1631, %v1641
      %v1644 = vadd.f32 %v1632, %v1642
      %1645 = vrot.lane.b32.xlu0 %v1589, 126
      %v1646 = vpop.permute.xlu0 %1645
      %1647 = vrot.lane.b32.xlu0 %v1590, 126
      %v1648 = vpop.permute.xlu0 %1647
      %v1649 = vsel %vm492, %v1646, %v1648
      %v1650 = vsel %vm492, %v1648, %v1646
      %v1651 = vsel %vm504, %v1649, 0.0
      %v1652 = vsel %vm505, %v1650, 0.0
      %v1653 = vmul.f32 %v872, %v1651
      %v1654 = vmul.f32 %v872, %v1652
      %v1655 = vadd.f32 %v1643, %v1653
      %v1656 = vadd.f32 %v1644, %v1654
      %1657 = vrot.lane.b32.xlu0 %v1589, 125
      %v1658 = vpop.permute.xlu0 %1657
      %1659 = vrot.lane.b32.xlu0 %v1590, 125
      %v1660 = vpop.permute.xlu0 %1659
      %v1661 = vsel %vm519, %v1658, %v1660
      %v1662 = vsel %vm519, %v1660, %v1658
      %v1663 = vsel %vm531, %v1661, 0.0
      %v1664 = vsel %vm532, %v1662, 0.0
      %v1665 = vmul.f32 %v887, %v1663
      %v1666 = vmul.f32 %v887, %v1664
      %v1667 = vadd.f32 %v1655, %v1665
      %v1668 = vadd.f32 %v1656, %v1666
      %1669 = vrot.lane.b32.xlu0 %v1329, 112
      %v1670 = vpop.permute.xlu0 %1669
      %1671 = vrot.lane.b32.xlu0 %v1330, 112
      %v1672 = vpop.permute.xlu0 %1671
      %v1673 = vsel %vm896, %v1670, %v1672
      %v1674 = vsel %vm896, %v1672, %v1670
      %v1675 = vsel %vm908, %v1673, 0.0
      %v1676 = vsel %vm909, %v1674, 0.0
      %1677 = vrot.lane.b32.xlu0 %v1675, 3
      %v1678 = vpop.permute.xlu0 %1677
      %1679 = vrot.lane.b32.xlu0 %v1676, 3
      %v1680 = vpop.permute.xlu0 %1679
      %v1681 = vsel %vm364, %v1678, %v1680
      %v1682 = vsel %vm364, %v1680, %v1678
      %v1683 = vsel %vm376, %v1682, 0.0
      %v1684 = vsel %vm377, %v1681, 0.0
      %v1685 = vmul.f32 %v922, %v1683
      %v1686 = vmul.f32 %v922, %v1684
      %v1687 = vadd.f32 %v1667, %v1685
      %v1688 = vadd.f32 %v1668, %v1686
      %1689 = vrot.lane.b32.xlu0 %v1675, 2
      %v1690 = vpop.permute.xlu0 %1689
      %1691 = vrot.lane.b32.xlu0 %v1676, 2
      %v1692 = vpop.permute.xlu0 %1691
      %v1693 = vsel %vm391, %v1690, %v1692
      %v1694 = vsel %vm391, %v1692, %v1690
      %v1695 = vsel %vm403, %v1694, 0.0
      %v1696 = vsel %vm404, %v1693, 0.0
      %v1697 = vmul.f32 %v937, %v1695
      %v1698 = vmul.f32 %v937, %v1696
      %v1699 = vadd.f32 %v1687, %v1697
      %v1700 = vadd.f32 %v1688, %v1698
      %1701 = vrot.lane.b32.xlu0 %v1675, 1
      %v1702 = vpop.permute.xlu0 %1701
      %1703 = vrot.lane.b32.xlu0 %v1676, 1
      %v1704 = vpop.permute.xlu0 %1703
      %v1705 = vsel %vm418, %v1702, %v1704
      %v1706 = vsel %vm418, %v1704, %v1702
      %v1707 = vsel %vm430, %v1706, 0.0
      %v1708 = vsel %vm431, %v1705, 0.0
      %v1709 = vmul.f32 %v952, %v1707
      %v1710 = vmul.f32 %v952, %v1708
      %v1711 = vadd.f32 %v1699, %v1709
      %v1712 = vadd.f32 %v1700, %v1710
      %v1713 = vsel %vm450, %v1675, 0.0
      %v1714 = vsel %vm451, %v1676, 0.0
      %v1715 = vmul.f32 %v961, %v1713
      %v1716 = vmul.f32 %v961, %v1714
      %v1717 = vadd.f32 %v1711, %v1715
      %v1718 = vadd.f32 %v1712, %v1716
      %1719 = vrot.lane.b32.xlu0 %v1675, 127
      %v1720 = vpop.permute.xlu0 %1719
      %1721 = vrot.lane.b32.xlu0 %v1676, 127
      %v1722 = vpop.permute.xlu0 %1721
      %v1723 = vsel %vm465, %v1720, %v1722
      %v1724 = vsel %vm465, %v1722, %v1720
      %v1725 = vsel %vm477, %v1723, 0.0
      %v1726 = vsel %vm478, %v1724, 0.0
      %v1727 = vmul.f32 %v976, %v1725
      %v1728 = vmul.f32 %v976, %v1726
      %v1729 = vadd.f32 %v1717, %v1727
      %v1730 = vadd.f32 %v1718, %v1728
      %1731 = vrot.lane.b32.xlu0 %v1675, 126
      %v1732 = vpop.permute.xlu0 %1731
      %1733 = vrot.lane.b32.xlu0 %v1676, 126
      %v1734 = vpop.permute.xlu0 %1733
      %v1735 = vsel %vm492, %v1732, %v1734
      %v1736 = vsel %vm492, %v1734, %v1732
      %v1737 = vsel %vm504, %v1735, 0.0
      %v1738 = vsel %vm505, %v1736, 0.0
      %v1739 = vmul.f32 %v991, %v1737
      %v1740 = vmul.f32 %v991, %v1738
      %v1741 = vadd.f32 %v1729, %v1739
      %v1742 = vadd.f32 %v1730, %v1740
      %1743 = vrot.lane.b32.xlu0 %v1675, 125
      %v1744 = vpop.permute.xlu0 %1743
      %1745 = vrot.lane.b32.xlu0 %v1676, 125
      %v1746 = vpop.permute.xlu0 %1745
      %v1747 = vsel %vm519, %v1744, %v1746
      %v1748 = vsel %vm519, %v1746, %v1744
      %v1749 = vsel %vm531, %v1747, 0.0
      %v1750 = vsel %vm532, %v1748, 0.0
      %v1751 = vmul.f32 %v1006, %v1749
      %v1752 = vmul.f32 %v1006, %v1750
      %v1753 = vadd.f32 %v1741, %v1751
      %v1754 = vadd.f32 %v1742, %v1752
      %1755 = vrot.lane.b32.xlu0 %v1329, 96
      %v1756 = vpop.permute.xlu0 %1755
      %1757 = vrot.lane.b32.xlu0 %v1330, 96
      %v1758 = vpop.permute.xlu0 %1757
      %v1759 = vsel %vm1015, %v1756, %v1758
      %v1760 = vsel %vm1015, %v1758, %v1756
      %v1761 = vsel %vm1027, %v1759, 0.0
      %v1762 = vsel %vm1028, %v1760, 0.0
      %1763 = vrot.lane.b32.xlu0 %v1761, 3
      %v1764 = vpop.permute.xlu0 %1763
      %1765 = vrot.lane.b32.xlu0 %v1762, 3
      %v1766 = vpop.permute.xlu0 %1765
      %v1767 = vsel %vm364, %v1764, %v1766
      %v1768 = vsel %vm364, %v1766, %v1764
      %v1769 = vsel %vm376, %v1768, 0.0
      %v1770 = vsel %vm377, %v1767, 0.0
      %v1771 = vmul.f32 %v1041, %v1769
      %v1772 = vmul.f32 %v1041, %v1770
      %v1773 = vadd.f32 %v1753, %v1771
      %v1774 = vadd.f32 %v1754, %v1772
      %1775 = vrot.lane.b32.xlu0 %v1761, 2
      %v1776 = vpop.permute.xlu0 %1775
      %1777 = vrot.lane.b32.xlu0 %v1762, 2
      %v1778 = vpop.permute.xlu0 %1777
      %v1779 = vsel %vm391, %v1776, %v1778
      %v1780 = vsel %vm391, %v1778, %v1776
      %v1781 = vsel %vm403, %v1780, 0.0
      %v1782 = vsel %vm404, %v1779, 0.0
      %v1783 = vmul.f32 %v1056, %v1781
      %v1784 = vmul.f32 %v1056, %v1782
      %v1785 = vadd.f32 %v1773, %v1783
      %v1786 = vadd.f32 %v1774, %v1784
      %1787 = vrot.lane.b32.xlu0 %v1761, 1
      %v1788 = vpop.permute.xlu0 %1787
      %1789 = vrot.lane.b32.xlu0 %v1762, 1
      %v1790 = vpop.permute.xlu0 %1789
      %v1791 = vsel %vm418, %v1788, %v1790
      %v1792 = vsel %vm418, %v1790, %v1788
      %v1793 = vsel %vm430, %v1792, 0.0
      %v1794 = vsel %vm431, %v1791, 0.0
      %v1795 = vmul.f32 %v1071, %v1793
      %v1796 = vmul.f32 %v1071, %v1794
      %v1797 = vadd.f32 %v1785, %v1795
      %v1798 = vadd.f32 %v1786, %v1796
      %v1799 = vsel %vm450, %v1761, 0.0
      %v1800 = vsel %vm451, %v1762, 0.0
      %v1801 = vmul.f32 %v1080, %v1799
      %v1802 = vmul.f32 %v1080, %v1800
      %v1803 = vadd.f32 %v1797, %v1801
      %v1804 = vadd.f32 %v1798, %v1802
      %1805 = vrot.lane.b32.xlu0 %v1761, 127
      %v1806 = vpop.permute.xlu0 %1805
      %1807 = vrot.lane.b32.xlu0 %v1762, 127
      %v1808 = vpop.permute.xlu0 %1807
      %v1809 = vsel %vm465, %v1806, %v1808
      %v1810 = vsel %vm465, %v1808, %v1806
      %v1811 = vsel %vm477, %v1809, 0.0
      %v1812 = vsel %vm478, %v1810, 0.0
      %v1813 = vmul.f32 %v1095, %v1811
      %v1814 = vmul.f32 %v1095, %v1812
      %v1815 = vadd.f32 %v1803, %v1813
      %v1816 = vadd.f32 %v1804, %v1814
      %1817 = vrot.lane.b32.xlu0 %v1761, 126
      %v1818 = vpop.permute.xlu0 %1817
      %1819 = vrot.lane.b32.xlu0 %v1762, 126
      %v1820 = vpop.permute.xlu0 %1819
      %v1821 = vsel %vm492, %v1818, %v1820
      %v1822 = vsel %vm492, %v1820, %v1818
      %v1823 = vsel %vm504, %v1821, 0.0
      %v1824 = vsel %vm505, %v1822, 0.0
      %v1825 = vmul.f32 %v1110, %v1823
      %v1826 = vmul.f32 %v1110, %v1824
      %v1827 = vadd.f32 %v1815, %v1825
      %v1828 = vadd.f32 %v1816, %v1826
      %1829 = vrot.lane.b32.xlu0 %v1761, 125
      %v1830 = vpop.permute.xlu0 %1829
      %1831 = vrot.lane.b32.xlu0 %v1762, 125
      %v1832 = vpop.permute.xlu0 %1831
      %v1833 = vsel %vm519, %v1830, %v1832
      %v1834 = vsel %vm519, %v1832, %v1830
      %v1835 = vsel %vm531, %v1833, 0.0
      %v1836 = vsel %vm532, %v1834, 0.0
      %v1837 = vmul.f32 %v1125, %v1835
      %v1838 = vmul.f32 %v1125, %v1836
      %v1839 = vadd.f32 %v1827, %v1837
      %v1840 = vadd.f32 %v1828, %v1838
      %1841 = vrot.lane.b32.xlu0 %v1329, 80
      %v1842 = vpop.permute.xlu0 %1841
      %1843 = vrot.lane.b32.xlu0 %v1330, 80
      %v1844 = vpop.permute.xlu0 %1843
      %v1845 = vsel %vm1134, %v1842, %v1844
      %v1846 = vsel %vm1134, %v1844, %v1842
      %v1847 = vsel %vm1146, %v1845, 0.0
      %v1848 = vsel %vm1147, %v1846, 0.0
      %1849 = vrot.lane.b32.xlu0 %v1847, 3
      %v1850 = vpop.permute.xlu0 %1849
      %1851 = vrot.lane.b32.xlu0 %v1848, 3
      %v1852 = vpop.permute.xlu0 %1851
      %v1853 = vsel %vm364, %v1850, %v1852
      %v1854 = vsel %vm364, %v1852, %v1850
      %v1855 = vsel %vm376, %v1854, 0.0
      %v1856 = vsel %vm377, %v1853, 0.0
      %v1857 = vmul.f32 %v1160, %v1855
      %v1858 = vmul.f32 %v1160, %v1856
      %v1859 = vadd.f32 %v1839, %v1857
      %v1860 = vadd.f32 %v1840, %v1858
      %1861 = vrot.lane.b32.xlu0 %v1847, 2
      %v1862 = vpop.permute.xlu0 %1861
      %1863 = vrot.lane.b32.xlu0 %v1848, 2
      %v1864 = vpop.permute.xlu0 %1863
      %v1865 = vsel %vm391, %v1862, %v1864
      %v1866 = vsel %vm391, %v1864, %v1862
      %v1867 = vsel %vm403, %v1866, 0.0
      %v1868 = vsel %vm404, %v1865, 0.0
      %v1869 = vmul.f32 %v1175, %v1867
      %v1870 = vmul.f32 %v1175, %v1868
      %v1871 = vadd.f32 %v1859, %v1869
      %v1872 = vadd.f32 %v1860, %v1870
      %1873 = vrot.lane.b32.xlu0 %v1847, 1
      %v1874 = vpop.permute.xlu0 %1873
      %1875 = vrot.lane.b32.xlu0 %v1848, 1
      %v1876 = vpop.permute.xlu0 %1875
      %v1877 = vsel %vm418, %v1874, %v1876
      %v1878 = vsel %vm418, %v1876, %v1874
      %v1879 = vsel %vm430, %v1878, 0.0
      %v1880 = vsel %vm431, %v1877, 0.0
      %v1881 = vmul.f32 %v1190, %v1879
      %v1882 = vmul.f32 %v1190, %v1880
      %v1883 = vadd.f32 %v1871, %v1881
      %v1884 = vadd.f32 %v1872, %v1882
      %v1885 = vsel %vm450, %v1847, 0.0
      %v1886 = vsel %vm451, %v1848, 0.0
      %v1887 = vmul.f32 %v1199, %v1885
      %v1888 = vmul.f32 %v1199, %v1886
      %v1889 = vadd.f32 %v1883, %v1887
      %v1890 = vadd.f32 %v1884, %v1888
      %1891 = vrot.lane.b32.xlu0 %v1847, 127
      %v1892 = vpop.permute.xlu0 %1891
      %1893 = vrot.lane.b32.xlu0 %v1848, 127
      %v1894 = vpop.permute.xlu0 %1893
      %v1895 = vsel %vm465, %v1892, %v1894
      %v1896 = vsel %vm465, %v1894, %v1892
      %v1897 = vsel %vm477, %v1895, 0.0
      %v1898 = vsel %vm478, %v1896, 0.0
      %v1899 = vmul.f32 %v1214, %v1897
      %v1900 = vmul.f32 %v1214, %v1898
      %v1901 = vadd.f32 %v1889, %v1899
      %v1902 = vadd.f32 %v1890, %v1900
      %1903 = vrot.lane.b32.xlu0 %v1847, 126
      %v1904 = vpop.permute.xlu0 %1903
      %1905 = vrot.lane.b32.xlu0 %v1848, 126
      %v1906 = vpop.permute.xlu0 %1905
      %v1907 = vsel %vm492, %v1904, %v1906
      %v1908 = vsel %vm492, %v1906, %v1904
      %v1909 = vsel %vm504, %v1907, 0.0
      %v1910 = vsel %vm505, %v1908, 0.0
      %v1911 = vmul.f32 %v1229, %v1909
      %v1912 = vmul.f32 %v1229, %v1910
      %v1913 = vadd.f32 %v1901, %v1911
      %v1914 = vadd.f32 %v1902, %v1912
      %1915 = vrot.lane.b32.xlu0 %v1847, 125
      %v1916 = vpop.permute.xlu0 %1915
      %1917 = vrot.lane.b32.xlu0 %v1848, 125
      %v1918 = vpop.permute.xlu0 %1917
      %v1919 = vsel %vm519, %v1916, %v1918
      %v1920 = vsel %vm519, %v1918, %v1916
      %v1921 = vsel %vm531, %v1919, 0.0
      %v1922 = vsel %vm532, %v1920, 0.0
      %v1923 = vmul.f32 %v1244, %v1921
      %v1924 = vmul.f32 %v1244, %v1922
      %v1925 = vadd.f32 %v1913, %v1923
      %v1926 = vadd.f32 %v1914, %v1924
      %v1927 = vsel %vm1249, %v1925, 0.0
      %v1928 = vrot.slane %v1927, 4
      %v1929 = vadd.f32 %v1927, %v1928
      %v1930 = vrot.slane %v1929, 2
      %v1931 = vadd.f32 %v1929, %v1930
      %v1932 = vrot.slane %v1931, 1
      %v1933 = vadd.f32 %v1931, %v1932
      %v1934 = vsel %vm1249, %v1926, 0.0
      %v1935 = vrot.slane %v1934, 4
      %v1936 = vadd.f32 %v1934, %v1935
      %v1937 = vrot.slane %v1936, 2
      %v1938 = vadd.f32 %v1936, %v1937
      %v1939 = vrot.slane %v1938, 1
      %v1940 = vadd.f32 %v1938, %v1939
      %v1941 = vxor.u32 %v1933, 2147483648
      %v1942 = vxor.u32 %v1940, 2147483648
      %v1943 = vmul.f32 %v1941, 1.442695
      %v1944 = vpow.pop %v1943
      %v1945 = vmul.f32 %v1942, 1.442695
      %v1946 = vpow.pop %v1945
      %v1947 = vadd.f32 %v1944, 1.0
      %v1948 = vadd.f32 %v1946, 1.0
      %v1949 = vrcp.pop %v1947
      %v1950 = vmul.f32 1.0, %v1949
      %v1951 = vrcp.pop %v1948
      %v1952 = vmul.f32 1.0, %v1951
      %v1955 = vcombine.low %v1950, %v1952
      %v1957 = vunpack.c.l.s4 1966171168
      %v1958 = vunpack.c.0.s8 %v1957
      %v1959 = vlaneseq
      %v1960 = vshrl.u32 %v1959, 7
      %v1961 = vsub.s32 %v1958, %v1960
      %v1962 = vrot.slane %v1955, %v1961
      %v1964 = vunpack.c.l.s4 1966171168
      %v1965 = vunpack.c.0.s8 %v1964
      %v1966 = vlaneseq
      %v1967 = vshrl.u32 %v1966, 7
      %v1968 = vsub.s32 %v1965, %v1967
      %v1969 = vrot.slane %v1962, %v1968
      %s1971 = scalar_lea.vmem [#allocation11], 2
      %1972 = vst.msk [vmem:[%s1971] sm:$0x3] %vm1297, %v1969
    $region25: #{tpu_custom_call.1} parent=1 // pred_fallthru
      _
    // Predicated region
    $region26: #{tpu_custom_call.1} parent=1 // pred_check
      _
    $region27: #{tpu_custom_call.1} parent=1 // pred_check_branch
      %1974 = sbr.rel (0) target = $region29
    $region28: #{tpu_custom_call.1} parent=1 // pred_region
      %s1976 = ssub.s32 64, 64
      %1977 = vsyncadd [#allocation8], %s1976
      %s1978 = sshll.u32 [#allocation11], 4
      %s1979 = int_to_ptr.vmem [resolvable:$true] %s1978
      %1984 = dma.vmem_to_hbm [thread:$0]  %s1979, 64, %s3, [#allocation8], 32, 32, 2
    $region29: #{tpu_custom_call.1} parent=1 // pred_fallthru
      _
    // Predicated region
    $region30: #{tpu_custom_call.1} parent=1 // pred_check
      _
    $region31: #{tpu_custom_call.1} parent=1 // pred_check_branch
      %1986 = sbr.rel (0) target = $region33
    $region32: #{tpu_custom_call.1} parent=1 // pred_region
      %1987 = dma.done [#allocation8], 64
    $region33: #{tpu_custom_call.1} parent=1 // pred_fallthru
      _
    %1988 = vsyncpa [#allocation7], 1
    %1989 = vsyncpa [#allocation10], 1
    %1990 = vsyncpa [#allocation8], 1

</llo_original>
